<compile_context>
chip_gen: v7x
topology: tpu7x:2x2x1
jax: 0.10.0
libtpu: 0.0.40
codegen_flags: <defaults>
</compile_context>

<pallas_src>
import functools

import jax
import jax.numpy as jnp
from jax import lax
from jax.experimental import pallas as pl
from jax.experimental.pallas import tpu as pltpu


# DensityNet(hidden_unit=[16, 8]) channel sizes: 1 -> 16 -> 8 -> 1
C1, C2 = 16, 8
LANES = 128          # pixels per lane row (vreg lane width)
SUB = 16             # pixel rows per inner-loop step (= two f32 vregs of pixels)
UNROLL = 2           # fori_loop unroll factor
ROW_ALIGN = SUB * UNROLL   # 32: tm is a multiple of this, so n_sub is even
MIN_STEPS = 4        # keep >= 2 steps per TensorCore on v7x when rows allow
BN_EPS = 1e-5

# Packed-parameter layout (flat f32 vector resident in SMEM).
W1_OFF = 0
B1_OFF = W1_OFF + C1            # 16
W2_OFF = B1_OFF + C1            # 32    w2[j*C2 + k] : in-channel j -> out-channel k
B2_OFF = W2_OFF + C1 * C2       # 160
W3_OFF = B2_OFF + C2            # 168
B3_OFF = W3_OFF + C2            # 176
N_PARAMS = B3_OFF + 1           # 177
PARAMS_PAD = 256


def densitynet_kernel(p_ref, x_ref, o_ref):
    # p_ref: (PARAMS_PAD,) f32 in SMEM -- folded conv+BN weights/biases.
    # x_ref / o_ref: (tm, 128) f32 VMEM tiles; every element is an independent pixel.
    tm = x_ref.shape[0]
    n_sub = tm // SUB

    # Hoist all scalar parameter reads out of the pixel loop (once per tile).
    # These stay scalar operands of the VPU MACs (no per-iteration vbcst).
    w1 = [p_ref[W1_OFF + j] for j in range(C1)]
    b1 = [p_ref[B1_OFF + j] for j in range(C1)]
    w2 = [[p_ref[W2_OFF + j * C2 + k] for k in range(C2)] for j in range(C1)]
    b2 = [p_ref[B2_OFF + k] for k in range(C2)]
    w3 = [p_ref[W3_OFF + k] for k in range(C2)]
    b3 = p_ref[B3_OFF]

    def body(i, carry):
        r = pl.multiple_of(i * SUB, SUB)
        x = x_ref[pl.ds(r, SUB), :]                      # (SUB, 128) pixels

        # Fused layer 1 + layer 2: produce one h1_j at a time and immediately
        # accumulate it into the 8 layer-2 accumulators -> ~11 live vregs per
        # SUB block instead of ~27.
        h1 = jnp.maximum(x * w1[0] + b1[0], 0.0)
        h2 = [h1 * w2[0][k] + b2[k] for k in range(C2)]
        for j in range(1, C1):
            h1 = jnp.maximum(x * w1[j] + b1[j], 0.0)
            for k in range(C2):
                h2[k] = h2[k] + h1 * w2[j][k]

        # layer 2 ReLU fused into layer 3 (8 -> 1); final ReLU applied (the
        # sigmoid branch in the PyTorch forward is unreachable).
        acc = jnp.maximum(h2[0], 0.0) * w3[0] + b3
        for k in range(1, C2):
            acc = acc + jnp.maximum(h2[k], 0.0) * w3[k]
        o_ref[pl.ds(r, SUB), :] = jnp.maximum(acc, 0.0).astype(o_ref.dtype)
        return carry

    # tm is a multiple of SUB*UNROLL, so the unrolled trip count is exact.
    lax.fori_loop(0, n_sub, body, 0, unroll=UNROLL)


def fold_bn(w, b_conv, gamma, beta, run_mean, run_var, eps=BN_EPS):
    """Fold eval-mode BatchNorm2d into the preceding 1x1 conv.

    w: (C_out, C_in), b_conv: (C_out,).
    Returns (w_t, b) with w_t: (C_in, C_out) ready for x @ w_t, b: (C_out,).
    """
    s = gamma / jnp.sqrt(run_var + eps)                  # (C_out,)
    w_folded = w * s[:, None]
    b_folded = (b_conv - run_mean) * s + beta
    return w_folded.T, b_folded


def pack_params(params):
    """Flatten the folded (w_t, b) pairs into one SMEM-resident f32 vector."""
    (w1t, b1), (w2t, b2), (w3t, b3) = params
    flat = jnp.concatenate([
        w1t.reshape(-1),     # (16,)  w1[j]     : input -> out-channel j
        b1.reshape(-1),      # (16,)
        w2t.reshape(-1),     # (128,) w2[j*8+k] : in-channel j -> out-channel k
        b2.reshape(-1),      # (8,)
        w3t.reshape(-1),     # (8,)   w3[k]     : in-channel k -> output
        b3.reshape(-1),      # (1,)
    ]).astype(jnp.float32)
    assert flat.shape[0] == N_PARAMS
    return jnp.pad(flat, (0, PARAMS_PAD - N_PARAMS))


def _cdiv(a, b):
    return -(-a // b)


def _round_up(a, b):
    return _cdiv(a, b) * b


@functools.partial(jax.jit, static_argnames=("tm_rows",))
def densitynet_forward(x_nchw, packed_params, *, tm_rows=2048):
    """x_nchw: (N, 1, H, W) float32 -> (N, 1, H, W) float32."""
    N, C, H, W = x_nchw.shape
    assert C == 1, "DensityNet input has a single channel"
    M = N * H * W

    # Adaptive tile size: steps first, then tm ~= rows/steps rounded to the
    # row-alignment.  This keeps padded rows to < ROW_ALIGN per step instead
    # of up to tm-SUB rows (the kernel is VALU-bound, so padded rows cost
    # full compute), while keeping >= MIN_STEPS grid steps for v7x megacore
    # whenever the input is big enough.
    rows = _cdiv(M, LANES)
    rows_aligned = _round_up(rows, ROW_ALIGN)
    steps_for_bw = _cdiv(rows_aligned, tm_rows)
    steps_for_cores = max(1, min(MIN_STEPS, rows_aligned // ROW_ALIGN))
    steps = max(steps_for_bw, steps_for_cores)
    tm = _round_up(_cdiv(rows_aligned, steps), ROW_ALIGN)
    rows_padded = _round_up(rows_aligned, tm)
    m_pad = rows_padded * LANES

    # C == 1, so NCHW flat order IS pixel order: a plain reshape, no transpose.
    x_flat = x_nchw.reshape(M).astype(jnp.float32)
    if m_pad == M:
        x_rows = x_flat.reshape(rows_padded, LANES)      # no pad copy
    else:
        x_rows = jnp.pad(x_flat, (0, m_pad - M)).reshape(rows_padded, LANES)

    grid = (rows_padded // tm,)

    out_rows = pl.pallas_call(
        densitynet_kernel,
        out_shape=jax.ShapeDtypeStruct((rows_padded, LANES), jnp.float32),
        grid_spec=pltpu.PrefetchScalarGridSpec(
            num_scalar_prefetch=0,
            grid=grid,
            in_specs=[
                # Folded weights/biases: one tiny table, whole thing in SMEM.
                pl.BlockSpec(memory_space=pltpu.MemorySpace.SMEM),
                # Lane-dense pixel slab: (tm, 128) f32 tiles.
                pl.BlockSpec((tm, LANES), lambda i: (i, 0)),
            ],
            out_specs=pl.BlockSpec((tm, LANES), lambda i: (i, 0)),
        ),
        compiler_params=pltpu.CompilerParams(
            dimension_semantics=("parallel",)),
    )(packed_params, x_rows)

    if m_pad == M:
        return out_rows.reshape(N, 1, H, W)              # no slice copy
    return out_rows.reshape(m_pad)[:M].reshape(N, 1, H, W)


def init_params(key):
    """Deterministic parameter init matching DensityNet([16, 8]) shapes."""
    dims = [1] + [C1, C2] + [1]  # [1, 16, 8, 1]
    params = []
    for li in range(len(dims) - 1):
        c_in, c_out = dims[li], dims[li + 1]
        key, kw, kb, kg, kbt = jax.random.split(key, 5)
        # Conv2d(c_in, c_out, 1): weight (c_out, c_in, 1, 1) -> (c_out, c_in)
        bound = 1.0 / (c_in ** 0.5)
        w = jax.random.uniform(kw, (c_out, c_in), jnp.float32, -bound, bound)
        b = jax.random.uniform(kb, (c_out,), jnp.float32, -bound, bound)
        # BatchNorm2d(c_out): affine params + running stats (eval-mode fold).
        gamma = 1.0 + 0.1 * jax.random.normal(kg, (c_out,), jnp.float32)
        beta = 0.1 * jax.random.normal(kbt, (c_out,), jnp.float32)
        run_mean = jnp.zeros((c_out,), jnp.float32)
        run_var = jnp.ones((c_out,), jnp.float32)
        params.append(fold_bn(w, b, gamma, beta, run_mean, run_var))
    return params


def reference_forward(x_nchw, params):
    """Plain-JAX reference of the same folded forward pass."""
    N, C, H, W = x_nchw.shape
    h = x_nchw.reshape(N * H * W, C)
    for w_t, b in params:
        h = jnp.maximum(
            jnp.dot(h, w_t, precision=lax.Precision.HIGHEST) + b, 0.0)
    return h.reshape(N, 1, H, W)


if __name__ == "__main__":
    key = jax.random.PRNGKey(0)
    k_params, k_x1, k_x2, k_x3 = jax.random.split(key, 4)

    params = init_params(k_params)
    packed = pack_params(params)

    # NCHW inputs with C_in = 1 (density_scale is a positive density-like input).
    test_cases = [
        ((2, 1, 16, 16), k_x1),    # M = 512    single small tile, ragged pad
        ((3, 1, 20, 28), k_x2),    # M = 1680   ragged tail -> wrapper padding
        ((4, 1, 64, 128), k_x3),   # M = 32768  aligned, 4-step grid (megacore)
    ]
    for shp, kx in test_cases:
        x = jax.random.uniform(kx, shp, jnp.float32, 0.0, 2.0)
        out = jax.block_until_ready(densitynet_forward(x, packed))
        ref = reference_forward(x, params)
        assert out.shape == shp
        assert jnp.allclose(out, ref, atol=1e-4, rtol=1e-4), float(
            jnp.max(jnp.abs(out - ref)))

    print("KERNEL_OK")
</pallas_src>

<mosaic_0001>
module attributes {stable_mosaic.version = 11 : i64} {
  func.func @densitynet_kernel(%arg0: i32, %arg1: memref<256xf32, #tpu.memory_space<smem>>, %arg2: memref<32x128xf32, #tpu.memory_space<vmem>>, %arg3: memref<32x128xf32, #tpu.memory_space<vmem>>) attributes {dimension_semantics = [#tpu.dimension_semantics<parallel>], iteration_bounds = array<i64: 1>, scalar_prefetch = 0 : i64, scratch_operands = 0 : i64, tpu.core_type = #tpu.core_type<tc>, window_params = [{transform_indices = @transform_0, window_bounds = array<i64: 256>}, {transform_indices = @transform_1, window_bounds = array<i64: 32, 128>}, {transform_indices = @transform_2, window_bounds = array<i64: 32, 128>}]} {
    %c0 = arith.constant 0 : index
    %0 = memref.load %arg1[%c0] : memref<256xf32, #tpu.memory_space<smem>>
    %c1 = arith.constant 1 : index
    %1 = memref.load %arg1[%c1] : memref<256xf32, #tpu.memory_space<smem>>
    %c2 = arith.constant 2 : index
    %2 = memref.load %arg1[%c2] : memref<256xf32, #tpu.memory_space<smem>>
    %c3 = arith.constant 3 : index
    %3 = memref.load %arg1[%c3] : memref<256xf32, #tpu.memory_space<smem>>
    %c4 = arith.constant 4 : index
    %4 = memref.load %arg1[%c4] : memref<256xf32, #tpu.memory_space<smem>>
    %c5 = arith.constant 5 : index
    %5 = memref.load %arg1[%c5] : memref<256xf32, #tpu.memory_space<smem>>
    %c6 = arith.constant 6 : index
    %6 = memref.load %arg1[%c6] : memref<256xf32, #tpu.memory_space<smem>>
    %c7 = arith.constant 7 : index
    %7 = memref.load %arg1[%c7] : memref<256xf32, #tpu.memory_space<smem>>
    %c8 = arith.constant 8 : index
    %8 = memref.load %arg1[%c8] : memref<256xf32, #tpu.memory_space<smem>>
    %c9 = arith.constant 9 : index
    %9 = memref.load %arg1[%c9] : memref<256xf32, #tpu.memory_space<smem>>
    %c10 = arith.constant 10 : index
    %10 = memref.load %arg1[%c10] : memref<256xf32, #tpu.memory_space<smem>>
    %c11 = arith.constant 11 : index
    %11 = memref.load %arg1[%c11] : memref<256xf32, #tpu.memory_space<smem>>
    %c12 = arith.constant 12 : index
    %12 = memref.load %arg1[%c12] : memref<256xf32, #tpu.memory_space<smem>>
    %c13 = arith.constant 13 : index
    %13 = memref.load %arg1[%c13] : memref<256xf32, #tpu.memory_space<smem>>
    %c14 = arith.constant 14 : index
    %14 = memref.load %arg1[%c14] : memref<256xf32, #tpu.memory_space<smem>>
    %c15 = arith.constant 15 : index
    %15 = memref.load %arg1[%c15] : memref<256xf32, #tpu.memory_space<smem>>
    %c16 = arith.constant 16 : index
    %16 = memref.load %arg1[%c16] : memref<256xf32, #tpu.memory_space<smem>>
    %c17 = arith.constant 17 : index
    %17 = memref.load %arg1[%c17] : memref<256xf32, #tpu.memory_space<smem>>
    %c18 = arith.constant 18 : index
    %18 = memref.load %arg1[%c18] : memref<256xf32, #tpu.memory_space<smem>>
    %c19 = arith.constant 19 : index
    %19 = memref.load %arg1[%c19] : memref<256xf32, #tpu.memory_space<smem>>
    %c20 = arith.constant 20 : index
    %20 = memref.load %arg1[%c20] : memref<256xf32, #tpu.memory_space<smem>>
    %c21 = arith.constant 21 : index
    %21 = memref.load %arg1[%c21] : memref<256xf32, #tpu.memory_space<smem>>
    %c22 = arith.constant 22 : index
    %22 = memref.load %arg1[%c22] : memref<256xf32, #tpu.memory_space<smem>>
    %c23 = arith.constant 23 : index
    %23 = memref.load %arg1[%c23] : memref<256xf32, #tpu.memory_space<smem>>
    %c24 = arith.constant 24 : index
    %24 = memref.load %arg1[%c24] : memref<256xf32, #tpu.memory_space<smem>>
    %c25 = arith.constant 25 : index
    %25 = memref.load %arg1[%c25] : memref<256xf32, #tpu.memory_space<smem>>
    %c26 = arith.constant 26 : index
    %26 = memref.load %arg1[%c26] : memref<256xf32, #tpu.memory_space<smem>>
    %c27 = arith.constant 27 : index
    %27 = memref.load %arg1[%c27] : memref<256xf32, #tpu.memory_space<smem>>
    %c28 = arith.constant 28 : index
    %28 = memref.load %arg1[%c28] : memref<256xf32, #tpu.memory_space<smem>>
    %c29 = arith.constant 29 : index
    %29 = memref.load %arg1[%c29] : memref<256xf32, #tpu.memory_space<smem>>
    %c30 = arith.constant 30 : index
    %30 = memref.load %arg1[%c30] : memref<256xf32, #tpu.memory_space<smem>>
    %c31 = arith.constant 31 : index
    %31 = memref.load %arg1[%c31] : memref<256xf32, #tpu.memory_space<smem>>
    %c32 = arith.constant 32 : index
    %32 = memref.load %arg1[%c32] : memref<256xf32, #tpu.memory_space<smem>>
    %c33 = arith.constant 33 : index
    %33 = memref.load %arg1[%c33] : memref<256xf32, #tpu.memory_space<smem>>
    %c34 = arith.constant 34 : index
    %34 = memref.load %arg1[%c34] : memref<256xf32, #tpu.memory_space<smem>>
    %c35 = arith.constant 35 : index
    %35 = memref.load %arg1[%c35] : memref<256xf32, #tpu.memory_space<smem>>
    %c36 = arith.constant 36 : index
    %36 = memref.load %arg1[%c36] : memref<256xf32, #tpu.memory_space<smem>>
    %c37 = arith.constant 37 : index
    %37 = memref.load %arg1[%c37] : memref<256xf32, #tpu.memory_space<smem>>
    %c38 = arith.constant 38 : index
    %38 = memref.load %arg1[%c38] : memref<256xf32, #tpu.memory_space<smem>>
    %c39 = arith.constant 39 : index
    %39 = memref.load %arg1[%c39] : memref<256xf32, #tpu.memory_space<smem>>
    %c40 = arith.constant 40 : index
    %40 = memref.load %arg1[%c40] : memref<256xf32, #tpu.memory_space<smem>>
    %c41 = arith.constant 41 : index
    %41 = memref.load %arg1[%c41] : memref<256xf32, #tpu.memory_space<smem>>
    %c42 = arith.constant 42 : index
    %42 = memref.load %arg1[%c42] : memref<256xf32, #tpu.memory_space<smem>>
    %c43 = arith.constant 43 : index
    %43 = memref.load %arg1[%c43] : memref<256xf32, #tpu.memory_space<smem>>
    %c44 = arith.constant 44 : index
    %44 = memref.load %arg1[%c44] : memref<256xf32, #tpu.memory_space<smem>>
    %c45 = arith.constant 45 : index
    %45 = memref.load %arg1[%c45] : memref<256xf32, #tpu.memory_space<smem>>
    %c46 = arith.constant 46 : index
    %46 = memref.load %arg1[%c46] : memref<256xf32, #tpu.memory_space<smem>>
    %c47 = arith.constant 47 : index
    %47 = memref.load %arg1[%c47] : memref<256xf32, #tpu.memory_space<smem>>
    %c48 = arith.constant 48 : index
    %48 = memref.load %arg1[%c48] : memref<256xf32, #tpu.memory_space<smem>>
    %c49 = arith.constant 49 : index
    %49 = memref.load %arg1[%c49] : memref<256xf32, #tpu.memory_space<smem>>
    %c50 = arith.constant 50 : index
    %50 = memref.load %arg1[%c50] : memref<256xf32, #tpu.memory_space<smem>>
    %c51 = arith.constant 51 : index
    %51 = memref.load %arg1[%c51] : memref<256xf32, #tpu.memory_space<smem>>
    %c52 = arith.constant 52 : index
    %52 = memref.load %arg1[%c52] : memref<256xf32, #tpu.memory_space<smem>>
    %c53 = arith.constant 53 : index
    %53 = memref.load %arg1[%c53] : memref<256xf32, #tpu.memory_space<smem>>
    %c54 = arith.constant 54 : index
    %54 = memref.load %arg1[%c54] : memref<256xf32, #tpu.memory_space<smem>>
    %c55 = arith.constant 55 : index
    %55 = memref.load %arg1[%c55] : memref<256xf32, #tpu.memory_space<smem>>
    %c56 = arith.constant 56 : index
    %56 = memref.load %arg1[%c56] : memref<256xf32, #tpu.memory_space<smem>>
    %c57 = arith.constant 57 : index
    %57 = memref.load %arg1[%c57] : memref<256xf32, #tpu.memory_space<smem>>
    %c58 = arith.constant 58 : index
    %58 = memref.load %arg1[%c58] : memref<256xf32, #tpu.memory_space<smem>>
    %c59 = arith.constant 59 : index
    %59 = memref.load %arg1[%c59] : memref<256xf32, #tpu.memory_space<smem>>
    %c60 = arith.constant 60 : index
    %60 = memref.load %arg1[%c60] : memref<256xf32, #tpu.memory_space<smem>>
    %c61 = arith.constant 61 : index
    %61 = memref.load %arg1[%c61] : memref<256xf32, #tpu.memory_space<smem>>
    %c62 = arith.constant 62 : index
    %62 = memref.load %arg1[%c62] : memref<256xf32, #tpu.memory_space<smem>>
    %c63 = arith.constant 63 : index
    %63 = memref.load %arg1[%c63] : memref<256xf32, #tpu.memory_space<smem>>
    %c64 = arith.constant 64 : index
    %64 = memref.load %arg1[%c64] : memref<256xf32, #tpu.memory_space<smem>>
    %c65 = arith.constant 65 : index
    %65 = memref.load %arg1[%c65] : memref<256xf32, #tpu.memory_space<smem>>
    %c66 = arith.constant 66 : index
    %66 = memref.load %arg1[%c66] : memref<256xf32, #tpu.memory_space<smem>>
    %c67 = arith.constant 67 : index
    %67 = memref.load %arg1[%c67] : memref<256xf32, #tpu.memory_space<smem>>
    %c68 = arith.constant 68 : index
    %68 = memref.load %arg1[%c68] : memref<256xf32, #tpu.memory_space<smem>>
    %c69 = arith.constant 69 : index
    %69 = memref.load %arg1[%c69] : memref<256xf32, #tpu.memory_space<smem>>
    %c70 = arith.constant 70 : index
    %70 = memref.load %arg1[%c70] : memref<256xf32, #tpu.memory_space<smem>>
    %c71 = arith.constant 71 : index
    %71 = memref.load %arg1[%c71] : memref<256xf32, #tpu.memory_space<smem>>
    %c72 = arith.constant 72 : index
    %72 = memref.load %arg1[%c72] : memref<256xf32, #tpu.memory_space<smem>>
    %c73 = arith.constant 73 : index
    %73 = memref.load %arg1[%c73] : memref<256xf32, #tpu.memory_space<smem>>
    %c74 = arith.constant 74 : index
    %74 = memref.load %arg1[%c74] : memref<256xf32, #tpu.memory_space<smem>>
    %c75 = arith.constant 75 : index
    %75 = memref.load %arg1[%c75] : memref<256xf32, #tpu.memory_space<smem>>
    %c76 = arith.constant 76 : index
    %76 = memref.load %arg1[%c76] : memref<256xf32, #tpu.memory_space<smem>>
    %c77 = arith.constant 77 : index
    %77 = memref.load %arg1[%c77] : memref<256xf32, #tpu.memory_space<smem>>
    %c78 = arith.constant 78 : index
    %78 = memref.load %arg1[%c78] : memref<256xf32, #tpu.memory_space<smem>>
    %c79 = arith.constant 79 : index
    %79 = memref.load %arg1[%c79] : memref<256xf32, #tpu.memory_space<smem>>
    %c80 = arith.constant 80 : index
    %80 = memref.load %arg1[%c80] : memref<256xf32, #tpu.memory_space<smem>>
    %c81 = arith.constant 81 : index
    %81 = memref.load %arg1[%c81] : memref<256xf32, #tpu.memory_space<smem>>
    %c82 = arith.constant 82 : index
    %82 = memref.load %arg1[%c82] : memref<256xf32, #tpu.memory_space<smem>>
    %c83 = arith.constant 83 : index
    %83 = memref.load %arg1[%c83] : memref<256xf32, #tpu.memory_space<smem>>
    %c84 = arith.constant 84 : index
    %84 = memref.load %arg1[%c84] : memref<256xf32, #tpu.memory_space<smem>>
    %c85 = arith.constant 85 : index
    %85 = memref.load %arg1[%c85] : memref<256xf32, #tpu.memory_space<smem>>
    %c86 = arith.constant 86 : index
    %86 = memref.load %arg1[%c86] : memref<256xf32, #tpu.memory_space<smem>>
    %c87 = arith.constant 87 : index
    %87 = memref.load %arg1[%c87] : memref<256xf32, #tpu.memory_space<smem>>
    %c88 = arith.constant 88 : index
    %88 = memref.load %arg1[%c88] : memref<256xf32, #tpu.memory_space<smem>>
    %c89 = arith.constant 89 : index
    %89 = memref.load %arg1[%c89] : memref<256xf32, #tpu.memory_space<smem>>
    %c90 = arith.constant 90 : index
    %90 = memref.load %arg1[%c90] : memref<256xf32, #tpu.memory_space<smem>>
    %c91 = arith.constant 91 : index
    %91 = memref.load %arg1[%c91] : memref<256xf32, #tpu.memory_space<smem>>
    %c92 = arith.constant 92 : index
    %92 = memref.load %arg1[%c92] : memref<256xf32, #tpu.memory_space<smem>>
    %c93 = arith.constant 93 : index
    %93 = memref.load %arg1[%c93] : memref<256xf32, #tpu.memory_space<smem>>
    %c94 = arith.constant 94 : index
    %94 = memref.load %arg1[%c94] : memref<256xf32, #tpu.memory_space<smem>>
    %c95 = arith.constant 95 : index
    %95 = memref.load %arg1[%c95] : memref<256xf32, #tpu.memory_space<smem>>
    %c96 = arith.constant 96 : index
    %96 = memref.load %arg1[%c96] : memref<256xf32, #tpu.memory_space<smem>>
    %c97 = arith.constant 97 : index
    %97 = memref.load %arg1[%c97] : memref<256xf32, #tpu.memory_space<smem>>
    %c98 = arith.constant 98 : index
    %98 = memref.load %arg1[%c98] : memref<256xf32, #tpu.memory_space<smem>>
    %c99 = arith.constant 99 : index
    %99 = memref.load %arg1[%c99] : memref<256xf32, #tpu.memory_space<smem>>
    %c100 = arith.constant 100 : index
    %100 = memref.load %arg1[%c100] : memref<256xf32, #tpu.memory_space<smem>>
    %c101 = arith.constant 101 : index
    %101 = memref.load %arg1[%c101] : memref<256xf32, #tpu.memory_space<smem>>
    %c102 = arith.constant 102 : index
    %102 = memref.load %arg1[%c102] : memref<256xf32, #tpu.memory_space<smem>>
    %c103 = arith.constant 103 : index
    %103 = memref.load %arg1[%c103] : memref<256xf32, #tpu.memory_space<smem>>
    %c104 = arith.constant 104 : index
    %104 = memref.load %arg1[%c104] : memref<256xf32, #tpu.memory_space<smem>>
    %c105 = arith.constant 105 : index
    %105 = memref.load %arg1[%c105] : memref<256xf32, #tpu.memory_space<smem>>
    %c106 = arith.constant 106 : index
    %106 = memref.load %arg1[%c106] : memref<256xf32, #tpu.memory_space<smem>>
    %c107 = arith.constant 107 : index
    %107 = memref.load %arg1[%c107] : memref<256xf32, #tpu.memory_space<smem>>
    %c108 = arith.constant 108 : index
    %108 = memref.load %arg1[%c108] : memref<256xf32, #tpu.memory_space<smem>>
    %c109 = arith.constant 109 : index
    %109 = memref.load %arg1[%c109] : memref<256xf32, #tpu.memory_space<smem>>
    %c110 = arith.constant 110 : index
    %110 = memref.load %arg1[%c110] : memref<256xf32, #tpu.memory_space<smem>>
    %c111 = arith.constant 111 : index
    %111 = memref.load %arg1[%c111] : memref<256xf32, #tpu.memory_space<smem>>
    %c112 = arith.constant 112 : index
    %112 = memref.load %arg1[%c112] : memref<256xf32, #tpu.memory_space<smem>>
    %c113 = arith.constant 113 : index
    %113 = memref.load %arg1[%c113] : memref<256xf32, #tpu.memory_space<smem>>
    %c114 = arith.constant 114 : index
    %114 = memref.load %arg1[%c114] : memref<256xf32, #tpu.memory_space<smem>>
    %c115 = arith.constant 115 : index
    %115 = memref.load %arg1[%c115] : memref<256xf32, #tpu.memory_space<smem>>
    %c116 = arith.constant 116 : index
    %116 = memref.load %arg1[%c116] : memref<256xf32, #tpu.memory_space<smem>>
    %c117 = arith.constant 117 : index
    %117 = memref.load %arg1[%c117] : memref<256xf32, #tpu.memory_space<smem>>
    %c118 = arith.constant 118 : index
    %118 = memref.load %arg1[%c118] : memref<256xf32, #tpu.memory_space<smem>>
    %c119 = arith.constant 119 : index
    %119 = memref.load %arg1[%c119] : memref<256xf32, #tpu.memory_space<smem>>
    %c120 = arith.constant 120 : index
    %120 = memref.load %arg1[%c120] : memref<256xf32, #tpu.memory_space<smem>>
    %c121 = arith.constant 121 : index
    %121 = memref.load %arg1[%c121] : memref<256xf32, #tpu.memory_space<smem>>
    %c122 = arith.constant 122 : index
    %122 = memref.load %arg1[%c122] : memref<256xf32, #tpu.memory_space<smem>>
    %c123 = arith.constant 123 : index
    %123 = memref.load %arg1[%c123] : memref<256xf32, #tpu.memory_space<smem>>
    %c124 = arith.constant 124 : index
    %124 = memref.load %arg1[%c124] : memref<256xf32, #tpu.memory_space<smem>>
    %c125 = arith.constant 125 : index
    %125 = memref.load %arg1[%c125] : memref<256xf32, #tpu.memory_space<smem>>
    %c126 = arith.constant 126 : index
    %126 = memref.load %arg1[%c126] : memref<256xf32, #tpu.memory_space<smem>>
    %c127 = arith.constant 127 : index
    %127 = memref.load %arg1[%c127] : memref<256xf32, #tpu.memory_space<smem>>
    %c128 = arith.constant 128 : index
    %128 = memref.load %arg1[%c128] : memref<256xf32, #tpu.memory_space<smem>>
    %c129 = arith.constant 129 : index
    %129 = memref.load %arg1[%c129] : memref<256xf32, #tpu.memory_space<smem>>
    %c130 = arith.constant 130 : index
    %130 = memref.load %arg1[%c130] : memref<256xf32, #tpu.memory_space<smem>>
    %c131 = arith.constant 131 : index
    %131 = memref.load %arg1[%c131] : memref<256xf32, #tpu.memory_space<smem>>
    %c132 = arith.constant 132 : index
    %132 = memref.load %arg1[%c132] : memref<256xf32, #tpu.memory_space<smem>>
    %c133 = arith.constant 133 : index
    %133 = memref.load %arg1[%c133] : memref<256xf32, #tpu.memory_space<smem>>
    %c134 = arith.constant 134 : index
    %134 = memref.load %arg1[%c134] : memref<256xf32, #tpu.memory_space<smem>>
    %c135 = arith.constant 135 : index
    %135 = memref.load %arg1[%c135] : memref<256xf32, #tpu.memory_space<smem>>
    %c136 = arith.constant 136 : index
    %136 = memref.load %arg1[%c136] : memref<256xf32, #tpu.memory_space<smem>>
    %c137 = arith.constant 137 : index
    %137 = memref.load %arg1[%c137] : memref<256xf32, #tpu.memory_space<smem>>
    %c138 = arith.constant 138 : index
    %138 = memref.load %arg1[%c138] : memref<256xf32, #tpu.memory_space<smem>>
    %c139 = arith.constant 139 : index
    %139 = memref.load %arg1[%c139] : memref<256xf32, #tpu.memory_space<smem>>
    %c140 = arith.constant 140 : index
    %140 = memref.load %arg1[%c140] : memref<256xf32, #tpu.memory_space<smem>>
    %c141 = arith.constant 141 : index
    %141 = memref.load %arg1[%c141] : memref<256xf32, #tpu.memory_space<smem>>
    %c142 = arith.constant 142 : index
    %142 = memref.load %arg1[%c142] : memref<256xf32, #tpu.memory_space<smem>>
    %c143 = arith.constant 143 : index
    %143 = memref.load %arg1[%c143] : memref<256xf32, #tpu.memory_space<smem>>
    %c144 = arith.constant 144 : index
    %144 = memref.load %arg1[%c144] : memref<256xf32, #tpu.memory_space<smem>>
    %c145 = arith.constant 145 : index
    %145 = memref.load %arg1[%c145] : memref<256xf32, #tpu.memory_space<smem>>
    %c146 = arith.constant 146 : index
    %146 = memref.load %arg1[%c146] : memref<256xf32, #tpu.memory_space<smem>>
    %c147 = arith.constant 147 : index
    %147 = memref.load %arg1[%c147] : memref<256xf32, #tpu.memory_space<smem>>
    %c148 = arith.constant 148 : index
    %148 = memref.load %arg1[%c148] : memref<256xf32, #tpu.memory_space<smem>>
    %c149 = arith.constant 149 : index
    %149 = memref.load %arg1[%c149] : memref<256xf32, #tpu.memory_space<smem>>
    %c150 = arith.constant 150 : index
    %150 = memref.load %arg1[%c150] : memref<256xf32, #tpu.memory_space<smem>>
    %c151 = arith.constant 151 : index
    %151 = memref.load %arg1[%c151] : memref<256xf32, #tpu.memory_space<smem>>
    %c152 = arith.constant 152 : index
    %152 = memref.load %arg1[%c152] : memref<256xf32, #tpu.memory_space<smem>>
    %c153 = arith.constant 153 : index
    %153 = memref.load %arg1[%c153] : memref<256xf32, #tpu.memory_space<smem>>
    %c154 = arith.constant 154 : index
    %154 = memref.load %arg1[%c154] : memref<256xf32, #tpu.memory_space<smem>>
    %c155 = arith.constant 155 : index
    %155 = memref.load %arg1[%c155] : memref<256xf32, #tpu.memory_space<smem>>
    %c156 = arith.constant 156 : index
    %156 = memref.load %arg1[%c156] : memref<256xf32, #tpu.memory_space<smem>>
    %c157 = arith.constant 157 : index
    %157 = memref.load %arg1[%c157] : memref<256xf32, #tpu.memory_space<smem>>
    %c158 = arith.constant 158 : index
    %158 = memref.load %arg1[%c158] : memref<256xf32, #tpu.memory_space<smem>>
    %c159 = arith.constant 159 : index
    %159 = memref.load %arg1[%c159] : memref<256xf32, #tpu.memory_space<smem>>
    %c160 = arith.constant 160 : index
    %160 = memref.load %arg1[%c160] : memref<256xf32, #tpu.memory_space<smem>>
    %c161 = arith.constant 161 : index
    %161 = memref.load %arg1[%c161] : memref<256xf32, #tpu.memory_space<smem>>
    %c162 = arith.constant 162 : index
    %162 = memref.load %arg1[%c162] : memref<256xf32, #tpu.memory_space<smem>>
    %c163 = arith.constant 163 : index
    %163 = memref.load %arg1[%c163] : memref<256xf32, #tpu.memory_space<smem>>
    %c164 = arith.constant 164 : index
    %164 = memref.load %arg1[%c164] : memref<256xf32, #tpu.memory_space<smem>>
    %c165 = arith.constant 165 : index
    %165 = memref.load %arg1[%c165] : memref<256xf32, #tpu.memory_space<smem>>
    %c166 = arith.constant 166 : index
    %166 = memref.load %arg1[%c166] : memref<256xf32, #tpu.memory_space<smem>>
    %c167 = arith.constant 167 : index
    %167 = memref.load %arg1[%c167] : memref<256xf32, #tpu.memory_space<smem>>
    %c168 = arith.constant 168 : index
    %168 = memref.load %arg1[%c168] : memref<256xf32, #tpu.memory_space<smem>>
    %c169 = arith.constant 169 : index
    %169 = memref.load %arg1[%c169] : memref<256xf32, #tpu.memory_space<smem>>
    %c170 = arith.constant 170 : index
    %170 = memref.load %arg1[%c170] : memref<256xf32, #tpu.memory_space<smem>>
    %c171 = arith.constant 171 : index
    %171 = memref.load %arg1[%c171] : memref<256xf32, #tpu.memory_space<smem>>
    %c172 = arith.constant 172 : index
    %172 = memref.load %arg1[%c172] : memref<256xf32, #tpu.memory_space<smem>>
    %c173 = arith.constant 173 : index
    %173 = memref.load %arg1[%c173] : memref<256xf32, #tpu.memory_space<smem>>
    %c174 = arith.constant 174 : index
    %174 = memref.load %arg1[%c174] : memref<256xf32, #tpu.memory_space<smem>>
    %c175 = arith.constant 175 : index
    %175 = memref.load %arg1[%c175] : memref<256xf32, #tpu.memory_space<smem>>
    %c176 = arith.constant 176 : index
    %176 = memref.load %arg1[%c176] : memref<256xf32, #tpu.memory_space<smem>>
    %c0_i32 = arith.constant 0 : i32
    %c16_i32 = arith.constant 16 : i32
    %177 = arith.muli %c0_i32, %c16_i32 : i32
    %178 = tpu.assume_multiple %177, 16 : i32
    %179 = arith.index_cast %178 : i32 to index
    %c0_0 = arith.constant 0 : index
    %180 = vector.load %arg2[%179, %c0_0] : memref<32x128xf32, #tpu.memory_space<vmem>>, vector<16x128xf32>
    %181 = vector.broadcast %0 : f32 to vector<16x128xf32>
    %182 = arith.mulf %180, %181 : vector<16x128xf32>
    %183 = vector.broadcast %16 : f32 to vector<16x128xf32>
    %184 = arith.addf %182, %183 : vector<16x128xf32>
    %cst = arith.constant 0.000000e+00 : f32
    %185 = vector.broadcast %cst : f32 to vector<16x128xf32>
    %186 = arith.maximumf %184, %185 : vector<16x128xf32>
    %187 = vector.broadcast %32 : f32 to vector<16x128xf32>
    %188 = arith.mulf %186, %187 : vector<16x128xf32>
    %189 = vector.broadcast %160 : f32 to vector<16x128xf32>
    %190 = arith.addf %188, %189 : vector<16x128xf32>
    %191 = vector.broadcast %33 : f32 to vector<16x128xf32>
    %192 = arith.mulf %186, %191 : vector<16x128xf32>
    %193 = vector.broadcast %161 : f32 to vector<16x128xf32>
    %194 = arith.addf %192, %193 : vector<16x128xf32>
    %195 = vector.broadcast %34 : f32 to vector<16x128xf32>
    %196 = arith.mulf %186, %195 : vector<16x128xf32>
    %197 = vector.broadcast %162 : f32 to vector<16x128xf32>
    %198 = arith.addf %196, %197 : vector<16x128xf32>
    %199 = vector.broadcast %35 : f32 to vector<16x128xf32>
    %200 = arith.mulf %186, %199 : vector<16x128xf32>
    %201 = vector.broadcast %163 : f32 to vector<16x128xf32>
    %202 = arith.addf %200, %201 : vector<16x128xf32>
    %203 = vector.broadcast %36 : f32 to vector<16x128xf32>
    %204 = arith.mulf %186, %203 : vector<16x128xf32>
    %205 = vector.broadcast %164 : f32 to vector<16x128xf32>
    %206 = arith.addf %204, %205 : vector<16x128xf32>
    %207 = vector.broadcast %37 : f32 to vector<16x128xf32>
    %208 = arith.mulf %186, %207 : vector<16x128xf32>
    %209 = vector.broadcast %165 : f32 to vector<16x128xf32>
    %210 = arith.addf %208, %209 : vector<16x128xf32>
    %211 = vector.broadcast %38 : f32 to vector<16x128xf32>
    %212 = arith.mulf %186, %211 : vector<16x128xf32>
    %213 = vector.broadcast %166 : f32 to vector<16x128xf32>
    %214 = arith.addf %212, %213 : vector<16x128xf32>
    %215 = vector.broadcast %39 : f32 to vector<16x128xf32>
    %216 = arith.mulf %186, %215 : vector<16x128xf32>
    %217 = vector.broadcast %167 : f32 to vector<16x128xf32>
    %218 = arith.addf %216, %217 : vector<16x128xf32>
    %219 = vector.broadcast %1 : f32 to vector<16x128xf32>
    %220 = arith.mulf %180, %219 : vector<16x128xf32>
    %221 = vector.broadcast %17 : f32 to vector<16x128xf32>
    %222 = arith.addf %220, %221 : vector<16x128xf32>
    %cst_1 = arith.constant 0.000000e+00 : f32
    %223 = vector.broadcast %cst_1 : f32 to vector<16x128xf32>
    %224 = arith.maximumf %222, %223 : vector<16x128xf32>
    %225 = vector.broadcast %40 : f32 to vector<16x128xf32>
    %226 = arith.mulf %224, %225 : vector<16x128xf32>
    %227 = arith.addf %190, %226 : vector<16x128xf32>
    %228 = vector.broadcast %41 : f32 to vector<16x128xf32>
    %229 = arith.mulf %224, %228 : vector<16x128xf32>
    %230 = arith.addf %194, %229 : vector<16x128xf32>
    %231 = vector.broadcast %42 : f32 to vector<16x128xf32>
    %232 = arith.mulf %224, %231 : vector<16x128xf32>
    %233 = arith.addf %198, %232 : vector<16x128xf32>
    %234 = vector.broadcast %43 : f32 to vector<16x128xf32>
    %235 = arith.mulf %224, %234 : vector<16x128xf32>
    %236 = arith.addf %202, %235 : vector<16x128xf32>
    %237 = vector.broadcast %44 : f32 to vector<16x128xf32>
    %238 = arith.mulf %224, %237 : vector<16x128xf32>
    %239 = arith.addf %206, %238 : vector<16x128xf32>
    %240 = vector.broadcast %45 : f32 to vector<16x128xf32>
    %241 = arith.mulf %224, %240 : vector<16x128xf32>
    %242 = arith.addf %210, %241 : vector<16x128xf32>
    %243 = vector.broadcast %46 : f32 to vector<16x128xf32>
    %244 = arith.mulf %224, %243 : vector<16x128xf32>
    %245 = arith.addf %214, %244 : vector<16x128xf32>
    %246 = vector.broadcast %47 : f32 to vector<16x128xf32>
    %247 = arith.mulf %224, %246 : vector<16x128xf32>
    %248 = arith.addf %218, %247 : vector<16x128xf32>
    %249 = vector.broadcast %2 : f32 to vector<16x128xf32>
    %250 = arith.mulf %180, %249 : vector<16x128xf32>
    %251 = vector.broadcast %18 : f32 to vector<16x128xf32>
    %252 = arith.addf %250, %251 : vector<16x128xf32>
    %cst_2 = arith.constant 0.000000e+00 : f32
    %253 = vector.broadcast %cst_2 : f32 to vector<16x128xf32>
    %254 = arith.maximumf %252, %253 : vector<16x128xf32>
    %255 = vector.broadcast %48 : f32 to vector<16x128xf32>
    %256 = arith.mulf %254, %255 : vector<16x128xf32>
    %257 = arith.addf %227, %256 : vector<16x128xf32>
    %258 = vector.broadcast %49 : f32 to vector<16x128xf32>
    %259 = arith.mulf %254, %258 : vector<16x128xf32>
    %260 = arith.addf %230, %259 : vector<16x128xf32>
    %261 = vector.broadcast %50 : f32 to vector<16x128xf32>
    %262 = arith.mulf %254, %261 : vector<16x128xf32>
    %263 = arith.addf %233, %262 : vector<16x128xf32>
    %264 = vector.broadcast %51 : f32 to vector<16x128xf32>
    %265 = arith.mulf %254, %264 : vector<16x128xf32>
    %266 = arith.addf %236, %265 : vector<16x128xf32>
    %267 = vector.broadcast %52 : f32 to vector<16x128xf32>
    %268 = arith.mulf %254, %267 : vector<16x128xf32>
    %269 = arith.addf %239, %268 : vector<16x128xf32>
    %270 = vector.broadcast %53 : f32 to vector<16x128xf32>
    %271 = arith.mulf %254, %270 : vector<16x128xf32>
    %272 = arith.addf %242, %271 : vector<16x128xf32>
    %273 = vector.broadcast %54 : f32 to vector<16x128xf32>
    %274 = arith.mulf %254, %273 : vector<16x128xf32>
    %275 = arith.addf %245, %274 : vector<16x128xf32>
    %276 = vector.broadcast %55 : f32 to vector<16x128xf32>
    %277 = arith.mulf %254, %276 : vector<16x128xf32>
    %278 = arith.addf %248, %277 : vector<16x128xf32>
    %279 = vector.broadcast %3 : f32 to vector<16x128xf32>
    %280 = arith.mulf %180, %279 : vector<16x128xf32>
    %281 = vector.broadcast %19 : f32 to vector<16x128xf32>
    %282 = arith.addf %280, %281 : vector<16x128xf32>
    %cst_3 = arith.constant 0.000000e+00 : f32
    %283 = vector.broadcast %cst_3 : f32 to vector<16x128xf32>
    %284 = arith.maximumf %282, %283 : vector<16x128xf32>
    %285 = vector.broadcast %56 : f32 to vector<16x128xf32>
    %286 = arith.mulf %284, %285 : vector<16x128xf32>
    %287 = arith.addf %257, %286 : vector<16x128xf32>
    %288 = vector.broadcast %57 : f32 to vector<16x128xf32>
    %289 = arith.mulf %284, %288 : vector<16x128xf32>
    %290 = arith.addf %260, %289 : vector<16x128xf32>
    %291 = vector.broadcast %58 : f32 to vector<16x128xf32>
    %292 = arith.mulf %284, %291 : vector<16x128xf32>
    %293 = arith.addf %263, %292 : vector<16x128xf32>
    %294 = vector.broadcast %59 : f32 to vector<16x128xf32>
    %295 = arith.mulf %284, %294 : vector<16x128xf32>
    %296 = arith.addf %266, %295 : vector<16x128xf32>
    %297 = vector.broadcast %60 : f32 to vector<16x128xf32>
    %298 = arith.mulf %284, %297 : vector<16x128xf32>
    %299 = arith.addf %269, %298 : vector<16x128xf32>
    %300 = vector.broadcast %61 : f32 to vector<16x128xf32>
    %301 = arith.mulf %284, %300 : vector<16x128xf32>
    %302 = arith.addf %272, %301 : vector<16x128xf32>
    %303 = vector.broadcast %62 : f32 to vector<16x128xf32>
    %304 = arith.mulf %284, %303 : vector<16x128xf32>
    %305 = arith.addf %275, %304 : vector<16x128xf32>
    %306 = vector.broadcast %63 : f32 to vector<16x128xf32>
    %307 = arith.mulf %284, %306 : vector<16x128xf32>
    %308 = arith.addf %278, %307 : vector<16x128xf32>
    %309 = vector.broadcast %4 : f32 to vector<16x128xf32>
    %310 = arith.mulf %180, %309 : vector<16x128xf32>
    %311 = vector.broadcast %20 : f32 to vector<16x128xf32>
    %312 = arith.addf %310, %311 : vector<16x128xf32>
    %cst_4 = arith.constant 0.000000e+00 : f32
    %313 = vector.broadcast %cst_4 : f32 to vector<16x128xf32>
    %314 = arith.maximumf %312, %313 : vector<16x128xf32>
    %315 = vector.broadcast %64 : f32 to vector<16x128xf32>
    %316 = arith.mulf %314, %315 : vector<16x128xf32>
    %317 = arith.addf %287, %316 : vector<16x128xf32>
    %318 = vector.broadcast %65 : f32 to vector<16x128xf32>
    %319 = arith.mulf %314, %318 : vector<16x128xf32>
    %320 = arith.addf %290, %319 : vector<16x128xf32>
    %321 = vector.broadcast %66 : f32 to vector<16x128xf32>
    %322 = arith.mulf %314, %321 : vector<16x128xf32>
    %323 = arith.addf %293, %322 : vector<16x128xf32>
    %324 = vector.broadcast %67 : f32 to vector<16x128xf32>
    %325 = arith.mulf %314, %324 : vector<16x128xf32>
    %326 = arith.addf %296, %325 : vector<16x128xf32>
    %327 = vector.broadcast %68 : f32 to vector<16x128xf32>
    %328 = arith.mulf %314, %327 : vector<16x128xf32>
    %329 = arith.addf %299, %328 : vector<16x128xf32>
    %330 = vector.broadcast %69 : f32 to vector<16x128xf32>
    %331 = arith.mulf %314, %330 : vector<16x128xf32>
    %332 = arith.addf %302, %331 : vector<16x128xf32>
    %333 = vector.broadcast %70 : f32 to vector<16x128xf32>
    %334 = arith.mulf %314, %333 : vector<16x128xf32>
    %335 = arith.addf %305, %334 : vector<16x128xf32>
    %336 = vector.broadcast %71 : f32 to vector<16x128xf32>
    %337 = arith.mulf %314, %336 : vector<16x128xf32>
    %338 = arith.addf %308, %337 : vector<16x128xf32>
    %339 = vector.broadcast %5 : f32 to vector<16x128xf32>
    %340 = arith.mulf %180, %339 : vector<16x128xf32>
    %341 = vector.broadcast %21 : f32 to vector<16x128xf32>
    %342 = arith.addf %340, %341 : vector<16x128xf32>
    %cst_5 = arith.constant 0.000000e+00 : f32
    %343 = vector.broadcast %cst_5 : f32 to vector<16x128xf32>
    %344 = arith.maximumf %342, %343 : vector<16x128xf32>
    %345 = vector.broadcast %72 : f32 to vector<16x128xf32>
    %346 = arith.mulf %344, %345 : vector<16x128xf32>
    %347 = arith.addf %317, %346 : vector<16x128xf32>
    %348 = vector.broadcast %73 : f32 to vector<16x128xf32>
    %349 = arith.mulf %344, %348 : vector<16x128xf32>
    %350 = arith.addf %320, %349 : vector<16x128xf32>
    %351 = vector.broadcast %74 : f32 to vector<16x128xf32>
    %352 = arith.mulf %344, %351 : vector<16x128xf32>
    %353 = arith.addf %323, %352 : vector<16x128xf32>
    %354 = vector.broadcast %75 : f32 to vector<16x128xf32>
    %355 = arith.mulf %344, %354 : vector<16x128xf32>
    %356 = arith.addf %326, %355 : vector<16x128xf32>
    %357 = vector.broadcast %76 : f32 to vector<16x128xf32>
    %358 = arith.mulf %344, %357 : vector<16x128xf32>
    %359 = arith.addf %329, %358 : vector<16x128xf32>
    %360 = vector.broadcast %77 : f32 to vector<16x128xf32>
    %361 = arith.mulf %344, %360 : vector<16x128xf32>
    %362 = arith.addf %332, %361 : vector<16x128xf32>
    %363 = vector.broadcast %78 : f32 to vector<16x128xf32>
    %364 = arith.mulf %344, %363 : vector<16x128xf32>
    %365 = arith.addf %335, %364 : vector<16x128xf32>
    %366 = vector.broadcast %79 : f32 to vector<16x128xf32>
    %367 = arith.mulf %344, %366 : vector<16x128xf32>
    %368 = arith.addf %338, %367 : vector<16x128xf32>
    %369 = vector.broadcast %6 : f32 to vector<16x128xf32>
    %370 = arith.mulf %180, %369 : vector<16x128xf32>
    %371 = vector.broadcast %22 : f32 to vector<16x128xf32>
    %372 = arith.addf %370, %371 : vector<16x128xf32>
    %cst_6 = arith.constant 0.000000e+00 : f32
    %373 = vector.broadcast %cst_6 : f32 to vector<16x128xf32>
    %374 = arith.maximumf %372, %373 : vector<16x128xf32>
    %375 = vector.broadcast %80 : f32 to vector<16x128xf32>
    %376 = arith.mulf %374, %375 : vector<16x128xf32>
    %377 = arith.addf %347, %376 : vector<16x128xf32>
    %378 = vector.broadcast %81 : f32 to vector<16x128xf32>
    %379 = arith.mulf %374, %378 : vector<16x128xf32>
    %380 = arith.addf %350, %379 : vector<16x128xf32>
    %381 = vector.broadcast %82 : f32 to vector<16x128xf32>
    %382 = arith.mulf %374, %381 : vector<16x128xf32>
    %383 = arith.addf %353, %382 : vector<16x128xf32>
    %384 = vector.broadcast %83 : f32 to vector<16x128xf32>
    %385 = arith.mulf %374, %384 : vector<16x128xf32>
    %386 = arith.addf %356, %385 : vector<16x128xf32>
    %387 = vector.broadcast %84 : f32 to vector<16x128xf32>
    %388 = arith.mulf %374, %387 : vector<16x128xf32>
    %389 = arith.addf %359, %388 : vector<16x128xf32>
    %390 = vector.broadcast %85 : f32 to vector<16x128xf32>
    %391 = arith.mulf %374, %390 : vector<16x128xf32>
    %392 = arith.addf %362, %391 : vector<16x128xf32>
    %393 = vector.broadcast %86 : f32 to vector<16x128xf32>
    %394 = arith.mulf %374, %393 : vector<16x128xf32>
    %395 = arith.addf %365, %394 : vector<16x128xf32>
    %396 = vector.broadcast %87 : f32 to vector<16x128xf32>
    %397 = arith.mulf %374, %396 : vector<16x128xf32>
    %398 = arith.addf %368, %397 : vector<16x128xf32>
    %399 = vector.broadcast %7 : f32 to vector<16x128xf32>
    %400 = arith.mulf %180, %399 : vector<16x128xf32>
    %401 = vector.broadcast %23 : f32 to vector<16x128xf32>
    %402 = arith.addf %400, %401 : vector<16x128xf32>
    %cst_7 = arith.constant 0.000000e+00 : f32
    %403 = vector.broadcast %cst_7 : f32 to vector<16x128xf32>
    %404 = arith.maximumf %402, %403 : vector<16x128xf32>
    %405 = vector.broadcast %88 : f32 to vector<16x128xf32>
    %406 = arith.mulf %404, %405 : vector<16x128xf32>
    %407 = arith.addf %377, %406 : vector<16x128xf32>
    %408 = vector.broadcast %89 : f32 to vector<16x128xf32>
    %409 = arith.mulf %404, %408 : vector<16x128xf32>
    %410 = arith.addf %380, %409 : vector<16x128xf32>
    %411 = vector.broadcast %90 : f32 to vector<16x128xf32>
    %412 = arith.mulf %404, %411 : vector<16x128xf32>
    %413 = arith.addf %383, %412 : vector<16x128xf32>
    %414 = vector.broadcast %91 : f32 to vector<16x128xf32>
    %415 = arith.mulf %404, %414 : vector<16x128xf32>
    %416 = arith.addf %386, %415 : vector<16x128xf32>
    %417 = vector.broadcast %92 : f32 to vector<16x128xf32>
    %418 = arith.mulf %404, %417 : vector<16x128xf32>
    %419 = arith.addf %389, %418 : vector<16x128xf32>
    %420 = vector.broadcast %93 : f32 to vector<16x128xf32>
    %421 = arith.mulf %404, %420 : vector<16x128xf32>
    %422 = arith.addf %392, %421 : vector<16x128xf32>
    %423 = vector.broadcast %94 : f32 to vector<16x128xf32>
    %424 = arith.mulf %404, %423 : vector<16x128xf32>
    %425 = arith.addf %395, %424 : vector<16x128xf32>
    %426 = vector.broadcast %95 : f32 to vector<16x128xf32>
    %427 = arith.mulf %404, %426 : vector<16x128xf32>
    %428 = arith.addf %398, %427 : vector<16x128xf32>
    %429 = vector.broadcast %8 : f32 to vector<16x128xf32>
    %430 = arith.mulf %180, %429 : vector<16x128xf32>
    %431 = vector.broadcast %24 : f32 to vector<16x128xf32>
    %432 = arith.addf %430, %431 : vector<16x128xf32>
    %cst_8 = arith.constant 0.000000e+00 : f32
    %433 = vector.broadcast %cst_8 : f32 to vector<16x128xf32>
    %434 = arith.maximumf %432, %433 : vector<16x128xf32>
    %435 = vector.broadcast %96 : f32 to vector<16x128xf32>
    %436 = arith.mulf %434, %435 : vector<16x128xf32>
    %437 = arith.addf %407, %436 : vector<16x128xf32>
    %438 = vector.broadcast %97 : f32 to vector<16x128xf32>
    %439 = arith.mulf %434, %438 : vector<16x128xf32>
    %440 = arith.addf %410, %439 : vector<16x128xf32>
    %441 = vector.broadcast %98 : f32 to vector<16x128xf32>
    %442 = arith.mulf %434, %441 : vector<16x128xf32>
    %443 = arith.addf %413, %442 : vector<16x128xf32>
    %444 = vector.broadcast %99 : f32 to vector<16x128xf32>
    %445 = arith.mulf %434, %444 : vector<16x128xf32>
    %446 = arith.addf %416, %445 : vector<16x128xf32>
    %447 = vector.broadcast %100 : f32 to vector<16x128xf32>
    %448 = arith.mulf %434, %447 : vector<16x128xf32>
    %449 = arith.addf %419, %448 : vector<16x128xf32>
    %450 = vector.broadcast %101 : f32 to vector<16x128xf32>
    %451 = arith.mulf %434, %450 : vector<16x128xf32>
    %452 = arith.addf %422, %451 : vector<16x128xf32>
    %453 = vector.broadcast %102 : f32 to vector<16x128xf32>
    %454 = arith.mulf %434, %453 : vector<16x128xf32>
    %455 = arith.addf %425, %454 : vector<16x128xf32>
    %456 = vector.broadcast %103 : f32 to vector<16x128xf32>
    %457 = arith.mulf %434, %456 : vector<16x128xf32>
    %458 = arith.addf %428, %457 : vector<16x128xf32>
    %459 = vector.broadcast %9 : f32 to vector<16x128xf32>
    %460 = arith.mulf %180, %459 : vector<16x128xf32>
    %461 = vector.broadcast %25 : f32 to vector<16x128xf32>
    %462 = arith.addf %460, %461 : vector<16x128xf32>
    %cst_9 = arith.constant 0.000000e+00 : f32
    %463 = vector.broadcast %cst_9 : f32 to vector<16x128xf32>
    %464 = arith.maximumf %462, %463 : vector<16x128xf32>
    %465 = vector.broadcast %104 : f32 to vector<16x128xf32>
    %466 = arith.mulf %464, %465 : vector<16x128xf32>
    %467 = arith.addf %437, %466 : vector<16x128xf32>
    %468 = vector.broadcast %105 : f32 to vector<16x128xf32>
    %469 = arith.mulf %464, %468 : vector<16x128xf32>
    %470 = arith.addf %440, %469 : vector<16x128xf32>
    %471 = vector.broadcast %106 : f32 to vector<16x128xf32>
    %472 = arith.mulf %464, %471 : vector<16x128xf32>
    %473 = arith.addf %443, %472 : vector<16x128xf32>
    %474 = vector.broadcast %107 : f32 to vector<16x128xf32>
    %475 = arith.mulf %464, %474 : vector<16x128xf32>
    %476 = arith.addf %446, %475 : vector<16x128xf32>
    %477 = vector.broadcast %108 : f32 to vector<16x128xf32>
    %478 = arith.mulf %464, %477 : vector<16x128xf32>
    %479 = arith.addf %449, %478 : vector<16x128xf32>
    %480 = vector.broadcast %109 : f32 to vector<16x128xf32>
    %481 = arith.mulf %464, %480 : vector<16x128xf32>
    %482 = arith.addf %452, %481 : vector<16x128xf32>
    %483 = vector.broadcast %110 : f32 to vector<16x128xf32>
    %484 = arith.mulf %464, %483 : vector<16x128xf32>
    %485 = arith.addf %455, %484 : vector<16x128xf32>
    %486 = vector.broadcast %111 : f32 to vector<16x128xf32>
    %487 = arith.mulf %464, %486 : vector<16x128xf32>
    %488 = arith.addf %458, %487 : vector<16x128xf32>
    %489 = vector.broadcast %10 : f32 to vector<16x128xf32>
    %490 = arith.mulf %180, %489 : vector<16x128xf32>
    %491 = vector.broadcast %26 : f32 to vector<16x128xf32>
    %492 = arith.addf %490, %491 : vector<16x128xf32>
    %cst_10 = arith.constant 0.000000e+00 : f32
    %493 = vector.broadcast %cst_10 : f32 to vector<16x128xf32>
    %494 = arith.maximumf %492, %493 : vector<16x128xf32>
    %495 = vector.broadcast %112 : f32 to vector<16x128xf32>
    %496 = arith.mulf %494, %495 : vector<16x128xf32>
    %497 = arith.addf %467, %496 : vector<16x128xf32>
    %498 = vector.broadcast %113 : f32 to vector<16x128xf32>
    %499 = arith.mulf %494, %498 : vector<16x128xf32>
    %500 = arith.addf %470, %499 : vector<16x128xf32>
    %501 = vector.broadcast %114 : f32 to vector<16x128xf32>
    %502 = arith.mulf %494, %501 : vector<16x128xf32>
    %503 = arith.addf %473, %502 : vector<16x128xf32>
    %504 = vector.broadcast %115 : f32 to vector<16x128xf32>
    %505 = arith.mulf %494, %504 : vector<16x128xf32>
    %506 = arith.addf %476, %505 : vector<16x128xf32>
    %507 = vector.broadcast %116 : f32 to vector<16x128xf32>
    %508 = arith.mulf %494, %507 : vector<16x128xf32>
    %509 = arith.addf %479, %508 : vector<16x128xf32>
    %510 = vector.broadcast %117 : f32 to vector<16x128xf32>
    %511 = arith.mulf %494, %510 : vector<16x128xf32>
    %512 = arith.addf %482, %511 : vector<16x128xf32>
    %513 = vector.broadcast %118 : f32 to vector<16x128xf32>
    %514 = arith.mulf %494, %513 : vector<16x128xf32>
    %515 = arith.addf %485, %514 : vector<16x128xf32>
    %516 = vector.broadcast %119 : f32 to vector<16x128xf32>
    %517 = arith.mulf %494, %516 : vector<16x128xf32>
    %518 = arith.addf %488, %517 : vector<16x128xf32>
    %519 = vector.broadcast %11 : f32 to vector<16x128xf32>
    %520 = arith.mulf %180, %519 : vector<16x128xf32>
    %521 = vector.broadcast %27 : f32 to vector<16x128xf32>
    %522 = arith.addf %520, %521 : vector<16x128xf32>
    %cst_11 = arith.constant 0.000000e+00 : f32
    %523 = vector.broadcast %cst_11 : f32 to vector<16x128xf32>
    %524 = arith.maximumf %522, %523 : vector<16x128xf32>
    %525 = vector.broadcast %120 : f32 to vector<16x128xf32>
    %526 = arith.mulf %524, %525 : vector<16x128xf32>
    %527 = arith.addf %497, %526 : vector<16x128xf32>
    %528 = vector.broadcast %121 : f32 to vector<16x128xf32>
    %529 = arith.mulf %524, %528 : vector<16x128xf32>
    %530 = arith.addf %500, %529 : vector<16x128xf32>
    %531 = vector.broadcast %122 : f32 to vector<16x128xf32>
    %532 = arith.mulf %524, %531 : vector<16x128xf32>
    %533 = arith.addf %503, %532 : vector<16x128xf32>
    %534 = vector.broadcast %123 : f32 to vector<16x128xf32>
    %535 = arith.mulf %524, %534 : vector<16x128xf32>
    %536 = arith.addf %506, %535 : vector<16x128xf32>
    %537 = vector.broadcast %124 : f32 to vector<16x128xf32>
    %538 = arith.mulf %524, %537 : vector<16x128xf32>
    %539 = arith.addf %509, %538 : vector<16x128xf32>
    %540 = vector.broadcast %125 : f32 to vector<16x128xf32>
    %541 = arith.mulf %524, %540 : vector<16x128xf32>
    %542 = arith.addf %512, %541 : vector<16x128xf32>
    %543 = vector.broadcast %126 : f32 to vector<16x128xf32>
    %544 = arith.mulf %524, %543 : vector<16x128xf32>
    %545 = arith.addf %515, %544 : vector<16x128xf32>
    %546 = vector.broadcast %127 : f32 to vector<16x128xf32>
    %547 = arith.mulf %524, %546 : vector<16x128xf32>
    %548 = arith.addf %518, %547 : vector<16x128xf32>
    %549 = vector.broadcast %12 : f32 to vector<16x128xf32>
    %550 = arith.mulf %180, %549 : vector<16x128xf32>
    %551 = vector.broadcast %28 : f32 to vector<16x128xf32>
    %552 = arith.addf %550, %551 : vector<16x128xf32>
    %cst_12 = arith.constant 0.000000e+00 : f32
    %553 = vector.broadcast %cst_12 : f32 to vector<16x128xf32>
    %554 = arith.maximumf %552, %553 : vector<16x128xf32>
    %555 = vector.broadcast %128 : f32 to vector<16x128xf32>
    %556 = arith.mulf %554, %555 : vector<16x128xf32>
    %557 = arith.addf %527, %556 : vector<16x128xf32>
    %558 = vector.broadcast %129 : f32 to vector<16x128xf32>
    %559 = arith.mulf %554, %558 : vector<16x128xf32>
    %560 = arith.addf %530, %559 : vector<16x128xf32>
    %561 = vector.broadcast %130 : f32 to vector<16x128xf32>
    %562 = arith.mulf %554, %561 : vector<16x128xf32>
    %563 = arith.addf %533, %562 : vector<16x128xf32>
    %564 = vector.broadcast %131 : f32 to vector<16x128xf32>
    %565 = arith.mulf %554, %564 : vector<16x128xf32>
    %566 = arith.addf %536, %565 : vector<16x128xf32>
    %567 = vector.broadcast %132 : f32 to vector<16x128xf32>
    %568 = arith.mulf %554, %567 : vector<16x128xf32>
    %569 = arith.addf %539, %568 : vector<16x128xf32>
    %570 = vector.broadcast %133 : f32 to vector<16x128xf32>
    %571 = arith.mulf %554, %570 : vector<16x128xf32>
    %572 = arith.addf %542, %571 : vector<16x128xf32>
    %573 = vector.broadcast %134 : f32 to vector<16x128xf32>
    %574 = arith.mulf %554, %573 : vector<16x128xf32>
    %575 = arith.addf %545, %574 : vector<16x128xf32>
    %576 = vector.broadcast %135 : f32 to vector<16x128xf32>
    %577 = arith.mulf %554, %576 : vector<16x128xf32>
    %578 = arith.addf %548, %577 : vector<16x128xf32>
    %579 = vector.broadcast %13 : f32 to vector<16x128xf32>
    %580 = arith.mulf %180, %579 : vector<16x128xf32>
    %581 = vector.broadcast %29 : f32 to vector<16x128xf32>
    %582 = arith.addf %580, %581 : vector<16x128xf32>
    %cst_13 = arith.constant 0.000000e+00 : f32
    %583 = vector.broadcast %cst_13 : f32 to vector<16x128xf32>
    %584 = arith.maximumf %582, %583 : vector<16x128xf32>
    %585 = vector.broadcast %136 : f32 to vector<16x128xf32>
    %586 = arith.mulf %584, %585 : vector<16x128xf32>
    %587 = arith.addf %557, %586 : vector<16x128xf32>
    %588 = vector.broadcast %137 : f32 to vector<16x128xf32>
    %589 = arith.mulf %584, %588 : vector<16x128xf32>
    %590 = arith.addf %560, %589 : vector<16x128xf32>
    %591 = vector.broadcast %138 : f32 to vector<16x128xf32>
    %592 = arith.mulf %584, %591 : vector<16x128xf32>
    %593 = arith.addf %563, %592 : vector<16x128xf32>
    %594 = vector.broadcast %139 : f32 to vector<16x128xf32>
    %595 = arith.mulf %584, %594 : vector<16x128xf32>
    %596 = arith.addf %566, %595 : vector<16x128xf32>
    %597 = vector.broadcast %140 : f32 to vector<16x128xf32>
    %598 = arith.mulf %584, %597 : vector<16x128xf32>
    %599 = arith.addf %569, %598 : vector<16x128xf32>
    %600 = vector.broadcast %141 : f32 to vector<16x128xf32>
    %601 = arith.mulf %584, %600 : vector<16x128xf32>
    %602 = arith.addf %572, %601 : vector<16x128xf32>
    %603 = vector.broadcast %142 : f32 to vector<16x128xf32>
    %604 = arith.mulf %584, %603 : vector<16x128xf32>
    %605 = arith.addf %575, %604 : vector<16x128xf32>
    %606 = vector.broadcast %143 : f32 to vector<16x128xf32>
    %607 = arith.mulf %584, %606 : vector<16x128xf32>
    %608 = arith.addf %578, %607 : vector<16x128xf32>
    %609 = vector.broadcast %14 : f32 to vector<16x128xf32>
    %610 = arith.mulf %180, %609 : vector<16x128xf32>
    %611 = vector.broadcast %30 : f32 to vector<16x128xf32>
    %612 = arith.addf %610, %611 : vector<16x128xf32>
    %cst_14 = arith.constant 0.000000e+00 : f32
    %613 = vector.broadcast %cst_14 : f32 to vector<16x128xf32>
    %614 = arith.maximumf %612, %613 : vector<16x128xf32>
    %615 = vector.broadcast %144 : f32 to vector<16x128xf32>
    %616 = arith.mulf %614, %615 : vector<16x128xf32>
    %617 = arith.addf %587, %616 : vector<16x128xf32>
    %618 = vector.broadcast %145 : f32 to vector<16x128xf32>
    %619 = arith.mulf %614, %618 : vector<16x128xf32>
    %620 = arith.addf %590, %619 : vector<16x128xf32>
    %621 = vector.broadcast %146 : f32 to vector<16x128xf32>
    %622 = arith.mulf %614, %621 : vector<16x128xf32>
    %623 = arith.addf %593, %622 : vector<16x128xf32>
    %624 = vector.broadcast %147 : f32 to vector<16x128xf32>
    %625 = arith.mulf %614, %624 : vector<16x128xf32>
    %626 = arith.addf %596, %625 : vector<16x128xf32>
    %627 = vector.broadcast %148 : f32 to vector<16x128xf32>
    %628 = arith.mulf %614, %627 : vector<16x128xf32>
    %629 = arith.addf %599, %628 : vector<16x128xf32>
    %630 = vector.broadcast %149 : f32 to vector<16x128xf32>
    %631 = arith.mulf %614, %630 : vector<16x128xf32>
    %632 = arith.addf %602, %631 : vector<16x128xf32>
    %633 = vector.broadcast %150 : f32 to vector<16x128xf32>
    %634 = arith.mulf %614, %633 : vector<16x128xf32>
    %635 = arith.addf %605, %634 : vector<16x128xf32>
    %636 = vector.broadcast %151 : f32 to vector<16x128xf32>
    %637 = arith.mulf %614, %636 : vector<16x128xf32>
    %638 = arith.addf %608, %637 : vector<16x128xf32>
    %639 = vector.broadcast %15 : f32 to vector<16x128xf32>
    %640 = arith.mulf %180, %639 : vector<16x128xf32>
    %641 = vector.broadcast %31 : f32 to vector<16x128xf32>
    %642 = arith.addf %640, %641 : vector<16x128xf32>
    %cst_15 = arith.constant 0.000000e+00 : f32
    %643 = vector.broadcast %cst_15 : f32 to vector<16x128xf32>
    %644 = arith.maximumf %642, %643 : vector<16x128xf32>
    %645 = vector.broadcast %152 : f32 to vector<16x128xf32>
    %646 = arith.mulf %644, %645 : vector<16x128xf32>
    %647 = arith.addf %617, %646 : vector<16x128xf32>
    %648 = vector.broadcast %153 : f32 to vector<16x128xf32>
    %649 = arith.mulf %644, %648 : vector<16x128xf32>
    %650 = arith.addf %620, %649 : vector<16x128xf32>
    %651 = vector.broadcast %154 : f32 to vector<16x128xf32>
    %652 = arith.mulf %644, %651 : vector<16x128xf32>
    %653 = arith.addf %623, %652 : vector<16x128xf32>
    %654 = vector.broadcast %155 : f32 to vector<16x128xf32>
    %655 = arith.mulf %644, %654 : vector<16x128xf32>
    %656 = arith.addf %626, %655 : vector<16x128xf32>
    %657 = vector.broadcast %156 : f32 to vector<16x128xf32>
    %658 = arith.mulf %644, %657 : vector<16x128xf32>
    %659 = arith.addf %629, %658 : vector<16x128xf32>
    %660 = vector.broadcast %157 : f32 to vector<16x128xf32>
    %661 = arith.mulf %644, %660 : vector<16x128xf32>
    %662 = arith.addf %632, %661 : vector<16x128xf32>
    %663 = vector.broadcast %158 : f32 to vector<16x128xf32>
    %664 = arith.mulf %644, %663 : vector<16x128xf32>
    %665 = arith.addf %635, %664 : vector<16x128xf32>
    %666 = vector.broadcast %159 : f32 to vector<16x128xf32>
    %667 = arith.mulf %644, %666 : vector<16x128xf32>
    %668 = arith.addf %638, %667 : vector<16x128xf32>
    %cst_16 = arith.constant 0.000000e+00 : f32
    %669 = vector.broadcast %cst_16 : f32 to vector<16x128xf32>
    %670 = arith.maximumf %647, %669 : vector<16x128xf32>
    %671 = vector.broadcast %168 : f32 to vector<16x128xf32>
    %672 = arith.mulf %670, %671 : vector<16x128xf32>
    %673 = vector.broadcast %176 : f32 to vector<16x128xf32>
    %674 = arith.addf %672, %673 : vector<16x128xf32>
    %cst_17 = arith.constant 0.000000e+00 : f32
    %675 = vector.broadcast %cst_17 : f32 to vector<16x128xf32>
    %676 = arith.maximumf %650, %675 : vector<16x128xf32>
    %677 = vector.broadcast %169 : f32 to vector<16x128xf32>
    %678 = arith.mulf %676, %677 : vector<16x128xf32>
    %679 = arith.addf %674, %678 : vector<16x128xf32>
    %cst_18 = arith.constant 0.000000e+00 : f32
    %680 = vector.broadcast %cst_18 : f32 to vector<16x128xf32>
    %681 = arith.maximumf %653, %680 : vector<16x128xf32>
    %682 = vector.broadcast %170 : f32 to vector<16x128xf32>
    %683 = arith.mulf %681, %682 : vector<16x128xf32>
    %684 = arith.addf %679, %683 : vector<16x128xf32>
    %cst_19 = arith.constant 0.000000e+00 : f32
    %685 = vector.broadcast %cst_19 : f32 to vector<16x128xf32>
    %686 = arith.maximumf %656, %685 : vector<16x128xf32>
    %687 = vector.broadcast %171 : f32 to vector<16x128xf32>
    %688 = arith.mulf %686, %687 : vector<16x128xf32>
    %689 = arith.addf %684, %688 : vector<16x128xf32>
    %cst_20 = arith.constant 0.000000e+00 : f32
    %690 = vector.broadcast %cst_20 : f32 to vector<16x128xf32>
    %691 = arith.maximumf %659, %690 : vector<16x128xf32>
    %692 = vector.broadcast %172 : f32 to vector<16x128xf32>
    %693 = arith.mulf %691, %692 : vector<16x128xf32>
    %694 = arith.addf %689, %693 : vector<16x128xf32>
    %cst_21 = arith.constant 0.000000e+00 : f32
    %695 = vector.broadcast %cst_21 : f32 to vector<16x128xf32>
    %696 = arith.maximumf %662, %695 : vector<16x128xf32>
    %697 = vector.broadcast %173 : f32 to vector<16x128xf32>
    %698 = arith.mulf %696, %697 : vector<16x128xf32>
    %699 = arith.addf %694, %698 : vector<16x128xf32>
    %cst_22 = arith.constant 0.000000e+00 : f32
    %700 = vector.broadcast %cst_22 : f32 to vector<16x128xf32>
    %701 = arith.maximumf %665, %700 : vector<16x128xf32>
    %702 = vector.broadcast %174 : f32 to vector<16x128xf32>
    %703 = arith.mulf %701, %702 : vector<16x128xf32>
    %704 = arith.addf %699, %703 : vector<16x128xf32>
    %cst_23 = arith.constant 0.000000e+00 : f32
    %705 = vector.broadcast %cst_23 : f32 to vector<16x128xf32>
    %706 = arith.maximumf %668, %705 : vector<16x128xf32>
    %707 = vector.broadcast %175 : f32 to vector<16x128xf32>
    %708 = arith.mulf %706, %707 : vector<16x128xf32>
    %709 = arith.addf %704, %708 : vector<16x128xf32>
    %cst_24 = arith.constant 0.000000e+00 : f32
    %710 = vector.broadcast %cst_24 : f32 to vector<16x128xf32>
    %711 = arith.maximumf %709, %710 : vector<16x128xf32>
    %712 = arith.index_cast %178 : i32 to index
    %c0_25 = arith.constant 0 : index
    %713 = vector.load %arg3[%712, %c0_25] : memref<32x128xf32, #tpu.memory_space<vmem>>, vector<16x128xf32>
    tpu.vector_store %arg3[%712, %c0_25], %711 {strides = array<i32>} : memref<32x128xf32, #tpu.memory_space<vmem>>, vector<16x128xf32>,
    %c1_i32 = arith.constant 1 : i32
    %c16_i32_26 = arith.constant 16 : i32
    %714 = arith.muli %c1_i32, %c16_i32_26 : i32
    %715 = tpu.assume_multiple %714, 16 : i32
    %716 = arith.index_cast %715 : i32 to index
    %c0_27 = arith.constant 0 : index
    %717 = vector.load %arg2[%716, %c0_27] : memref<32x128xf32, #tpu.memory_space<vmem>>, vector<16x128xf32>
    %718 = vector.broadcast %0 : f32 to vector<16x128xf32>
    %719 = arith.mulf %717, %718 : vector<16x128xf32>
    %720 = vector.broadcast %16 : f32 to vector<16x128xf32>
    %721 = arith.addf %719, %720 : vector<16x128xf32>
    %cst_28 = arith.constant 0.000000e+00 : f32
    %722 = vector.broadcast %cst_28 : f32 to vector<16x128xf32>
    %723 = arith.maximumf %721, %722 : vector<16x128xf32>
    %724 = vector.broadcast %32 : f32 to vector<16x128xf32>
    %725 = arith.mulf %723, %724 : vector<16x128xf32>
    %726 = vector.broadcast %160 : f32 to vector<16x128xf32>
    %727 = arith.addf %725, %726 : vector<16x128xf32>
    %728 = vector.broadcast %33 : f32 to vector<16x128xf32>
    %729 = arith.mulf %723, %728 : vector<16x128xf32>
    %730 = vector.broadcast %161 : f32 to vector<16x128xf32>
    %731 = arith.addf %729, %730 : vector<16x128xf32>
    %732 = vector.broadcast %34 : f32 to vector<16x128xf32>
    %733 = arith.mulf %723, %732 : vector<16x128xf32>
    %734 = vector.broadcast %162 : f32 to vector<16x128xf32>
    %735 = arith.addf %733, %734 : vector<16x128xf32>
    %736 = vector.broadcast %35 : f32 to vector<16x128xf32>
    %737 = arith.mulf %723, %736 : vector<16x128xf32>
    %738 = vector.broadcast %163 : f32 to vector<16x128xf32>
    %739 = arith.addf %737, %738 : vector<16x128xf32>
    %740 = vector.broadcast %36 : f32 to vector<16x128xf32>
    %741 = arith.mulf %723, %740 : vector<16x128xf32>
    %742 = vector.broadcast %164 : f32 to vector<16x128xf32>
    %743 = arith.addf %741, %742 : vector<16x128xf32>
    %744 = vector.broadcast %37 : f32 to vector<16x128xf32>
    %745 = arith.mulf %723, %744 : vector<16x128xf32>
    %746 = vector.broadcast %165 : f32 to vector<16x128xf32>
    %747 = arith.addf %745, %746 : vector<16x128xf32>
    %748 = vector.broadcast %38 : f32 to vector<16x128xf32>
    %749 = arith.mulf %723, %748 : vector<16x128xf32>
    %750 = vector.broadcast %166 : f32 to vector<16x128xf32>
    %751 = arith.addf %749, %750 : vector<16x128xf32>
    %752 = vector.broadcast %39 : f32 to vector<16x128xf32>
    %753 = arith.mulf %723, %752 : vector<16x128xf32>
    %754 = vector.broadcast %167 : f32 to vector<16x128xf32>
    %755 = arith.addf %753, %754 : vector<16x128xf32>
    %756 = vector.broadcast %1 : f32 to vector<16x128xf32>
    %757 = arith.mulf %717, %756 : vector<16x128xf32>
    %758 = vector.broadcast %17 : f32 to vector<16x128xf32>
    %759 = arith.addf %757, %758 : vector<16x128xf32>
    %cst_29 = arith.constant 0.000000e+00 : f32
    %760 = vector.broadcast %cst_29 : f32 to vector<16x128xf32>
    %761 = arith.maximumf %759, %760 : vector<16x128xf32>
    %762 = vector.broadcast %40 : f32 to vector<16x128xf32>
    %763 = arith.mulf %761, %762 : vector<16x128xf32>
    %764 = arith.addf %727, %763 : vector<16x128xf32>
    %765 = vector.broadcast %41 : f32 to vector<16x128xf32>
    %766 = arith.mulf %761, %765 : vector<16x128xf32>
    %767 = arith.addf %731, %766 : vector<16x128xf32>
    %768 = vector.broadcast %42 : f32 to vector<16x128xf32>
    %769 = arith.mulf %761, %768 : vector<16x128xf32>
    %770 = arith.addf %735, %769 : vector<16x128xf32>
    %771 = vector.broadcast %43 : f32 to vector<16x128xf32>
    %772 = arith.mulf %761, %771 : vector<16x128xf32>
    %773 = arith.addf %739, %772 : vector<16x128xf32>
    %774 = vector.broadcast %44 : f32 to vector<16x128xf32>
    %775 = arith.mulf %761, %774 : vector<16x128xf32>
    %776 = arith.addf %743, %775 : vector<16x128xf32>
    %777 = vector.broadcast %45 : f32 to vector<16x128xf32>
    %778 = arith.mulf %761, %777 : vector<16x128xf32>
    %779 = arith.addf %747, %778 : vector<16x128xf32>
    %780 = vector.broadcast %46 : f32 to vector<16x128xf32>
    %781 = arith.mulf %761, %780 : vector<16x128xf32>
    %782 = arith.addf %751, %781 : vector<16x128xf32>
    %783 = vector.broadcast %47 : f32 to vector<16x128xf32>
    %784 = arith.mulf %761, %783 : vector<16x128xf32>
    %785 = arith.addf %755, %784 : vector<16x128xf32>
    %786 = vector.broadcast %2 : f32 to vector<16x128xf32>
    %787 = arith.mulf %717, %786 : vector<16x128xf32>
    %788 = vector.broadcast %18 : f32 to vector<16x128xf32>
    %789 = arith.addf %787, %788 : vector<16x128xf32>
    %cst_30 = arith.constant 0.000000e+00 : f32
    %790 = vector.broadcast %cst_30 : f32 to vector<16x128xf32>
    %791 = arith.maximumf %789, %790 : vector<16x128xf32>
    %792 = vector.broadcast %48 : f32 to vector<16x128xf32>
    %793 = arith.mulf %791, %792 : vector<16x128xf32>
    %794 = arith.addf %764, %793 : vector<16x128xf32>
    %795 = vector.broadcast %49 : f32 to vector<16x128xf32>
    %796 = arith.mulf %791, %795 : vector<16x128xf32>
    %797 = arith.addf %767, %796 : vector<16x128xf32>
    %798 = vector.broadcast %50 : f32 to vector<16x128xf32>
    %799 = arith.mulf %791, %798 : vector<16x128xf32>
    %800 = arith.addf %770, %799 : vector<16x128xf32>
    %801 = vector.broadcast %51 : f32 to vector<16x128xf32>
    %802 = arith.mulf %791, %801 : vector<16x128xf32>
    %803 = arith.addf %773, %802 : vector<16x128xf32>
    %804 = vector.broadcast %52 : f32 to vector<16x128xf32>
    %805 = arith.mulf %791, %804 : vector<16x128xf32>
    %806 = arith.addf %776, %805 : vector<16x128xf32>
    %807 = vector.broadcast %53 : f32 to vector<16x128xf32>
    %808 = arith.mulf %791, %807 : vector<16x128xf32>
    %809 = arith.addf %779, %808 : vector<16x128xf32>
    %810 = vector.broadcast %54 : f32 to vector<16x128xf32>
    %811 = arith.mulf %791, %810 : vector<16x128xf32>
    %812 = arith.addf %782, %811 : vector<16x128xf32>
    %813 = vector.broadcast %55 : f32 to vector<16x128xf32>
    %814 = arith.mulf %791, %813 : vector<16x128xf32>
    %815 = arith.addf %785, %814 : vector<16x128xf32>
    %816 = vector.broadcast %3 : f32 to vector<16x128xf32>
    %817 = arith.mulf %717, %816 : vector<16x128xf32>
    %818 = vector.broadcast %19 : f32 to vector<16x128xf32>
    %819 = arith.addf %817, %818 : vector<16x128xf32>
    %cst_31 = arith.constant 0.000000e+00 : f32
    %820 = vector.broadcast %cst_31 : f32 to vector<16x128xf32>
    %821 = arith.maximumf %819, %820 : vector<16x128xf32>
    %822 = vector.broadcast %56 : f32 to vector<16x128xf32>
    %823 = arith.mulf %821, %822 : vector<16x128xf32>
    %824 = arith.addf %794, %823 : vector<16x128xf32>
    %825 = vector.broadcast %57 : f32 to vector<16x128xf32>
    %826 = arith.mulf %821, %825 : vector<16x128xf32>
    %827 = arith.addf %797, %826 : vector<16x128xf32>
    %828 = vector.broadcast %58 : f32 to vector<16x128xf32>
    %829 = arith.mulf %821, %828 : vector<16x128xf32>
    %830 = arith.addf %800, %829 : vector<16x128xf32>
    %831 = vector.broadcast %59 : f32 to vector<16x128xf32>
    %832 = arith.mulf %821, %831 : vector<16x128xf32>
    %833 = arith.addf %803, %832 : vector<16x128xf32>
    %834 = vector.broadcast %60 : f32 to vector<16x128xf32>
    %835 = arith.mulf %821, %834 : vector<16x128xf32>
    %836 = arith.addf %806, %835 : vector<16x128xf32>
    %837 = vector.broadcast %61 : f32 to vector<16x128xf32>
    %838 = arith.mulf %821, %837 : vector<16x128xf32>
    %839 = arith.addf %809, %838 : vector<16x128xf32>
    %840 = vector.broadcast %62 : f32 to vector<16x128xf32>
    %841 = arith.mulf %821, %840 : vector<16x128xf32>
    %842 = arith.addf %812, %841 : vector<16x128xf32>
    %843 = vector.broadcast %63 : f32 to vector<16x128xf32>
    %844 = arith.mulf %821, %843 : vector<16x128xf32>
    %845 = arith.addf %815, %844 : vector<16x128xf32>
    %846 = vector.broadcast %4 : f32 to vector<16x128xf32>
    %847 = arith.mulf %717, %846 : vector<16x128xf32>
    %848 = vector.broadcast %20 : f32 to vector<16x128xf32>
    %849 = arith.addf %847, %848 : vector<16x128xf32>
    %cst_32 = arith.constant 0.000000e+00 : f32
    %850 = vector.broadcast %cst_32 : f32 to vector<16x128xf32>
    %851 = arith.maximumf %849, %850 : vector<16x128xf32>
    %852 = vector.broadcast %64 : f32 to vector<16x128xf32>
    %853 = arith.mulf %851, %852 : vector<16x128xf32>
    %854 = arith.addf %824, %853 : vector<16x128xf32>
    %855 = vector.broadcast %65 : f32 to vector<16x128xf32>
    %856 = arith.mulf %851, %855 : vector<16x128xf32>
    %857 = arith.addf %827, %856 : vector<16x128xf32>
    %858 = vector.broadcast %66 : f32 to vector<16x128xf32>
    %859 = arith.mulf %851, %858 : vector<16x128xf32>
    %860 = arith.addf %830, %859 : vector<16x128xf32>
    %861 = vector.broadcast %67 : f32 to vector<16x128xf32>
    %862 = arith.mulf %851, %861 : vector<16x128xf32>
    %863 = arith.addf %833, %862 : vector<16x128xf32>
    %864 = vector.broadcast %68 : f32 to vector<16x128xf32>
    %865 = arith.mulf %851, %864 : vector<16x128xf32>
    %866 = arith.addf %836, %865 : vector<16x128xf32>
    %867 = vector.broadcast %69 : f32 to vector<16x128xf32>
    %868 = arith.mulf %851, %867 : vector<16x128xf32>
    %869 = arith.addf %839, %868 : vector<16x128xf32>
    %870 = vector.broadcast %70 : f32 to vector<16x128xf32>
    %871 = arith.mulf %851, %870 : vector<16x128xf32>
    %872 = arith.addf %842, %871 : vector<16x128xf32>
    %873 = vector.broadcast %71 : f32 to vector<16x128xf32>
    %874 = arith.mulf %851, %873 : vector<16x128xf32>
    %875 = arith.addf %845, %874 : vector<16x128xf32>
    %876 = vector.broadcast %5 : f32 to vector<16x128xf32>
    %877 = arith.mulf %717, %876 : vector<16x128xf32>
    %878 = vector.broadcast %21 : f32 to vector<16x128xf32>
    %879 = arith.addf %877, %878 : vector<16x128xf32>
    %cst_33 = arith.constant 0.000000e+00 : f32
    %880 = vector.broadcast %cst_33 : f32 to vector<16x128xf32>
    %881 = arith.maximumf %879, %880 : vector<16x128xf32>
    %882 = vector.broadcast %72 : f32 to vector<16x128xf32>
    %883 = arith.mulf %881, %882 : vector<16x128xf32>
    %884 = arith.addf %854, %883 : vector<16x128xf32>
    %885 = vector.broadcast %73 : f32 to vector<16x128xf32>
    %886 = arith.mulf %881, %885 : vector<16x128xf32>
    %887 = arith.addf %857, %886 : vector<16x128xf32>
    %888 = vector.broadcast %74 : f32 to vector<16x128xf32>
    %889 = arith.mulf %881, %888 : vector<16x128xf32>
    %890 = arith.addf %860, %889 : vector<16x128xf32>
    %891 = vector.broadcast %75 : f32 to vector<16x128xf32>
    %892 = arith.mulf %881, %891 : vector<16x128xf32>
    %893 = arith.addf %863, %892 : vector<16x128xf32>
    %894 = vector.broadcast %76 : f32 to vector<16x128xf32>
    %895 = arith.mulf %881, %894 : vector<16x128xf32>
    %896 = arith.addf %866, %895 : vector<16x128xf32>
    %897 = vector.broadcast %77 : f32 to vector<16x128xf32>
    %898 = arith.mulf %881, %897 : vector<16x128xf32>
    %899 = arith.addf %869, %898 : vector<16x128xf32>
    %900 = vector.broadcast %78 : f32 to vector<16x128xf32>
    %901 = arith.mulf %881, %900 : vector<16x128xf32>
    %902 = arith.addf %872, %901 : vector<16x128xf32>
    %903 = vector.broadcast %79 : f32 to vector<16x128xf32>
    %904 = arith.mulf %881, %903 : vector<16x128xf32>
    %905 = arith.addf %875, %904 : vector<16x128xf32>
    %906 = vector.broadcast %6 : f32 to vector<16x128xf32>
    %907 = arith.mulf %717, %906 : vector<16x128xf32>
    %908 = vector.broadcast %22 : f32 to vector<16x128xf32>
    %909 = arith.addf %907, %908 : vector<16x128xf32>
    %cst_34 = arith.constant 0.000000e+00 : f32
    %910 = vector.broadcast %cst_34 : f32 to vector<16x128xf32>
    %911 = arith.maximumf %909, %910 : vector<16x128xf32>
    %912 = vector.broadcast %80 : f32 to vector<16x128xf32>
    %913 = arith.mulf %911, %912 : vector<16x128xf32>
    %914 = arith.addf %884, %913 : vector<16x128xf32>
    %915 = vector.broadcast %81 : f32 to vector<16x128xf32>
    %916 = arith.mulf %911, %915 : vector<16x128xf32>
    %917 = arith.addf %887, %916 : vector<16x128xf32>
    %918 = vector.broadcast %82 : f32 to vector<16x128xf32>
    %919 = arith.mulf %911, %918 : vector<16x128xf32>
    %920 = arith.addf %890, %919 : vector<16x128xf32>
    %921 = vector.broadcast %83 : f32 to vector<16x128xf32>
    %922 = arith.mulf %911, %921 : vector<16x128xf32>
    %923 = arith.addf %893, %922 : vector<16x128xf32>
    %924 = vector.broadcast %84 : f32 to vector<16x128xf32>
    %925 = arith.mulf %911, %924 : vector<16x128xf32>
    %926 = arith.addf %896, %925 : vector<16x128xf32>
    %927 = vector.broadcast %85 : f32 to vector<16x128xf32>
    %928 = arith.mulf %911, %927 : vector<16x128xf32>
    %929 = arith.addf %899, %928 : vector<16x128xf32>
    %930 = vector.broadcast %86 : f32 to vector<16x128xf32>
    %931 = arith.mulf %911, %930 : vector<16x128xf32>
    %932 = arith.addf %902, %931 : vector<16x128xf32>
    %933 = vector.broadcast %87 : f32 to vector<16x128xf32>
    %934 = arith.mulf %911, %933 : vector<16x128xf32>
    %935 = arith.addf %905, %934 : vector<16x128xf32>
    %936 = vector.broadcast %7 : f32 to vector<16x128xf32>
    %937 = arith.mulf %717, %936 : vector<16x128xf32>
    %938 = vector.broadcast %23 : f32 to vector<16x128xf32>
    %939 = arith.addf %937, %938 : vector<16x128xf32>
    %cst_35 = arith.constant 0.000000e+00 : f32
    %940 = vector.broadcast %cst_35 : f32 to vector<16x128xf32>
    %941 = arith.maximumf %939, %940 : vector<16x128xf32>
    %942 = vector.broadcast %88 : f32 to vector<16x128xf32>
    %943 = arith.mulf %941, %942 : vector<16x128xf32>
    %944 = arith.addf %914, %943 : vector<16x128xf32>
    %945 = vector.broadcast %89 : f32 to vector<16x128xf32>
    %946 = arith.mulf %941, %945 : vector<16x128xf32>
    %947 = arith.addf %917, %946 : vector<16x128xf32>
    %948 = vector.broadcast %90 : f32 to vector<16x128xf32>
    %949 = arith.mulf %941, %948 : vector<16x128xf32>
    %950 = arith.addf %920, %949 : vector<16x128xf32>
    %951 = vector.broadcast %91 : f32 to vector<16x128xf32>
    %952 = arith.mulf %941, %951 : vector<16x128xf32>
    %953 = arith.addf %923, %952 : vector<16x128xf32>
    %954 = vector.broadcast %92 : f32 to vector<16x128xf32>
    %955 = arith.mulf %941, %954 : vector<16x128xf32>
    %956 = arith.addf %926, %955 : vector<16x128xf32>
    %957 = vector.broadcast %93 : f32 to vector<16x128xf32>
    %958 = arith.mulf %941, %957 : vector<16x128xf32>
    %959 = arith.addf %929, %958 : vector<16x128xf32>
    %960 = vector.broadcast %94 : f32 to vector<16x128xf32>
    %961 = arith.mulf %941, %960 : vector<16x128xf32>
    %962 = arith.addf %932, %961 : vector<16x128xf32>
    %963 = vector.broadcast %95 : f32 to vector<16x128xf32>
    %964 = arith.mulf %941, %963 : vector<16x128xf32>
    %965 = arith.addf %935, %964 : vector<16x128xf32>
    %966 = vector.broadcast %8 : f32 to vector<16x128xf32>
    %967 = arith.mulf %717, %966 : vector<16x128xf32>
    %968 = vector.broadcast %24 : f32 to vector<16x128xf32>
    %969 = arith.addf %967, %968 : vector<16x128xf32>
    %cst_36 = arith.constant 0.000000e+00 : f32
    %970 = vector.broadcast %cst_36 : f32 to vector<16x128xf32>
    %971 = arith.maximumf %969, %970 : vector<16x128xf32>
    %972 = vector.broadcast %96 : f32 to vector<16x128xf32>
    %973 = arith.mulf %971, %972 : vector<16x128xf32>
    %974 = arith.addf %944, %973 : vector<16x128xf32>
    %975 = vector.broadcast %97 : f32 to vector<16x128xf32>
    %976 = arith.mulf %971, %975 : vector<16x128xf32>
    %977 = arith.addf %947, %976 : vector<16x128xf32>
    %978 = vector.broadcast %98 : f32 to vector<16x128xf32>
    %979 = arith.mulf %971, %978 : vector<16x128xf32>
    %980 = arith.addf %950, %979 : vector<16x128xf32>
    %981 = vector.broadcast %99 : f32 to vector<16x128xf32>
    %982 = arith.mulf %971, %981 : vector<16x128xf32>
    %983 = arith.addf %953, %982 : vector<16x128xf32>
    %984 = vector.broadcast %100 : f32 to vector<16x128xf32>
    %985 = arith.mulf %971, %984 : vector<16x128xf32>
    %986 = arith.addf %956, %985 : vector<16x128xf32>
    %987 = vector.broadcast %101 : f32 to vector<16x128xf32>
    %988 = arith.mulf %971, %987 : vector<16x128xf32>
    %989 = arith.addf %959, %988 : vector<16x128xf32>
    %990 = vector.broadcast %102 : f32 to vector<16x128xf32>
    %991 = arith.mulf %971, %990 : vector<16x128xf32>
    %992 = arith.addf %962, %991 : vector<16x128xf32>
    %993 = vector.broadcast %103 : f32 to vector<16x128xf32>
    %994 = arith.mulf %971, %993 : vector<16x128xf32>
    %995 = arith.addf %965, %994 : vector<16x128xf32>
    %996 = vector.broadcast %9 : f32 to vector<16x128xf32>
    %997 = arith.mulf %717, %996 : vector<16x128xf32>
    %998 = vector.broadcast %25 : f32 to vector<16x128xf32>
    %999 = arith.addf %997, %998 : vector<16x128xf32>
    %cst_37 = arith.constant 0.000000e+00 : f32
    %1000 = vector.broadcast %cst_37 : f32 to vector<16x128xf32>
    %1001 = arith.maximumf %999, %1000 : vector<16x128xf32>
    %1002 = vector.broadcast %104 : f32 to vector<16x128xf32>
    %1003 = arith.mulf %1001, %1002 : vector<16x128xf32>
    %1004 = arith.addf %974, %1003 : vector<16x128xf32>
    %1005 = vector.broadcast %105 : f32 to vector<16x128xf32>
    %1006 = arith.mulf %1001, %1005 : vector<16x128xf32>
    %1007 = arith.addf %977, %1006 : vector<16x128xf32>
    %1008 = vector.broadcast %106 : f32 to vector<16x128xf32>
    %1009 = arith.mulf %1001, %1008 : vector<16x128xf32>
    %1010 = arith.addf %980, %1009 : vector<16x128xf32>
    %1011 = vector.broadcast %107 : f32 to vector<16x128xf32>
    %1012 = arith.mulf %1001, %1011 : vector<16x128xf32>
    %1013 = arith.addf %983, %1012 : vector<16x128xf32>
    %1014 = vector.broadcast %108 : f32 to vector<16x128xf32>
    %1015 = arith.mulf %1001, %1014 : vector<16x128xf32>
    %1016 = arith.addf %986, %1015 : vector<16x128xf32>
    %1017 = vector.broadcast %109 : f32 to vector<16x128xf32>
    %1018 = arith.mulf %1001, %1017 : vector<16x128xf32>
    %1019 = arith.addf %989, %1018 : vector<16x128xf32>
    %1020 = vector.broadcast %110 : f32 to vector<16x128xf32>
    %1021 = arith.mulf %1001, %1020 : vector<16x128xf32>
    %1022 = arith.addf %992, %1021 : vector<16x128xf32>
    %1023 = vector.broadcast %111 : f32 to vector<16x128xf32>
    %1024 = arith.mulf %1001, %1023 : vector<16x128xf32>
    %1025 = arith.addf %995, %1024 : vector<16x128xf32>
    %1026 = vector.broadcast %10 : f32 to vector<16x128xf32>
    %1027 = arith.mulf %717, %1026 : vector<16x128xf32>
    %1028 = vector.broadcast %26 : f32 to vector<16x128xf32>
    %1029 = arith.addf %1027, %1028 : vector<16x128xf32>
    %cst_38 = arith.constant 0.000000e+00 : f32
    %1030 = vector.broadcast %cst_38 : f32 to vector<16x128xf32>
    %1031 = arith.maximumf %1029, %1030 : vector<16x128xf32>
    %1032 = vector.broadcast %112 : f32 to vector<16x128xf32>
    %1033 = arith.mulf %1031, %1032 : vector<16x128xf32>
    %1034 = arith.addf %1004, %1033 : vector<16x128xf32>
    %1035 = vector.broadcast %113 : f32 to vector<16x128xf32>
    %1036 = arith.mulf %1031, %1035 : vector<16x128xf32>
    %1037 = arith.addf %1007, %1036 : vector<16x128xf32>
    %1038 = vector.broadcast %114 : f32 to vector<16x128xf32>
    %1039 = arith.mulf %1031, %1038 : vector<16x128xf32>
    %1040 = arith.addf %1010, %1039 : vector<16x128xf32>
    %1041 = vector.broadcast %115 : f32 to vector<16x128xf32>
    %1042 = arith.mulf %1031, %1041 : vector<16x128xf32>
    %1043 = arith.addf %1013, %1042 : vector<16x128xf32>
    %1044 = vector.broadcast %116 : f32 to vector<16x128xf32>
    %1045 = arith.mulf %1031, %1044 : vector<16x128xf32>
    %1046 = arith.addf %1016, %1045 : vector<16x128xf32>
    %1047 = vector.broadcast %117 : f32 to vector<16x128xf32>
    %1048 = arith.mulf %1031, %1047 : vector<16x128xf32>
    %1049 = arith.addf %1019, %1048 : vector<16x128xf32>
    %1050 = vector.broadcast %118 : f32 to vector<16x128xf32>
    %1051 = arith.mulf %1031, %1050 : vector<16x128xf32>
    %1052 = arith.addf %1022, %1051 : vector<16x128xf32>
    %1053 = vector.broadcast %119 : f32 to vector<16x128xf32>
    %1054 = arith.mulf %1031, %1053 : vector<16x128xf32>
    %1055 = arith.addf %1025, %1054 : vector<16x128xf32>
    %1056 = vector.broadcast %11 : f32 to vector<16x128xf32>
    %1057 = arith.mulf %717, %1056 : vector<16x128xf32>
    %1058 = vector.broadcast %27 : f32 to vector<16x128xf32>
    %1059 = arith.addf %1057, %1058 : vector<16x128xf32>
    %cst_39 = arith.constant 0.000000e+00 : f32
    %1060 = vector.broadcast %cst_39 : f32 to vector<16x128xf32>
    %1061 = arith.maximumf %1059, %1060 : vector<16x128xf32>
    %1062 = vector.broadcast %120 : f32 to vector<16x128xf32>
    %1063 = arith.mulf %1061, %1062 : vector<16x128xf32>
    %1064 = arith.addf %1034, %1063 : vector<16x128xf32>
    %1065 = vector.broadcast %121 : f32 to vector<16x128xf32>
    %1066 = arith.mulf %1061, %1065 : vector<16x128xf32>
    %1067 = arith.addf %1037, %1066 : vector<16x128xf32>
    %1068 = vector.broadcast %122 : f32 to vector<16x128xf32>
    %1069 = arith.mulf %1061, %1068 : vector<16x128xf32>
    %1070 = arith.addf %1040, %1069 : vector<16x128xf32>
    %1071 = vector.broadcast %123 : f32 to vector<16x128xf32>
    %1072 = arith.mulf %1061, %1071 : vector<16x128xf32>
    %1073 = arith.addf %1043, %1072 : vector<16x128xf32>
    %1074 = vector.broadcast %124 : f32 to vector<16x128xf32>
    %1075 = arith.mulf %1061, %1074 : vector<16x128xf32>
    %1076 = arith.addf %1046, %1075 : vector<16x128xf32>
    %1077 = vector.broadcast %125 : f32 to vector<16x128xf32>
    %1078 = arith.mulf %1061, %1077 : vector<16x128xf32>
    %1079 = arith.addf %1049, %1078 : vector<16x128xf32>
    %1080 = vector.broadcast %126 : f32 to vector<16x128xf32>
    %1081 = arith.mulf %1061, %1080 : vector<16x128xf32>
    %1082 = arith.addf %1052, %1081 : vector<16x128xf32>
    %1083 = vector.broadcast %127 : f32 to vector<16x128xf32>
    %1084 = arith.mulf %1061, %1083 : vector<16x128xf32>
    %1085 = arith.addf %1055, %1084 : vector<16x128xf32>
    %1086 = vector.broadcast %12 : f32 to vector<16x128xf32>
    %1087 = arith.mulf %717, %1086 : vector<16x128xf32>
    %1088 = vector.broadcast %28 : f32 to vector<16x128xf32>
    %1089 = arith.addf %1087, %1088 : vector<16x128xf32>
    %cst_40 = arith.constant 0.000000e+00 : f32
    %1090 = vector.broadcast %cst_40 : f32 to vector<16x128xf32>
    %1091 = arith.maximumf %1089, %1090 : vector<16x128xf32>
    %1092 = vector.broadcast %128 : f32 to vector<16x128xf32>
    %1093 = arith.mulf %1091, %1092 : vector<16x128xf32>
    %1094 = arith.addf %1064, %1093 : vector<16x128xf32>
    %1095 = vector.broadcast %129 : f32 to vector<16x128xf32>
    %1096 = arith.mulf %1091, %1095 : vector<16x128xf32>
    %1097 = arith.addf %1067, %1096 : vector<16x128xf32>
    %1098 = vector.broadcast %130 : f32 to vector<16x128xf32>
    %1099 = arith.mulf %1091, %1098 : vector<16x128xf32>
    %1100 = arith.addf %1070, %1099 : vector<16x128xf32>
    %1101 = vector.broadcast %131 : f32 to vector<16x128xf32>
    %1102 = arith.mulf %1091, %1101 : vector<16x128xf32>
    %1103 = arith.addf %1073, %1102 : vector<16x128xf32>
    %1104 = vector.broadcast %132 : f32 to vector<16x128xf32>
    %1105 = arith.mulf %1091, %1104 : vector<16x128xf32>
    %1106 = arith.addf %1076, %1105 : vector<16x128xf32>
    %1107 = vector.broadcast %133 : f32 to vector<16x128xf32>
    %1108 = arith.mulf %1091, %1107 : vector<16x128xf32>
    %1109 = arith.addf %1079, %1108 : vector<16x128xf32>
    %1110 = vector.broadcast %134 : f32 to vector<16x128xf32>
    %1111 = arith.mulf %1091, %1110 : vector<16x128xf32>
    %1112 = arith.addf %1082, %1111 : vector<16x128xf32>
    %1113 = vector.broadcast %135 : f32 to vector<16x128xf32>
    %1114 = arith.mulf %1091, %1113 : vector<16x128xf32>
    %1115 = arith.addf %1085, %1114 : vector<16x128xf32>
    %1116 = vector.broadcast %13 : f32 to vector<16x128xf32>
    %1117 = arith.mulf %717, %1116 : vector<16x128xf32>
    %1118 = vector.broadcast %29 : f32 to vector<16x128xf32>
    %1119 = arith.addf %1117, %1118 : vector<16x128xf32>
    %cst_41 = arith.constant 0.000000e+00 : f32
    %1120 = vector.broadcast %cst_41 : f32 to vector<16x128xf32>
    %1121 = arith.maximumf %1119, %1120 : vector<16x128xf32>
    %1122 = vector.broadcast %136 : f32 to vector<16x128xf32>
    %1123 = arith.mulf %1121, %1122 : vector<16x128xf32>
    %1124 = arith.addf %1094, %1123 : vector<16x128xf32>
    %1125 = vector.broadcast %137 : f32 to vector<16x128xf32>
    %1126 = arith.mulf %1121, %1125 : vector<16x128xf32>
    %1127 = arith.addf %1097, %1126 : vector<16x128xf32>
    %1128 = vector.broadcast %138 : f32 to vector<16x128xf32>
    %1129 = arith.mulf %1121, %1128 : vector<16x128xf32>
    %1130 = arith.addf %1100, %1129 : vector<16x128xf32>
    %1131 = vector.broadcast %139 : f32 to vector<16x128xf32>
    %1132 = arith.mulf %1121, %1131 : vector<16x128xf32>
    %1133 = arith.addf %1103, %1132 : vector<16x128xf32>
    %1134 = vector.broadcast %140 : f32 to vector<16x128xf32>
    %1135 = arith.mulf %1121, %1134 : vector<16x128xf32>
    %1136 = arith.addf %1106, %1135 : vector<16x128xf32>
    %1137 = vector.broadcast %141 : f32 to vector<16x128xf32>
    %1138 = arith.mulf %1121, %1137 : vector<16x128xf32>
    %1139 = arith.addf %1109, %1138 : vector<16x128xf32>
    %1140 = vector.broadcast %142 : f32 to vector<16x128xf32>
    %1141 = arith.mulf %1121, %1140 : vector<16x128xf32>
    %1142 = arith.addf %1112, %1141 : vector<16x128xf32>
    %1143 = vector.broadcast %143 : f32 to vector<16x128xf32>
    %1144 = arith.mulf %1121, %1143 : vector<16x128xf32>
    %1145 = arith.addf %1115, %1144 : vector<16x128xf32>
    %1146 = vector.broadcast %14 : f32 to vector<16x128xf32>
    %1147 = arith.mulf %717, %1146 : vector<16x128xf32>
    %1148 = vector.broadcast %30 : f32 to vector<16x128xf32>
    %1149 = arith.addf %1147, %1148 : vector<16x128xf32>
    %cst_42 = arith.constant 0.000000e+00 : f32
    %1150 = vector.broadcast %cst_42 : f32 to vector<16x128xf32>
    %1151 = arith.maximumf %1149, %1150 : vector<16x128xf32>
    %1152 = vector.broadcast %144 : f32 to vector<16x128xf32>
    %1153 = arith.mulf %1151, %1152 : vector<16x128xf32>
    %1154 = arith.addf %1124, %1153 : vector<16x128xf32>
    %1155 = vector.broadcast %145 : f32 to vector<16x128xf32>
    %1156 = arith.mulf %1151, %1155 : vector<16x128xf32>
    %1157 = arith.addf %1127, %1156 : vector<16x128xf32>
    %1158 = vector.broadcast %146 : f32 to vector<16x128xf32>
    %1159 = arith.mulf %1151, %1158 : vector<16x128xf32>
    %1160 = arith.addf %1130, %1159 : vector<16x128xf32>
    %1161 = vector.broadcast %147 : f32 to vector<16x128xf32>
    %1162 = arith.mulf %1151, %1161 : vector<16x128xf32>
    %1163 = arith.addf %1133, %1162 : vector<16x128xf32>
    %1164 = vector.broadcast %148 : f32 to vector<16x128xf32>
    %1165 = arith.mulf %1151, %1164 : vector<16x128xf32>
    %1166 = arith.addf %1136, %1165 : vector<16x128xf32>
    %1167 = vector.broadcast %149 : f32 to vector<16x128xf32>
    %1168 = arith.mulf %1151, %1167 : vector<16x128xf32>
    %1169 = arith.addf %1139, %1168 : vector<16x128xf32>
    %1170 = vector.broadcast %150 : f32 to vector<16x128xf32>
    %1171 = arith.mulf %1151, %1170 : vector<16x128xf32>
    %1172 = arith.addf %1142, %1171 : vector<16x128xf32>
    %1173 = vector.broadcast %151 : f32 to vector<16x128xf32>
    %1174 = arith.mulf %1151, %1173 : vector<16x128xf32>
    %1175 = arith.addf %1145, %1174 : vector<16x128xf32>
    %1176 = vector.broadcast %15 : f32 to vector<16x128xf32>
    %1177 = arith.mulf %717, %1176 : vector<16x128xf32>
    %1178 = vector.broadcast %31 : f32 to vector<16x128xf32>
    %1179 = arith.addf %1177, %1178 : vector<16x128xf32>
    %cst_43 = arith.constant 0.000000e+00 : f32
    %1180 = vector.broadcast %cst_43 : f32 to vector<16x128xf32>
    %1181 = arith.maximumf %1179, %1180 : vector<16x128xf32>
    %1182 = vector.broadcast %152 : f32 to vector<16x128xf32>
    %1183 = arith.mulf %1181, %1182 : vector<16x128xf32>
    %1184 = arith.addf %1154, %1183 : vector<16x128xf32>
    %1185 = vector.broadcast %153 : f32 to vector<16x128xf32>
    %1186 = arith.mulf %1181, %1185 : vector<16x128xf32>
    %1187 = arith.addf %1157, %1186 : vector<16x128xf32>
    %1188 = vector.broadcast %154 : f32 to vector<16x128xf32>
    %1189 = arith.mulf %1181, %1188 : vector<16x128xf32>
    %1190 = arith.addf %1160, %1189 : vector<16x128xf32>
    %1191 = vector.broadcast %155 : f32 to vector<16x128xf32>
    %1192 = arith.mulf %1181, %1191 : vector<16x128xf32>
    %1193 = arith.addf %1163, %1192 : vector<16x128xf32>
    %1194 = vector.broadcast %156 : f32 to vector<16x128xf32>
    %1195 = arith.mulf %1181, %1194 : vector<16x128xf32>
    %1196 = arith.addf %1166, %1195 : vector<16x128xf32>
    %1197 = vector.broadcast %157 : f32 to vector<16x128xf32>
    %1198 = arith.mulf %1181, %1197 : vector<16x128xf32>
    %1199 = arith.addf %1169, %1198 : vector<16x128xf32>
    %1200 = vector.broadcast %158 : f32 to vector<16x128xf32>
    %1201 = arith.mulf %1181, %1200 : vector<16x128xf32>
    %1202 = arith.addf %1172, %1201 : vector<16x128xf32>
    %1203 = vector.broadcast %159 : f32 to vector<16x128xf32>
    %1204 = arith.mulf %1181, %1203 : vector<16x128xf32>
    %1205 = arith.addf %1175, %1204 : vector<16x128xf32>
    %cst_44 = arith.constant 0.000000e+00 : f32
    %1206 = vector.broadcast %cst_44 : f32 to vector<16x128xf32>
    %1207 = arith.maximumf %1184, %1206 : vector<16x128xf32>
    %1208 = vector.broadcast %168 : f32 to vector<16x128xf32>
    %1209 = arith.mulf %1207, %1208 : vector<16x128xf32>
    %1210 = vector.broadcast %176 : f32 to vector<16x128xf32>
    %1211 = arith.addf %1209, %1210 : vector<16x128xf32>
    %cst_45 = arith.constant 0.000000e+00 : f32
    %1212 = vector.broadcast %cst_45 : f32 to vector<16x128xf32>
    %1213 = arith.maximumf %1187, %1212 : vector<16x128xf32>
    %1214 = vector.broadcast %169 : f32 to vector<16x128xf32>
    %1215 = arith.mulf %1213, %1214 : vector<16x128xf32>
    %1216 = arith.addf %1211, %1215 : vector<16x128xf32>
    %cst_46 = arith.constant 0.000000e+00 : f32
    %1217 = vector.broadcast %cst_46 : f32 to vector<16x128xf32>
    %1218 = arith.maximumf %1190, %1217 : vector<16x128xf32>
    %1219 = vector.broadcast %170 : f32 to vector<16x128xf32>
    %1220 = arith.mulf %1218, %1219 : vector<16x128xf32>
    %1221 = arith.addf %1216, %1220 : vector<16x128xf32>
    %cst_47 = arith.constant 0.000000e+00 : f32
    %1222 = vector.broadcast %cst_47 : f32 to vector<16x128xf32>
    %1223 = arith.maximumf %1193, %1222 : vector<16x128xf32>
    %1224 = vector.broadcast %171 : f32 to vector<16x128xf32>
    %1225 = arith.mulf %1223, %1224 : vector<16x128xf32>
    %1226 = arith.addf %1221, %1225 : vector<16x128xf32>
    %cst_48 = arith.constant 0.000000e+00 : f32
    %1227 = vector.broadcast %cst_48 : f32 to vector<16x128xf32>
    %1228 = arith.maximumf %1196, %1227 : vector<16x128xf32>
    %1229 = vector.broadcast %172 : f32 to vector<16x128xf32>
    %1230 = arith.mulf %1228, %1229 : vector<16x128xf32>
    %1231 = arith.addf %1226, %1230 : vector<16x128xf32>
    %cst_49 = arith.constant 0.000000e+00 : f32
    %1232 = vector.broadcast %cst_49 : f32 to vector<16x128xf32>
    %1233 = arith.maximumf %1199, %1232 : vector<16x128xf32>
    %1234 = vector.broadcast %173 : f32 to vector<16x128xf32>
    %1235 = arith.mulf %1233, %1234 : vector<16x128xf32>
    %1236 = arith.addf %1231, %1235 : vector<16x128xf32>
    %cst_50 = arith.constant 0.000000e+00 : f32
    %1237 = vector.broadcast %cst_50 : f32 to vector<16x128xf32>
    %1238 = arith.maximumf %1202, %1237 : vector<16x128xf32>
    %1239 = vector.broadcast %174 : f32 to vector<16x128xf32>
    %1240 = arith.mulf %1238, %1239 : vector<16x128xf32>
    %1241 = arith.addf %1236, %1240 : vector<16x128xf32>
    %cst_51 = arith.constant 0.000000e+00 : f32
    %1242 = vector.broadcast %cst_51 : f32 to vector<16x128xf32>
    %1243 = arith.maximumf %1205, %1242 : vector<16x128xf32>
    %1244 = vector.broadcast %175 : f32 to vector<16x128xf32>
    %1245 = arith.mulf %1243, %1244 : vector<16x128xf32>
    %1246 = arith.addf %1241, %1245 : vector<16x128xf32>
    %cst_52 = arith.constant 0.000000e+00 : f32
    %1247 = vector.broadcast %cst_52 : f32 to vector<16x128xf32>
    %1248 = arith.maximumf %1246, %1247 : vector<16x128xf32>
    %1249 = arith.index_cast %715 : i32 to index
    %c0_53 = arith.constant 0 : index
    %1250 = vector.load %arg3[%1249, %c0_53] : memref<32x128xf32, #tpu.memory_space<vmem>>, vector<16x128xf32>
    tpu.vector_store %arg3[%1249, %c0_53], %1248 {strides = array<i32>} : memref<32x128xf32, #tpu.memory_space<vmem>>, vector<16x128xf32>,
    %c2_i32 = arith.constant 2 : i32
    return
  }
  func.func @transform_0(%arg0: i32) -> i32 {
    %c0_i32 = arith.constant 0 : i32
    %c0_i32_0 = arith.constant 0 : i32
    return %c0_i32 : i32
  }
  func.func @transform_1(%arg0: i32) -> (i32, i32) {
    %c0_i32 = arith.constant 0 : i32
    %c0_i32_0 = arith.constant 0 : i32
    return %arg0, %c0_i32 : i32, i32
  }
  func.func @transform_2(%arg0: i32) -> (i32, i32) {
    %c0_i32 = arith.constant 0 : i32
    %c0_i32_0 = arith.constant 0 : i32
    return %arg0, %c0_i32 : i32, i32
  }
}

</mosaic_0001>

<llo_original>
// kernel: densitynet_forward.1
$region0: #{densitynet_forward.1}
  #allocation0 [shape = 'u32[]', space=smem, size = 0x4, offset = 0x4, fixed_abs, tag = 'smem constant byte address 0x4 - core index']
  #allocation1 [shape = 'u32[144,128]{1,0:T(1,128)}', space=vmem, size = 0x12000, scoped, tag = 'internal scratch']
  %s0 = inlined_call_operand.vmem [shape: f32[256], index: 0, kind: input, shape index: {}]
  %s1 = inlined_call_operand.vmem [shape: f32[32,128], index: 1, kind: input, shape index: {}]
  %s2 = inlined_call_operand.vmem [shape: f32[32,128], index: 2, kind: output, shape index: {}]
  %s3 = sld [smem:[#allocation0]]
  $region22: #{densitynet_forward.1} parent=0
    _
  %s5 = ssub.s32 1, %s3
  %s6 = scalar_select 0, %s5, %s3
  $region1: #{densitynet_forward.1} parent=0
    #allocation2 [shape = 'u8[1024]{0}', space=smem, size = 0x400, scoped, tag = 'input window, operand 0, single buffered']
    #allocation3 [shape = 's32[1]{0}', space=sflag, size = 0x4, scoped, tag = 'scoped memory for densitynet_forward.1']
    %7 = vsyncpa [#allocation3], 0
    // Predicated region
    $region2: #{densitynet_forward.1} parent=1 // pred_check
      _
    $region3: #{densitynet_forward.1} parent=1 // pred_check_branch
      %9 = sbr.rel (0) target = $region5
    $region4: #{densitynet_forward.1} parent=1 // pred_region
      %s11 = ssub.s32 32, 32
      %12 = vsyncadd [#allocation3], %s11
      %s14 = sshll.u32 %s0, 4
      %s15 = int_to_ptr.vmem [resolvable:$true] %s14
      %17 = dma.vmem_to_smem %s15, 32, [#allocation2], [#allocation3]
    $region5: #{densitynet_forward.1} parent=1 // pred_fallthru
      _
    // Predicated region
    $region6: #{densitynet_forward.1} parent=1 // pred_check
      _
    $region7: #{densitynet_forward.1} parent=1 // pred_check_branch
      %19 = sbr.rel (0) target = $region9
    $region8: #{densitynet_forward.1} parent=1 // pred_region
      _
    $region9: #{densitynet_forward.1} parent=1 // pred_fallthru
      _
    // Predicated region
    $region10: #{densitynet_forward.1} parent=1 // pred_check
      _
    $region11: #{densitynet_forward.1} parent=1 // pred_check_branch
      %21 = sbr.rel (0) target = $region13
    $region12: #{densitynet_forward.1} parent=1 // pred_region
      %22 = dma.done [#allocation3], 32
    $region13: #{densitynet_forward.1} parent=1 // pred_fallthru
      _
    %23 = sfence
    %s24 = sld [smem:[#allocation2]]
    %s25 = sld [smem:[#allocation2 + $0x1]]
    %s26 = sld [smem:[#allocation2 + $0x2]]
    %s27 = sld [smem:[#allocation2 + $0x3]]
    %s28 = sld [smem:[#allocation2 + $0x4]]
    %s29 = sld [smem:[#allocation2 + $0x5]]
    %s30 = sld [smem:[#allocation2 + $0x6]]
    %s31 = sld [smem:[#allocation2 + $0x7]]
    %s32 = sld [smem:[#allocation2 + $0x8]]
    %s33 = sld [smem:[#allocation2 + $0x9]]
    %s34 = sld [smem:[#allocation2 + $0xa]]
    %s35 = sld [smem:[#allocation2 + $0xb]]
    %s36 = sld [smem:[#allocation2 + $0xc]]
    %s37 = sld [smem:[#allocation2 + $0xd]]
    %s38 = sld [smem:[#allocation2 + $0xe]]
    %s39 = sld [smem:[#allocation2 + $0xf]]
    %s40 = sld [smem:[#allocation2 + $0x10]]
    %s41 = sld [smem:[#allocation2 + $0x11]]
    %s42 = sld [smem:[#allocation2 + $0x12]]
    %s43 = sld [smem:[#allocation2 + $0x13]]
    %s44 = sld [smem:[#allocation2 + $0x14]]
    %s45 = sld [smem:[#allocation2 + $0x15]]
    %s46 = sld [smem:[#allocation2 + $0x16]]
    %s47 = sld [smem:[#allocation2 + $0x17]]
    %s48 = sld [smem:[#allocation2 + $0x18]]
    %s49 = sld [smem:[#allocation2 + $0x19]]
    %s50 = sld [smem:[#allocation2 + $0x1a]]
    %s51 = sld [smem:[#allocation2 + $0x1b]]
    %s52 = sld [smem:[#allocation2 + $0x1c]]
    %s53 = sld [smem:[#allocation2 + $0x1d]]
    %s54 = sld [smem:[#allocation2 + $0x1e]]
    %s55 = sld [smem:[#allocation2 + $0x1f]]
    %s56 = sld [smem:[#allocation2 + $0x20]]
    %s57 = sld [smem:[#allocation2 + $0x21]]
    %s58 = sld [smem:[#allocation2 + $0x22]]
    %s59 = sld [smem:[#allocation2 + $0x23]]
    %s60 = sld [smem:[#allocation2 + $0x24]]
    %s61 = sld [smem:[#allocation2 + $0x25]]
    %s62 = sld [smem:[#allocation2 + $0x26]]
    %s63 = sld [smem:[#allocation2 + $0x27]]
    %s64 = sld [smem:[#allocation2 + $0x28]]
    %s65 = sld [smem:[#allocation2 + $0x29]]
    %s66 = sld [smem:[#allocation2 + $0x2a]]
    %s67 = sld [smem:[#allocation2 + $0x2b]]
    %s68 = sld [smem:[#allocation2 + $0x2c]]
    %s69 = sld [smem:[#allocation2 + $0x2d]]
    %s70 = sld [smem:[#allocation2 + $0x2e]]
    %s71 = sld [smem:[#allocation2 + $0x2f]]
    %s72 = sld [smem:[#allocation2 + $0x30]]
    %s73 = sld [smem:[#allocation2 + $0x31]]
    %s74 = sld [smem:[#allocation2 + $0x32]]
    %s75 = sld [smem:[#allocation2 + $0x33]]
    %s76 = sld [smem:[#allocation2 + $0x34]]
    %s77 = sld [smem:[#allocation2 + $0x35]]
    %s78 = sld [smem:[#allocation2 + $0x36]]
    %s79 = sld [smem:[#allocation2 + $0x37]]
    %s80 = sld [smem:[#allocation2 + $0x38]]
    %s81 = sld [smem:[#allocation2 + $0x39]]
    %s82 = sld [smem:[#allocation2 + $0x3a]]
    %s83 = sld [smem:[#allocation2 + $0x3b]]
    %s84 = sld [smem:[#allocation2 + $0x3c]]
    %s85 = sld [smem:[#allocation2 + $0x3d]]
    %s86 = sld [smem:[#allocation2 + $0x3e]]
    %s87 = sld [smem:[#allocation2 + $0x3f]]
    %s88 = sld [smem:[#allocation2 + $0x40]]
    %s89 = sld [smem:[#allocation2 + $0x41]]
    %s90 = sld [smem:[#allocation2 + $0x42]]
    %s91 = sld [smem:[#allocation2 + $0x43]]
    %s92 = sld [smem:[#allocation2 + $0x44]]
    %s93 = sld [smem:[#allocation2 + $0x45]]
    %s94 = sld [smem:[#allocation2 + $0x46]]
    %s95 = sld [smem:[#allocation2 + $0x47]]
    %s96 = sld [smem:[#allocation2 + $0x48]]
    %s97 = sld [smem:[#allocation2 + $0x49]]
    %s98 = sld [smem:[#allocation2 + $0x4a]]
    %s99 = sld [smem:[#allocation2 + $0x4b]]
    %s100 = sld [smem:[#allocation2 + $0x4c]]
    %s101 = sld [smem:[#allocation2 + $0x4d]]
    %s102 = sld [smem:[#allocation2 + $0x4e]]
    %s103 = sld [smem:[#allocation2 + $0x4f]]
    %s104 = sld [smem:[#allocation2 + $0x50]]
    %s105 = sld [smem:[#allocation2 + $0x51]]
    %s106 = sld [smem:[#allocation2 + $0x52]]
    %s107 = sld [smem:[#allocation2 + $0x53]]
    %s108 = sld [smem:[#allocation2 + $0x54]]
    %s109 = sld [smem:[#allocation2 + $0x55]]
    %s110 = sld [smem:[#allocation2 + $0x56]]
    %s111 = sld [smem:[#allocation2 + $0x57]]
    %s112 = sld [smem:[#allocation2 + $0x58]]
    %s113 = sld [smem:[#allocation2 + $0x59]]
    %s114 = sld [smem:[#allocation2 + $0x5a]]
    %s115 = sld [smem:[#allocation2 + $0x5b]]
    %s116 = sld [smem:[#allocation2 + $0x5c]]
    %s117 = sld [smem:[#allocation2 + $0x5d]]
    %s118 = sld [smem:[#allocation2 + $0x5e]]
    %s119 = sld [smem:[#allocation2 + $0x5f]]
    %s120 = sld [smem:[#allocation2 + $0x60]]
    %s121 = sld [smem:[#allocation2 + $0x61]]
    %s122 = sld [smem:[#allocation2 + $0x62]]
    %s123 = sld [smem:[#allocation2 + $0x63]]
    %s124 = sld [smem:[#allocation2 + $0x64]]
    %s125 = sld [smem:[#allocation2 + $0x65]]
    %s126 = sld [smem:[#allocation2 + $0x66]]
    %s127 = sld [smem:[#allocation2 + $0x67]]
    %s128 = sld [smem:[#allocation2 + $0x68]]
    %s129 = sld [smem:[#allocation2 + $0x69]]
    %s130 = sld [smem:[#allocation2 + $0x6a]]
    %s131 = sld [smem:[#allocation2 + $0x6b]]
    %s132 = sld [smem:[#allocation2 + $0x6c]]
    %s133 = sld [smem:[#allocation2 + $0x6d]]
    %s134 = sld [smem:[#allocation2 + $0x6e]]
    %s135 = sld [smem:[#allocation2 + $0x6f]]
    %s136 = sld [smem:[#allocation2 + $0x70]]
    %s137 = sld [smem:[#allocation2 + $0x71]]
    %s138 = sld [smem:[#allocation2 + $0x72]]
    %s139 = sld [smem:[#allocation2 + $0x73]]
    %s140 = sld [smem:[#allocation2 + $0x74]]
    %s141 = sld [smem:[#allocation2 + $0x75]]
    %s142 = sld [smem:[#allocation2 + $0x76]]
    %s143 = sld [smem:[#allocation2 + $0x77]]
    %s144 = sld [smem:[#allocation2 + $0x78]]
    %s145 = sld [smem:[#allocation2 + $0x79]]
    %s146 = sld [smem:[#allocation2 + $0x7a]]
    %s147 = sld [smem:[#allocation2 + $0x7b]]
    %s148 = sld [smem:[#allocation2 + $0x7c]]
    %s149 = sld [smem:[#allocation2 + $0x7d]]
    %s150 = sld [smem:[#allocation2 + $0x7e]]
    %s151 = sld [smem:[#allocation2 + $0x7f]]
    %s152 = sld [smem:[#allocation2 + $0x80]]
    %s153 = sld [smem:[#allocation2 + $0x81]]
    %s154 = sld [smem:[#allocation2 + $0x82]]
    %s155 = sld [smem:[#allocation2 + $0x83]]
    %s156 = sld [smem:[#allocation2 + $0x84]]
    %s157 = sld [smem:[#allocation2 + $0x85]]
    %s158 = sld [smem:[#allocation2 + $0x86]]
    %s159 = sld [smem:[#allocation2 + $0x87]]
    %s160 = sld [smem:[#allocation2 + $0x88]]
    %s161 = sld [smem:[#allocation2 + $0x89]]
    %s162 = sld [smem:[#allocation2 + $0x8a]]
    %s163 = sld [smem:[#allocation2 + $0x8b]]
    %s164 = sld [smem:[#allocation2 + $0x8c]]
    %s165 = sld [smem:[#allocation2 + $0x8d]]
    %s166 = sld [smem:[#allocation2 + $0x8e]]
    %s167 = sld [smem:[#allocation2 + $0x8f]]
    %s168 = sld [smem:[#allocation2 + $0x90]]
    %s169 = sld [smem:[#allocation2 + $0x91]]
    %s170 = sld [smem:[#allocation2 + $0x92]]
    %s171 = sld [smem:[#allocation2 + $0x93]]
    %s172 = sld [smem:[#allocation2 + $0x94]]
    %s173 = sld [smem:[#allocation2 + $0x95]]
    %s174 = sld [smem:[#allocation2 + $0x96]]
    %s175 = sld [smem:[#allocation2 + $0x97]]
    %s176 = sld [smem:[#allocation2 + $0x98]]
    %s177 = sld [smem:[#allocation2 + $0x99]]
    %s178 = sld [smem:[#allocation2 + $0x9a]]
    %s179 = sld [smem:[#allocation2 + $0x9b]]
    %s180 = sld [smem:[#allocation2 + $0x9c]]
    %s181 = sld [smem:[#allocation2 + $0x9d]]
    %s182 = sld [smem:[#allocation2 + $0x9e]]
    %s183 = sld [smem:[#allocation2 + $0x9f]]
    %s184 = sld [smem:[#allocation2 + $0xa0]]
    %s185 = sld [smem:[#allocation2 + $0xa1]]
    %s186 = sld [smem:[#allocation2 + $0xa2]]
    %s187 = sld [smem:[#allocation2 + $0xa3]]
    %s188 = sld [smem:[#allocation2 + $0xa4]]
    %s189 = sld [smem:[#allocation2 + $0xa5]]
    %s190 = sld [smem:[#allocation2 + $0xa6]]
    %s191 = sld [smem:[#allocation2 + $0xa7]]
    %s192 = sld [smem:[#allocation2 + $0xa8]]
    %s193 = sld [smem:[#allocation2 + $0xa9]]
    %s194 = sld [smem:[#allocation2 + $0xaa]]
    %s195 = sld [smem:[#allocation2 + $0xab]]
    %s196 = sld [smem:[#allocation2 + $0xac]]
    %s197 = sld [smem:[#allocation2 + $0xad]]
    %s198 = sld [smem:[#allocation2 + $0xae]]
    %s199 = sld [smem:[#allocation2 + $0xaf]]
    %s200 = sld [smem:[#allocation2 + $0xb0]]
    %v201 = vld [vmem:[%s1] sm:$0xff]
    %v202 = vld [vmem:[%s1 + $0x8] sm:$0xff]
    %v203 = vstv %s24
    %v204 = vmul.f32 %v201, %v203
    %v205 = vmul.f32 %v202, %v203
    %v206 = vstv %s40
    %v207 = vadd.f32 %v204, %v206
    %v208 = vadd.f32 %v205, %v206
    %v209 = vmax.f32 %v207, 0.0
    %v210 = vmax.f32 %v208, 0.0
    %v211 = vstv %s56
    %v212 = vmul.f32 %v209, %v211
    %v213 = vmul.f32 %v210, %v211
    %v214 = vstv %s184
    %v215 = vadd.f32 %v212, %v214
    %v216 = vadd.f32 %v213, %v214
    %v217 = vstv %s57
    %v218 = vmul.f32 %v209, %v217
    %v219 = vmul.f32 %v210, %v217
    %v220 = vstv %s185
    %v221 = vadd.f32 %v218, %v220
    %v222 = vadd.f32 %v219, %v220
    %v223 = vstv %s58
    %v224 = vmul.f32 %v209, %v223
    %v225 = vmul.f32 %v210, %v223
    %v226 = vstv %s186
    %v227 = vadd.f32 %v224, %v226
    %v228 = vadd.f32 %v225, %v226
    %v229 = vstv %s59
    %v230 = vmul.f32 %v209, %v229
    %v231 = vmul.f32 %v210, %v229
    %v232 = vstv %s187
    %v233 = vadd.f32 %v230, %v232
    %v234 = vadd.f32 %v231, %v232
    %v235 = vstv %s60
    %v236 = vmul.f32 %v209, %v235
    %v237 = vmul.f32 %v210, %v235
    %v238 = vstv %s188
    %v239 = vadd.f32 %v236, %v238
    %v240 = vadd.f32 %v237, %v238
    %v241 = vstv %s61
    %v242 = vmul.f32 %v209, %v241
    %v243 = vmul.f32 %v210, %v241
    %v244 = vstv %s189
    %v245 = vadd.f32 %v242, %v244
    %v246 = vadd.f32 %v243, %v244
    %v247 = vstv %s62
    %v248 = vmul.f32 %v209, %v247
    %v249 = vmul.f32 %v210, %v247
    %v250 = vstv %s190
    %v251 = vadd.f32 %v248, %v250
    %v252 = vadd.f32 %v249, %v250
    %v253 = vstv %s63
    %v254 = vmul.f32 %v209, %v253
    %v255 = vmul.f32 %v210, %v253
    %v256 = vstv %s191
    %v257 = vadd.f32 %v254, %v256
    %v258 = vadd.f32 %v255, %v256
    %v259 = vstv %s25
    %v260 = vmul.f32 %v201, %v259
    %v261 = vmul.f32 %v202, %v259
    %v262 = vstv %s41
    %v263 = vadd.f32 %v260, %v262
    %v264 = vadd.f32 %v261, %v262
    %v265 = vmax.f32 %v263, 0.0
    %v266 = vmax.f32 %v264, 0.0
    %v267 = vstv %s64
    %v268 = vmul.f32 %v265, %v267
    %v269 = vmul.f32 %v266, %v267
    %v270 = vadd.f32 %v215, %v268
    %v271 = vadd.f32 %v216, %v269
    %v272 = vstv %s65
    %v273 = vmul.f32 %v265, %v272
    %v274 = vmul.f32 %v266, %v272
    %v275 = vadd.f32 %v221, %v273
    %v276 = vadd.f32 %v222, %v274
    %v277 = vstv %s66
    %v278 = vmul.f32 %v265, %v277
    %v279 = vmul.f32 %v266, %v277
    %v280 = vadd.f32 %v227, %v278
    %v281 = vadd.f32 %v228, %v279
    %v282 = vstv %s67
    %v283 = vmul.f32 %v265, %v282
    %v284 = vmul.f32 %v266, %v282
    %v285 = vadd.f32 %v233, %v283
    %v286 = vadd.f32 %v234, %v284
    %v287 = vstv %s68
    %v288 = vmul.f32 %v265, %v287
    %v289 = vmul.f32 %v266, %v287
    %v290 = vadd.f32 %v239, %v288
    %v291 = vadd.f32 %v240, %v289
    %v292 = vstv %s69
    %v293 = vmul.f32 %v265, %v292
    %v294 = vmul.f32 %v266, %v292
    %v295 = vadd.f32 %v245, %v293
    %v296 = vadd.f32 %v246, %v294
    %v297 = vstv %s70
    %v298 = vmul.f32 %v265, %v297
    %v299 = vmul.f32 %v266, %v297
    %v300 = vadd.f32 %v251, %v298
    %v301 = vadd.f32 %v252, %v299
    %v302 = vstv %s71
    %v303 = vmul.f32 %v265, %v302
    %v304 = vmul.f32 %v266, %v302
    %v305 = vadd.f32 %v257, %v303
    %v306 = vadd.f32 %v258, %v304
    %v307 = vstv %s26
    %v308 = vmul.f32 %v201, %v307
    %v309 = vmul.f32 %v202, %v307
    %v310 = vstv %s42
    %v311 = vadd.f32 %v308, %v310
    %v312 = vadd.f32 %v309, %v310
    %v313 = vmax.f32 %v311, 0.0
    %v314 = vmax.f32 %v312, 0.0
    %v315 = vstv %s72
    %v316 = vmul.f32 %v313, %v315
    %v317 = vmul.f32 %v314, %v315
    %v318 = vadd.f32 %v270, %v316
    %v319 = vadd.f32 %v271, %v317
    %v320 = vstv %s73
    %v321 = vmul.f32 %v313, %v320
    %v322 = vmul.f32 %v314, %v320
    %v323 = vadd.f32 %v275, %v321
    %v324 = vadd.f32 %v276, %v322
    %v325 = vstv %s74
    %v326 = vmul.f32 %v313, %v325
    %v327 = vmul.f32 %v314, %v325
    %v328 = vadd.f32 %v280, %v326
    %v329 = vadd.f32 %v281, %v327
    %v330 = vstv %s75
    %v331 = vmul.f32 %v313, %v330
    %v332 = vmul.f32 %v314, %v330
    %v333 = vadd.f32 %v285, %v331
    %v334 = vadd.f32 %v286, %v332
    %v335 = vstv %s76
    %v336 = vmul.f32 %v313, %v335
    %v337 = vmul.f32 %v314, %v335
    %v338 = vadd.f32 %v290, %v336
    %v339 = vadd.f32 %v291, %v337
    %v340 = vstv %s77
    %v341 = vmul.f32 %v313, %v340
    %v342 = vmul.f32 %v314, %v340
    %v343 = vadd.f32 %v295, %v341
    %v344 = vadd.f32 %v296, %v342
    %v345 = vstv %s78
    %v346 = vmul.f32 %v313, %v345
    %v347 = vmul.f32 %v314, %v345
    %v348 = vadd.f32 %v300, %v346
    %v349 = vadd.f32 %v301, %v347
    %v350 = vstv %s79
    %v351 = vmul.f32 %v313, %v350
    %v352 = vmul.f32 %v314, %v350
    %v353 = vadd.f32 %v305, %v351
    %v354 = vadd.f32 %v306, %v352
    %v355 = vstv %s27
    %v356 = vmul.f32 %v201, %v355
    %v357 = vmul.f32 %v202, %v355
    %v358 = vstv %s43
    %v359 = vadd.f32 %v356, %v358
    %v360 = vadd.f32 %v357, %v358
    %v361 = vmax.f32 %v359, 0.0
    %v362 = vmax.f32 %v360, 0.0
    %v363 = vstv %s80
    %v364 = vmul.f32 %v361, %v363
    %v365 = vmul.f32 %v362, %v363
    %v366 = vadd.f32 %v318, %v364
    %v367 = vadd.f32 %v319, %v365
    %v368 = vstv %s81
    %v369 = vmul.f32 %v361, %v368
    %v370 = vmul.f32 %v362, %v368
    %v371 = vadd.f32 %v323, %v369
    %v372 = vadd.f32 %v324, %v370
    %v373 = vstv %s82
    %v374 = vmul.f32 %v361, %v373
    %v375 = vmul.f32 %v362, %v373
    %v376 = vadd.f32 %v328, %v374
    %v377 = vadd.f32 %v329, %v375
    %v378 = vstv %s83
    %v379 = vmul.f32 %v361, %v378
    %v380 = vmul.f32 %v362, %v378
    %v381 = vadd.f32 %v333, %v379
    %v382 = vadd.f32 %v334, %v380
    %v383 = vstv %s84
    %v384 = vmul.f32 %v361, %v383
    %v385 = vmul.f32 %v362, %v383
    %v386 = vadd.f32 %v338, %v384
    %v387 = vadd.f32 %v339, %v385
    %v388 = vstv %s85
    %v389 = vmul.f32 %v361, %v388
    %v390 = vmul.f32 %v362, %v388
    %v391 = vadd.f32 %v343, %v389
    %v392 = vadd.f32 %v344, %v390
    %v393 = vstv %s86
    %v394 = vmul.f32 %v361, %v393
    %v395 = vmul.f32 %v362, %v393
    %v396 = vadd.f32 %v348, %v394
    %v397 = vadd.f32 %v349, %v395
    %v398 = vstv %s87
    %v399 = vmul.f32 %v361, %v398
    %v400 = vmul.f32 %v362, %v398
    %v401 = vadd.f32 %v353, %v399
    %v402 = vadd.f32 %v354, %v400
    %v403 = vstv %s28
    %v404 = vmul.f32 %v201, %v403
    %v405 = vmul.f32 %v202, %v403
    %v406 = vstv %s44
    %v407 = vadd.f32 %v404, %v406
    %v408 = vadd.f32 %v405, %v406
    %v409 = vmax.f32 %v407, 0.0
    %v410 = vmax.f32 %v408, 0.0
    %v411 = vstv %s88
    %v412 = vmul.f32 %v409, %v411
    %v413 = vmul.f32 %v410, %v411
    %v414 = vadd.f32 %v366, %v412
    %v415 = vadd.f32 %v367, %v413
    %v416 = vstv %s89
    %v417 = vmul.f32 %v409, %v416
    %v418 = vmul.f32 %v410, %v416
    %v419 = vadd.f32 %v371, %v417
    %v420 = vadd.f32 %v372, %v418
    %v421 = vstv %s90
    %v422 = vmul.f32 %v409, %v421
    %v423 = vmul.f32 %v410, %v421
    %v424 = vadd.f32 %v376, %v422
    %v425 = vadd.f32 %v377, %v423
    %v426 = vstv %s91
    %v427 = vmul.f32 %v409, %v426
    %v428 = vmul.f32 %v410, %v426
    %v429 = vadd.f32 %v381, %v427
    %v430 = vadd.f32 %v382, %v428
    %v431 = vstv %s92
    %v432 = vmul.f32 %v409, %v431
    %v433 = vmul.f32 %v410, %v431
    %v434 = vadd.f32 %v386, %v432
    %v435 = vadd.f32 %v387, %v433
    %v436 = vstv %s93
    %v437 = vmul.f32 %v409, %v436
    %v438 = vmul.f32 %v410, %v436
    %v439 = vadd.f32 %v391, %v437
    %v440 = vadd.f32 %v392, %v438
    %v441 = vstv %s94
    %v442 = vmul.f32 %v409, %v441
    %v443 = vmul.f32 %v410, %v441
    %v444 = vadd.f32 %v396, %v442
    %v445 = vadd.f32 %v397, %v443
    %v446 = vstv %s95
    %v447 = vmul.f32 %v409, %v446
    %v448 = vmul.f32 %v410, %v446
    %v449 = vadd.f32 %v401, %v447
    %v450 = vadd.f32 %v402, %v448
    %v451 = vstv %s29
    %v452 = vmul.f32 %v201, %v451
    %v453 = vmul.f32 %v202, %v451
    %v454 = vstv %s45
    %v455 = vadd.f32 %v452, %v454
    %v456 = vadd.f32 %v453, %v454
    %v457 = vmax.f32 %v455, 0.0
    %v458 = vmax.f32 %v456, 0.0
    %v459 = vstv %s96
    %v460 = vmul.f32 %v457, %v459
    %v461 = vmul.f32 %v458, %v459
    %v462 = vadd.f32 %v414, %v460
    %v463 = vadd.f32 %v415, %v461
    %v464 = vstv %s97
    %v465 = vmul.f32 %v457, %v464
    %v466 = vmul.f32 %v458, %v464
    %v467 = vadd.f32 %v419, %v465
    %v468 = vadd.f32 %v420, %v466
    %v469 = vstv %s98
    %v470 = vmul.f32 %v457, %v469
    %v471 = vmul.f32 %v458, %v469
    %v472 = vadd.f32 %v424, %v470
    %v473 = vadd.f32 %v425, %v471
    %v474 = vstv %s99
    %v475 = vmul.f32 %v457, %v474
    %v476 = vmul.f32 %v458, %v474
    %v477 = vadd.f32 %v429, %v475
    %v478 = vadd.f32 %v430, %v476
    %v479 = vstv %s100
    %v480 = vmul.f32 %v457, %v479
    %v481 = vmul.f32 %v458, %v479
    %v482 = vadd.f32 %v434, %v480
    %v483 = vadd.f32 %v435, %v481
    %v484 = vstv %s101
    %v485 = vmul.f32 %v457, %v484
    %v486 = vmul.f32 %v458, %v484
    %v487 = vadd.f32 %v439, %v485
    %v488 = vadd.f32 %v440, %v486
    %v489 = vstv %s102
    %v490 = vmul.f32 %v457, %v489
    %v491 = vmul.f32 %v458, %v489
    %v492 = vadd.f32 %v444, %v490
    %v493 = vadd.f32 %v445, %v491
    %v494 = vstv %s103
    %v495 = vmul.f32 %v457, %v494
    %v496 = vmul.f32 %v458, %v494
    %v497 = vadd.f32 %v449, %v495
    %v498 = vadd.f32 %v450, %v496
    %v499 = vstv %s30
    %v500 = vmul.f32 %v201, %v499
    %v501 = vmul.f32 %v202, %v499
    %v502 = vstv %s46
    %v503 = vadd.f32 %v500, %v502
    %v504 = vadd.f32 %v501, %v502
    %v505 = vmax.f32 %v503, 0.0
    %v506 = vmax.f32 %v504, 0.0
    %v507 = vstv %s104
    %v508 = vmul.f32 %v505, %v507
    %v509 = vmul.f32 %v506, %v507
    %v510 = vadd.f32 %v462, %v508
    %v511 = vadd.f32 %v463, %v509
    %v512 = vstv %s105
    %v513 = vmul.f32 %v505, %v512
    %v514 = vmul.f32 %v506, %v512
    %v515 = vadd.f32 %v467, %v513
    %v516 = vadd.f32 %v468, %v514
    %v517 = vstv %s106
    %v518 = vmul.f32 %v505, %v517
    %v519 = vmul.f32 %v506, %v517
    %v520 = vadd.f32 %v472, %v518
    %v521 = vadd.f32 %v473, %v519
    %v522 = vstv %s107
    %v523 = vmul.f32 %v505, %v522
    %v524 = vmul.f32 %v506, %v522
    %v525 = vadd.f32 %v477, %v523
    %v526 = vadd.f32 %v478, %v524
    %v527 = vstv %s108
    %v528 = vmul.f32 %v505, %v527
    %v529 = vmul.f32 %v506, %v527
    %v530 = vadd.f32 %v482, %v528
    %v531 = vadd.f32 %v483, %v529
    %v532 = vstv %s109
    %v533 = vmul.f32 %v505, %v532
    %v534 = vmul.f32 %v506, %v532
    %v535 = vadd.f32 %v487, %v533
    %v536 = vadd.f32 %v488, %v534
    %v537 = vstv %s110
    %v538 = vmul.f32 %v505, %v537
    %v539 = vmul.f32 %v506, %v537
    %v540 = vadd.f32 %v492, %v538
    %v541 = vadd.f32 %v493, %v539
    %v542 = vstv %s111
    %v543 = vmul.f32 %v505, %v542
    %v544 = vmul.f32 %v506, %v542
    %v545 = vadd.f32 %v497, %v543
    %v546 = vadd.f32 %v498, %v544
    %v547 = vstv %s31
    %v548 = vmul.f32 %v201, %v547
    %v549 = vmul.f32 %v202, %v547
    %v550 = vstv %s47
    %v551 = vadd.f32 %v548, %v550
    %v552 = vadd.f32 %v549, %v550
    %v553 = vmax.f32 %v551, 0.0
    %v554 = vmax.f32 %v552, 0.0
    %v555 = vstv %s112
    %v556 = vmul.f32 %v553, %v555
    %v557 = vmul.f32 %v554, %v555
    %v558 = vadd.f32 %v510, %v556
    %v559 = vadd.f32 %v511, %v557
    %v560 = vstv %s113
    %v561 = vmul.f32 %v553, %v560
    %v562 = vmul.f32 %v554, %v560
    %v563 = vadd.f32 %v515, %v561
    %v564 = vadd.f32 %v516, %v562
    %v565 = vstv %s114
    %v566 = vmul.f32 %v553, %v565
    %v567 = vmul.f32 %v554, %v565
    %v568 = vadd.f32 %v520, %v566
    %v569 = vadd.f32 %v521, %v567
    %v570 = vstv %s115
    %v571 = vmul.f32 %v553, %v570
    %v572 = vmul.f32 %v554, %v570
    %v573 = vadd.f32 %v525, %v571
    %v574 = vadd.f32 %v526, %v572
    %v575 = vstv %s116
    %v576 = vmul.f32 %v553, %v575
    %v577 = vmul.f32 %v554, %v575
    %v578 = vadd.f32 %v530, %v576
    %v579 = vadd.f32 %v531, %v577
    %v580 = vstv %s117
    %v581 = vmul.f32 %v553, %v580
    %v582 = vmul.f32 %v554, %v580
    %v583 = vadd.f32 %v535, %v581
    %v584 = vadd.f32 %v536, %v582
    %v585 = vstv %s118
    %v586 = vmul.f32 %v553, %v585
    %v587 = vmul.f32 %v554, %v585
    %v588 = vadd.f32 %v540, %v586
    %v589 = vadd.f32 %v541, %v587
    %v590 = vstv %s119
    %v591 = vmul.f32 %v553, %v590
    %v592 = vmul.f32 %v554, %v590
    %v593 = vadd.f32 %v545, %v591
    %v594 = vadd.f32 %v546, %v592
    %v595 = vstv %s32
    %v596 = vmul.f32 %v201, %v595
    %v597 = vmul.f32 %v202, %v595
    %v598 = vstv %s48
    %v599 = vadd.f32 %v596, %v598
    %v600 = vadd.f32 %v597, %v598
    %v601 = vmax.f32 %v599, 0.0
    %v602 = vmax.f32 %v600, 0.0
    %v603 = vstv %s120
    %v604 = vmul.f32 %v601, %v603
    %v605 = vmul.f32 %v602, %v603
    %v606 = vadd.f32 %v558, %v604
    %v607 = vadd.f32 %v559, %v605
    %v608 = vstv %s121
    %v609 = vmul.f32 %v601, %v608
    %v610 = vmul.f32 %v602, %v608
    %v611 = vadd.f32 %v563, %v609
    %v612 = vadd.f32 %v564, %v610
    %v613 = vstv %s122
    %v614 = vmul.f32 %v601, %v613
    %v615 = vmul.f32 %v602, %v613
    %v616 = vadd.f32 %v568, %v614
    %v617 = vadd.f32 %v569, %v615
    %v618 = vstv %s123
    %v619 = vmul.f32 %v601, %v618
    %v620 = vmul.f32 %v602, %v618
    %v621 = vadd.f32 %v573, %v619
    %v622 = vadd.f32 %v574, %v620
    %v623 = vstv %s124
    %v624 = vmul.f32 %v601, %v623
    %v625 = vmul.f32 %v602, %v623
    %v626 = vadd.f32 %v578, %v624
    %v627 = vadd.f32 %v579, %v625
    %v628 = vstv %s125
    %v629 = vmul.f32 %v601, %v628
    %v630 = vmul.f32 %v602, %v628
    %v631 = vadd.f32 %v583, %v629
    %v632 = vadd.f32 %v584, %v630
    %v633 = vstv %s126
    %v634 = vmul.f32 %v601, %v633
    %v635 = vmul.f32 %v602, %v633
    %v636 = vadd.f32 %v588, %v634
    %v637 = vadd.f32 %v589, %v635
    %v638 = vstv %s127
    %v639 = vmul.f32 %v601, %v638
    %v640 = vmul.f32 %v602, %v638
    %v641 = vadd.f32 %v593, %v639
    %v642 = vadd.f32 %v594, %v640
    %v643 = vstv %s33
    %v644 = vmul.f32 %v201, %v643
    %v645 = vmul.f32 %v202, %v643
    %v646 = vstv %s49
    %v647 = vadd.f32 %v644, %v646
    %v648 = vadd.f32 %v645, %v646
    %v649 = vmax.f32 %v647, 0.0
    %v650 = vmax.f32 %v648, 0.0
    %v651 = vstv %s128
    %v652 = vmul.f32 %v649, %v651
    %v653 = vmul.f32 %v650, %v651
    %v654 = vadd.f32 %v606, %v652
    %v655 = vadd.f32 %v607, %v653
    %v656 = vstv %s129
    %v657 = vmul.f32 %v649, %v656
    %v658 = vmul.f32 %v650, %v656
    %v659 = vadd.f32 %v611, %v657
    %v660 = vadd.f32 %v612, %v658
    %v661 = vstv %s130
    %v662 = vmul.f32 %v649, %v661
    %v663 = vmul.f32 %v650, %v661
    %v664 = vadd.f32 %v616, %v662
    %v665 = vadd.f32 %v617, %v663
    %v666 = vstv %s131
    %v667 = vmul.f32 %v649, %v666
    %v668 = vmul.f32 %v650, %v666
    %v669 = vadd.f32 %v621, %v667
    %v670 = vadd.f32 %v622, %v668
    %v671 = vstv %s132
    %v672 = vmul.f32 %v649, %v671
    %v673 = vmul.f32 %v650, %v671
    %v674 = vadd.f32 %v626, %v672
    %v675 = vadd.f32 %v627, %v673
    %v676 = vstv %s133
    %v677 = vmul.f32 %v649, %v676
    %v678 = vmul.f32 %v650, %v676
    %v679 = vadd.f32 %v631, %v677
    %v680 = vadd.f32 %v632, %v678
    %v681 = vstv %s134
    %v682 = vmul.f32 %v649, %v681
    %v683 = vmul.f32 %v650, %v681
    %v684 = vadd.f32 %v636, %v682
    %v685 = vadd.f32 %v637, %v683
    %v686 = vstv %s135
    %v687 = vmul.f32 %v649, %v686
    %v688 = vmul.f32 %v650, %v686
    %v689 = vadd.f32 %v641, %v687
    %v690 = vadd.f32 %v642, %v688
    %v691 = vstv %s34
    %v692 = vmul.f32 %v201, %v691
    %v693 = vmul.f32 %v202, %v691
    %v694 = vstv %s50
    %v695 = vadd.f32 %v692, %v694
    %v696 = vadd.f32 %v693, %v694
    %v697 = vmax.f32 %v695, 0.0
    %v698 = vmax.f32 %v696, 0.0
    %v699 = vstv %s136
    %v700 = vmul.f32 %v697, %v699
    %v701 = vmul.f32 %v698, %v699
    %v702 = vadd.f32 %v654, %v700
    %v703 = vadd.f32 %v655, %v701
    %v704 = vstv %s137
    %v705 = vmul.f32 %v697, %v704
    %v706 = vmul.f32 %v698, %v704
    %v707 = vadd.f32 %v659, %v705
    %v708 = vadd.f32 %v660, %v706
    %v709 = vstv %s138
    %v710 = vmul.f32 %v697, %v709
    %v711 = vmul.f32 %v698, %v709
    %v712 = vadd.f32 %v664, %v710
    %v713 = vadd.f32 %v665, %v711
    %v714 = vstv %s139
    %v715 = vmul.f32 %v697, %v714
    %v716 = vmul.f32 %v698, %v714
    %v717 = vadd.f32 %v669, %v715
    %v718 = vadd.f32 %v670, %v716
    %v719 = vstv %s140
    %v720 = vmul.f32 %v697, %v719
    %v721 = vmul.f32 %v698, %v719
    %v722 = vadd.f32 %v674, %v720
    %v723 = vadd.f32 %v675, %v721
    %v724 = vstv %s141
    %v725 = vmul.f32 %v697, %v724
    %v726 = vmul.f32 %v698, %v724
    %v727 = vadd.f32 %v679, %v725
    %v728 = vadd.f32 %v680, %v726
    %v729 = vstv %s142
    %v730 = vmul.f32 %v697, %v729
    %v731 = vmul.f32 %v698, %v729
    %v732 = vadd.f32 %v684, %v730
    %v733 = vadd.f32 %v685, %v731
    %v734 = vstv %s143
    %v735 = vmul.f32 %v697, %v734
    %v736 = vmul.f32 %v698, %v734
    %v737 = vadd.f32 %v689, %v735
    %v738 = vadd.f32 %v690, %v736
    %v739 = vstv %s35
    %v740 = vmul.f32 %v201, %v739
    %v741 = vmul.f32 %v202, %v739
    %v742 = vstv %s51
    %v743 = vadd.f32 %v740, %v742
    %v744 = vadd.f32 %v741, %v742
    %v745 = vmax.f32 %v743, 0.0
    %v746 = vmax.f32 %v744, 0.0
    %v747 = vstv %s144
    %v748 = vmul.f32 %v745, %v747
    %v749 = vmul.f32 %v746, %v747
    %v750 = vadd.f32 %v702, %v748
    %v751 = vadd.f32 %v703, %v749
    %v752 = vstv %s145
    %v753 = vmul.f32 %v745, %v752
    %v754 = vmul.f32 %v746, %v752
    %v755 = vadd.f32 %v707, %v753
    %v756 = vadd.f32 %v708, %v754
    %v757 = vstv %s146
    %v758 = vmul.f32 %v745, %v757
    %v759 = vmul.f32 %v746, %v757
    %v760 = vadd.f32 %v712, %v758
    %v761 = vadd.f32 %v713, %v759
    %v762 = vstv %s147
    %v763 = vmul.f32 %v745, %v762
    %v764 = vmul.f32 %v746, %v762
    %v765 = vadd.f32 %v717, %v763
    %v766 = vadd.f32 %v718, %v764
    %v767 = vstv %s148
    %v768 = vmul.f32 %v745, %v767
    %v769 = vmul.f32 %v746, %v767
    %v770 = vadd.f32 %v722, %v768
    %v771 = vadd.f32 %v723, %v769
    %v772 = vstv %s149
    %v773 = vmul.f32 %v745, %v772
    %v774 = vmul.f32 %v746, %v772
    %v775 = vadd.f32 %v727, %v773
    %v776 = vadd.f32 %v728, %v774
    %v777 = vstv %s150
    %v778 = vmul.f32 %v745, %v777
    %v779 = vmul.f32 %v746, %v777
    %v780 = vadd.f32 %v732, %v778
    %v781 = vadd.f32 %v733, %v779
    %v782 = vstv %s151
    %v783 = vmul.f32 %v745, %v782
    %v784 = vmul.f32 %v746, %v782
    %v785 = vadd.f32 %v737, %v783
    %v786 = vadd.f32 %v738, %v784
    %v787 = vstv %s36
    %v788 = vmul.f32 %v201, %v787
    %v789 = vmul.f32 %v202, %v787
    %v790 = vstv %s52
    %v791 = vadd.f32 %v788, %v790
    %v792 = vadd.f32 %v789, %v790
    %v793 = vmax.f32 %v791, 0.0
    %v794 = vmax.f32 %v792, 0.0
    %v795 = vstv %s152
    %v796 = vmul.f32 %v793, %v795
    %v797 = vmul.f32 %v794, %v795
    %v798 = vadd.f32 %v750, %v796
    %v799 = vadd.f32 %v751, %v797
    %v800 = vstv %s153
    %v801 = vmul.f32 %v793, %v800
    %v802 = vmul.f32 %v794, %v800
    %v803 = vadd.f32 %v755, %v801
    %v804 = vadd.f32 %v756, %v802
    %v805 = vstv %s154
    %v806 = vmul.f32 %v793, %v805
    %v807 = vmul.f32 %v794, %v805
    %v808 = vadd.f32 %v760, %v806
    %v809 = vadd.f32 %v761, %v807
    %v810 = vstv %s155
    %v811 = vmul.f32 %v793, %v810
    %v812 = vmul.f32 %v794, %v810
    %v813 = vadd.f32 %v765, %v811
    %v814 = vadd.f32 %v766, %v812
    %v815 = vstv %s156
    %v816 = vmul.f32 %v793, %v815
    %v817 = vmul.f32 %v794, %v815
    %v818 = vadd.f32 %v770, %v816
    %v819 = vadd.f32 %v771, %v817
    %v820 = vstv %s157
    %v821 = vmul.f32 %v793, %v820
    %v822 = vmul.f32 %v794, %v820
    %v823 = vadd.f32 %v775, %v821
    %v824 = vadd.f32 %v776, %v822
    %v825 = vstv %s158
    %v826 = vmul.f32 %v793, %v825
    %v827 = vmul.f32 %v794, %v825
    %v828 = vadd.f32 %v780, %v826
    %v829 = vadd.f32 %v781, %v827
    %v830 = vstv %s159
    %v831 = vmul.f32 %v793, %v830
    %v832 = vmul.f32 %v794, %v830
    %v833 = vadd.f32 %v785, %v831
    %v834 = vadd.f32 %v786, %v832
    %v835 = vstv %s37
    %v836 = vmul.f32 %v201, %v835
    %v837 = vmul.f32 %v202, %v835
    %v838 = vstv %s53
    %v839 = vadd.f32 %v836, %v838
    %v840 = vadd.f32 %v837, %v838
    %v841 = vmax.f32 %v839, 0.0
    %v842 = vmax.f32 %v840, 0.0
    %v843 = vstv %s160
    %v844 = vmul.f32 %v841, %v843
    %v845 = vmul.f32 %v842, %v843
    %v846 = vadd.f32 %v798, %v844
    %v847 = vadd.f32 %v799, %v845
    %v848 = vstv %s161
    %v849 = vmul.f32 %v841, %v848
    %v850 = vmul.f32 %v842, %v848
    %v851 = vadd.f32 %v803, %v849
    %v852 = vadd.f32 %v804, %v850
    %v853 = vstv %s162
    %v854 = vmul.f32 %v841, %v853
    %v855 = vmul.f32 %v842, %v853
    %v856 = vadd.f32 %v808, %v854
    %v857 = vadd.f32 %v809, %v855
    %v858 = vstv %s163
    %v859 = vmul.f32 %v841, %v858
    %v860 = vmul.f32 %v842, %v858
    %v861 = vadd.f32 %v813, %v859
    %v862 = vadd.f32 %v814, %v860
    %v863 = vstv %s164
    %v864 = vmul.f32 %v841, %v863
    %v865 = vmul.f32 %v842, %v863
    %v866 = vadd.f32 %v818, %v864
    %v867 = vadd.f32 %v819, %v865
    %v868 = vstv %s165
    %v869 = vmul.f32 %v841, %v868
    %v870 = vmul.f32 %v842, %v868
    %v871 = vadd.f32 %v823, %v869
    %v872 = vadd.f32 %v824, %v870
    %v873 = vstv %s166
    %v874 = vmul.f32 %v841, %v873
    %v875 = vmul.f32 %v842, %v873
    %v876 = vadd.f32 %v828, %v874
    %v877 = vadd.f32 %v829, %v875
    %v878 = vstv %s167
    %v879 = vmul.f32 %v841, %v878
    %v880 = vmul.f32 %v842, %v878
    %v881 = vadd.f32 %v833, %v879
    %v882 = vadd.f32 %v834, %v880
    %v883 = vstv %s38
    %v884 = vmul.f32 %v201, %v883
    %v885 = vmul.f32 %v202, %v883
    %v886 = vstv %s54
    %v887 = vadd.f32 %v884, %v886
    %v888 = vadd.f32 %v885, %v886
    %v889 = vmax.f32 %v887, 0.0
    %v890 = vmax.f32 %v888, 0.0
    %v891 = vstv %s168
    %v892 = vmul.f32 %v889, %v891
    %v893 = vmul.f32 %v890, %v891
    %v894 = vadd.f32 %v846, %v892
    %v895 = vadd.f32 %v847, %v893
    %v896 = vstv %s169
    %v897 = vmul.f32 %v889, %v896
    %v898 = vmul.f32 %v890, %v896
    %v899 = vadd.f32 %v851, %v897
    %v900 = vadd.f32 %v852, %v898
    %v901 = vstv %s170
    %v902 = vmul.f32 %v889, %v901
    %v903 = vmul.f32 %v890, %v901
    %v904 = vadd.f32 %v856, %v902
    %v905 = vadd.f32 %v857, %v903
    %v906 = vstv %s171
    %v907 = vmul.f32 %v889, %v906
    %v908 = vmul.f32 %v890, %v906
    %v909 = vadd.f32 %v861, %v907
    %v910 = vadd.f32 %v862, %v908
    %v911 = vstv %s172
    %v912 = vmul.f32 %v889, %v911
    %v913 = vmul.f32 %v890, %v911
    %v914 = vadd.f32 %v866, %v912
    %v915 = vadd.f32 %v867, %v913
    %v916 = vstv %s173
    %v917 = vmul.f32 %v889, %v916
    %v918 = vmul.f32 %v890, %v916
    %v919 = vadd.f32 %v871, %v917
    %v920 = vadd.f32 %v872, %v918
    %v921 = vstv %s174
    %v922 = vmul.f32 %v889, %v921
    %v923 = vmul.f32 %v890, %v921
    %v924 = vadd.f32 %v876, %v922
    %v925 = vadd.f32 %v877, %v923
    %v926 = vstv %s175
    %v927 = vmul.f32 %v889, %v926
    %v928 = vmul.f32 %v890, %v926
    %v929 = vadd.f32 %v881, %v927
    %v930 = vadd.f32 %v882, %v928
    %v931 = vstv %s39
    %v932 = vmul.f32 %v201, %v931
    %v933 = vmul.f32 %v202, %v931
    %v934 = vstv %s55
    %v935 = vadd.f32 %v932, %v934
    %v936 = vadd.f32 %v933, %v934
    %v937 = vmax.f32 %v935, 0.0
    %v938 = vmax.f32 %v936, 0.0
    %v939 = vstv %s176
    %v940 = vmul.f32 %v937, %v939
    %v941 = vmul.f32 %v938, %v939
    %v942 = vadd.f32 %v894, %v940
    %v943 = vadd.f32 %v895, %v941
    %v944 = vstv %s177
    %v945 = vmul.f32 %v937, %v944
    %v946 = vmul.f32 %v938, %v944
    %v947 = vadd.f32 %v899, %v945
    %v948 = vadd.f32 %v900, %v946
    %v949 = vstv %s178
    %v950 = vmul.f32 %v937, %v949
    %v951 = vmul.f32 %v938, %v949
    %v952 = vadd.f32 %v904, %v950
    %v953 = vadd.f32 %v905, %v951
    %v954 = vstv %s179
    %v955 = vmul.f32 %v937, %v954
    %v956 = vmul.f32 %v938, %v954
    %v957 = vadd.f32 %v909, %v955
    %v958 = vadd.f32 %v910, %v956
    %v959 = vstv %s180
    %v960 = vmul.f32 %v937, %v959
    %v961 = vmul.f32 %v938, %v959
    %v962 = vadd.f32 %v914, %v960
    %v963 = vadd.f32 %v915, %v961
    %v964 = vstv %s181
    %v965 = vmul.f32 %v937, %v964
    %v966 = vmul.f32 %v938, %v964
    %v967 = vadd.f32 %v919, %v965
    %v968 = vadd.f32 %v920, %v966
    %v969 = vstv %s182
    %v970 = vmul.f32 %v937, %v969
    %v971 = vmul.f32 %v938, %v969
    %v972 = vadd.f32 %v924, %v970
    %v973 = vadd.f32 %v925, %v971
    %v974 = vstv %s183
    %v975 = vmul.f32 %v937, %v974
    %v976 = vmul.f32 %v938, %v974
    %v977 = vadd.f32 %v929, %v975
    %v978 = vadd.f32 %v930, %v976
    %v979 = vmax.f32 %v942, 0.0
    %v980 = vmax.f32 %v943, 0.0
    %v981 = vstv %s192
    %v982 = vmul.f32 %v979, %v981
    %v983 = vmul.f32 %v980, %v981
    %v984 = vstv %s200
    %v985 = vadd.f32 %v982, %v984
    %v986 = vadd.f32 %v983, %v984
    %v987 = vmax.f32 %v947, 0.0
    %v988 = vmax.f32 %v948, 0.0
    %v989 = vstv %s193
    %v990 = vmul.f32 %v987, %v989
    %v991 = vmul.f32 %v988, %v989
    %v992 = vadd.f32 %v985, %v990
    %v993 = vadd.f32 %v986, %v991
    %v994 = vmax.f32 %v952, 0.0
    %v995 = vmax.f32 %v953, 0.0
    %v996 = vstv %s194
    %v997 = vmul.f32 %v994, %v996
    %v998 = vmul.f32 %v995, %v996
    %v999 = vadd.f32 %v992, %v997
    %v1000 = vadd.f32 %v993, %v998
    %v1001 = vmax.f32 %v957, 0.0
    %v1002 = vmax.f32 %v958, 0.0
    %v1003 = vstv %s195
    %v1004 = vmul.f32 %v1001, %v1003
    %v1005 = vmul.f32 %v1002, %v1003
    %v1006 = vadd.f32 %v999, %v1004
    %v1007 = vadd.f32 %v1000, %v1005
    %v1008 = vmax.f32 %v962, 0.0
    %v1009 = vmax.f32 %v963, 0.0
    %v1010 = vstv %s196
    %v1011 = vmul.f32 %v1008, %v1010
    %v1012 = vmul.f32 %v1009, %v1010
    %v1013 = vadd.f32 %v1006, %v1011
    %v1014 = vadd.f32 %v1007, %v1012
    %v1015 = vmax.f32 %v967, 0.0
    %v1016 = vmax.f32 %v968, 0.0
    %v1017 = vstv %s197
    %v1018 = vmul.f32 %v1015, %v1017
    %v1019 = vmul.f32 %v1016, %v1017
    %v1020 = vadd.f32 %v1013, %v1018
    %v1021 = vadd.f32 %v1014, %v1019
    %v1022 = vmax.f32 %v972, 0.0
    %v1023 = vmax.f32 %v973, 0.0
    %v1024 = vstv %s198
    %v1025 = vmul.f32 %v1022, %v1024
    %v1026 = vmul.f32 %v1023, %v1024
    %v1027 = vadd.f32 %v1020, %v1025
    %v1028 = vadd.f32 %v1021, %v1026
    %v1029 = vmax.f32 %v977, 0.0
    %v1030 = vmax.f32 %v978, 0.0
    %v1031 = vstv %s199
    %v1032 = vmul.f32 %v1029, %v1031
    %v1033 = vmul.f32 %v1030, %v1031
    %v1034 = vadd.f32 %v1027, %v1032
    %v1035 = vadd.f32 %v1028, %v1033
    %v1036 = vmax.f32 %v1034, 0.0
    %v1037 = vmax.f32 %v1035, 0.0
    %1038 = vst [vmem:[%s2] sm:$0xff] %v1036
    %1039 = vst [vmem:[%s2 + $0x8] sm:$0xff] %v1037
    %s1040 = scalar_lea.vmem %s1, 16
    %v1041 = vld [vmem:[%s1040] sm:$0xff]
    %v1042 = vld [vmem:[%s1040 + $0x8] sm:$0xff]
    %v1043 = vmul.f32 %v1041, %v203
    %v1044 = vmul.f32 %v1042, %v203
    %v1045 = vadd.f32 %v1043, %v206
    %v1046 = vadd.f32 %v1044, %v206
    %v1047 = vmax.f32 %v1045, 0.0
    %v1048 = vmax.f32 %v1046, 0.0
    %v1049 = vmul.f32 %v1047, %v211
    %v1050 = vmul.f32 %v1048, %v211
    %v1051 = vadd.f32 %v1049, %v214
    %v1052 = vadd.f32 %v1050, %v214
    %v1053 = vmul.f32 %v1047, %v217
    %v1054 = vmul.f32 %v1048, %v217
    %v1055 = vadd.f32 %v1053, %v220
    %v1056 = vadd.f32 %v1054, %v220
    %v1057 = vmul.f32 %v1047, %v223
    %v1058 = vmul.f32 %v1048, %v223
    %v1059 = vadd.f32 %v1057, %v226
    %v1060 = vadd.f32 %v1058, %v226
    %v1061 = vmul.f32 %v1047, %v229
    %v1062 = vmul.f32 %v1048, %v229
    %v1063 = vadd.f32 %v1061, %v232
    %v1064 = vadd.f32 %v1062, %v232
    %v1065 = vmul.f32 %v1047, %v235
    %v1066 = vmul.f32 %v1048, %v235
    %v1067 = vadd.f32 %v1065, %v238
    %v1068 = vadd.f32 %v1066, %v238
    %v1069 = vmul.f32 %v1047, %v241
    %v1070 = vmul.f32 %v1048, %v241
    %v1071 = vadd.f32 %v1069, %v244
    %v1072 = vadd.f32 %v1070, %v244
    %v1073 = vmul.f32 %v1047, %v247
    %v1074 = vmul.f32 %v1048, %v247
    %v1075 = vadd.f32 %v1073, %v250
    %v1076 = vadd.f32 %v1074, %v250
    %v1077 = vmul.f32 %v1047, %v253
    %v1078 = vmul.f32 %v1048, %v253
    %v1079 = vadd.f32 %v1077, %v256
    %v1080 = vadd.f32 %v1078, %v256
    %v1081 = vmul.f32 %v1041, %v259
    %v1082 = vmul.f32 %v1042, %v259
    %v1083 = vadd.f32 %v1081, %v262
    %v1084 = vadd.f32 %v1082, %v262
    %v1085 = vmax.f32 %v1083, 0.0
    %v1086 = vmax.f32 %v1084, 0.0
    %v1087 = vmul.f32 %v1085, %v267
    %v1088 = vmul.f32 %v1086, %v267
    %v1089 = vadd.f32 %v1051, %v1087
    %v1090 = vadd.f32 %v1052, %v1088
    %v1091 = vmul.f32 %v1085, %v272
    %v1092 = vmul.f32 %v1086, %v272
    %v1093 = vadd.f32 %v1055, %v1091
    %v1094 = vadd.f32 %v1056, %v1092
    %v1095 = vmul.f32 %v1085, %v277
    %v1096 = vmul.f32 %v1086, %v277
    %v1097 = vadd.f32 %v1059, %v1095
    %v1098 = vadd.f32 %v1060, %v1096
    %v1099 = vmul.f32 %v1085, %v282
    %v1100 = vmul.f32 %v1086, %v282
    %v1101 = vadd.f32 %v1063, %v1099
    %v1102 = vadd.f32 %v1064, %v1100
    %v1103 = vmul.f32 %v1085, %v287
    %v1104 = vmul.f32 %v1086, %v287
    %v1105 = vadd.f32 %v1067, %v1103
    %v1106 = vadd.f32 %v1068, %v1104
    %v1107 = vmul.f32 %v1085, %v292
    %v1108 = vmul.f32 %v1086, %v292
    %v1109 = vadd.f32 %v1071, %v1107
    %v1110 = vadd.f32 %v1072, %v1108
    %v1111 = vmul.f32 %v1085, %v297
    %v1112 = vmul.f32 %v1086, %v297
    %v1113 = vadd.f32 %v1075, %v1111
    %v1114 = vadd.f32 %v1076, %v1112
    %v1115 = vmul.f32 %v1085, %v302
    %v1116 = vmul.f32 %v1086, %v302
    %v1117 = vadd.f32 %v1079, %v1115
    %v1118 = vadd.f32 %v1080, %v1116
    %v1119 = vmul.f32 %v1041, %v307
    %v1120 = vmul.f32 %v1042, %v307
    %v1121 = vadd.f32 %v1119, %v310
    %v1122 = vadd.f32 %v1120, %v310
    %v1123 = vmax.f32 %v1121, 0.0
    %v1124 = vmax.f32 %v1122, 0.0
    %v1125 = vmul.f32 %v1123, %v315
    %v1126 = vmul.f32 %v1124, %v315
    %v1127 = vadd.f32 %v1089, %v1125
    %v1128 = vadd.f32 %v1090, %v1126
    %v1129 = vmul.f32 %v1123, %v320
    %v1130 = vmul.f32 %v1124, %v320
    %v1131 = vadd.f32 %v1093, %v1129
    %v1132 = vadd.f32 %v1094, %v1130
    %v1133 = vmul.f32 %v1123, %v325
    %v1134 = vmul.f32 %v1124, %v325
    %v1135 = vadd.f32 %v1097, %v1133
    %v1136 = vadd.f32 %v1098, %v1134
    %v1137 = vmul.f32 %v1123, %v330
    %v1138 = vmul.f32 %v1124, %v330
    %v1139 = vadd.f32 %v1101, %v1137
    %v1140 = vadd.f32 %v1102, %v1138
    %v1141 = vmul.f32 %v1123, %v335
    %v1142 = vmul.f32 %v1124, %v335
    %v1143 = vadd.f32 %v1105, %v1141
    %v1144 = vadd.f32 %v1106, %v1142
    %v1145 = vmul.f32 %v1123, %v340
    %v1146 = vmul.f32 %v1124, %v340
    %v1147 = vadd.f32 %v1109, %v1145
    %v1148 = vadd.f32 %v1110, %v1146
    %v1149 = vmul.f32 %v1123, %v345
    %v1150 = vmul.f32 %v1124, %v345
    %v1151 = vadd.f32 %v1113, %v1149
    %v1152 = vadd.f32 %v1114, %v1150
    %v1153 = vmul.f32 %v1123, %v350
    %v1154 = vmul.f32 %v1124, %v350
    %v1155 = vadd.f32 %v1117, %v1153
    %v1156 = vadd.f32 %v1118, %v1154
    %v1157 = vmul.f32 %v1041, %v355
    %v1158 = vmul.f32 %v1042, %v355
    %v1159 = vadd.f32 %v1157, %v358
    %v1160 = vadd.f32 %v1158, %v358
    %v1161 = vmax.f32 %v1159, 0.0
    %v1162 = vmax.f32 %v1160, 0.0
    %v1163 = vmul.f32 %v1161, %v363
    %v1164 = vmul.f32 %v1162, %v363
    %v1165 = vadd.f32 %v1127, %v1163
    %v1166 = vadd.f32 %v1128, %v1164
    %v1167 = vmul.f32 %v1161, %v368
    %v1168 = vmul.f32 %v1162, %v368
    %v1169 = vadd.f32 %v1131, %v1167
    %v1170 = vadd.f32 %v1132, %v1168
    %v1171 = vmul.f32 %v1161, %v373
    %v1172 = vmul.f32 %v1162, %v373
    %v1173 = vadd.f32 %v1135, %v1171
    %v1174 = vadd.f32 %v1136, %v1172
    %v1175 = vmul.f32 %v1161, %v378
    %v1176 = vmul.f32 %v1162, %v378
    %v1177 = vadd.f32 %v1139, %v1175
    %v1178 = vadd.f32 %v1140, %v1176
    %v1179 = vmul.f32 %v1161, %v383
    %v1180 = vmul.f32 %v1162, %v383
    %v1181 = vadd.f32 %v1143, %v1179
    %v1182 = vadd.f32 %v1144, %v1180
    %v1183 = vmul.f32 %v1161, %v388
    %v1184 = vmul.f32 %v1162, %v388
    %v1185 = vadd.f32 %v1147, %v1183
    %v1186 = vadd.f32 %v1148, %v1184
    %v1187 = vmul.f32 %v1161, %v393
    %v1188 = vmul.f32 %v1162, %v393
    %v1189 = vadd.f32 %v1151, %v1187
    %v1190 = vadd.f32 %v1152, %v1188
    %v1191 = vmul.f32 %v1161, %v398
    %v1192 = vmul.f32 %v1162, %v398
    %v1193 = vadd.f32 %v1155, %v1191
    %v1194 = vadd.f32 %v1156, %v1192
    %v1195 = vmul.f32 %v1041, %v403
    %v1196 = vmul.f32 %v1042, %v403
    %v1197 = vadd.f32 %v1195, %v406
    %v1198 = vadd.f32 %v1196, %v406
    %v1199 = vmax.f32 %v1197, 0.0
    %v1200 = vmax.f32 %v1198, 0.0
    %v1201 = vmul.f32 %v1199, %v411
    %v1202 = vmul.f32 %v1200, %v411
    %v1203 = vadd.f32 %v1165, %v1201
    %v1204 = vadd.f32 %v1166, %v1202
    %v1205 = vmul.f32 %v1199, %v416
    %v1206 = vmul.f32 %v1200, %v416
    %v1207 = vadd.f32 %v1169, %v1205
    %v1208 = vadd.f32 %v1170, %v1206
    %v1209 = vmul.f32 %v1199, %v421
    %v1210 = vmul.f32 %v1200, %v421
    %v1211 = vadd.f32 %v1173, %v1209
    %v1212 = vadd.f32 %v1174, %v1210
    %v1213 = vmul.f32 %v1199, %v426
    %v1214 = vmul.f32 %v1200, %v426
    %v1215 = vadd.f32 %v1177, %v1213
    %v1216 = vadd.f32 %v1178, %v1214
    %v1217 = vmul.f32 %v1199, %v431
    %v1218 = vmul.f32 %v1200, %v431
    %v1219 = vadd.f32 %v1181, %v1217
    %v1220 = vadd.f32 %v1182, %v1218
    %v1221 = vmul.f32 %v1199, %v436
    %v1222 = vmul.f32 %v1200, %v436
    %v1223 = vadd.f32 %v1185, %v1221
    %v1224 = vadd.f32 %v1186, %v1222
    %v1225 = vmul.f32 %v1199, %v441
    %v1226 = vmul.f32 %v1200, %v441
    %v1227 = vadd.f32 %v1189, %v1225
    %v1228 = vadd.f32 %v1190, %v1226
    %v1229 = vmul.f32 %v1199, %v446
    %v1230 = vmul.f32 %v1200, %v446
    %v1231 = vadd.f32 %v1193, %v1229
    %v1232 = vadd.f32 %v1194, %v1230
    %v1233 = vmul.f32 %v1041, %v451
    %v1234 = vmul.f32 %v1042, %v451
    %v1235 = vadd.f32 %v1233, %v454
    %v1236 = vadd.f32 %v1234, %v454
    %v1237 = vmax.f32 %v1235, 0.0
    %v1238 = vmax.f32 %v1236, 0.0
    %v1239 = vmul.f32 %v1237, %v459
    %v1240 = vmul.f32 %v1238, %v459
    %v1241 = vadd.f32 %v1203, %v1239
    %v1242 = vadd.f32 %v1204, %v1240
    %v1243 = vmul.f32 %v1237, %v464
    %v1244 = vmul.f32 %v1238, %v464
    %v1245 = vadd.f32 %v1207, %v1243
    %v1246 = vadd.f32 %v1208, %v1244
    %v1247 = vmul.f32 %v1237, %v469
    %v1248 = vmul.f32 %v1238, %v469
    %v1249 = vadd.f32 %v1211, %v1247
    %v1250 = vadd.f32 %v1212, %v1248
    %v1251 = vmul.f32 %v1237, %v474
    %v1252 = vmul.f32 %v1238, %v474
    %v1253 = vadd.f32 %v1215, %v1251
    %v1254 = vadd.f32 %v1216, %v1252
    %v1255 = vmul.f32 %v1237, %v479
    %v1256 = vmul.f32 %v1238, %v479
    %v1257 = vadd.f32 %v1219, %v1255
    %v1258 = vadd.f32 %v1220, %v1256
    %v1259 = vmul.f32 %v1237, %v484
    %v1260 = vmul.f32 %v1238, %v484
    %v1261 = vadd.f32 %v1223, %v1259
    %v1262 = vadd.f32 %v1224, %v1260
    %v1263 = vmul.f32 %v1237, %v489
    %v1264 = vmul.f32 %v1238, %v489
    %v1265 = vadd.f32 %v1227, %v1263
    %v1266 = vadd.f32 %v1228, %v1264
    %v1267 = vmul.f32 %v1237, %v494
    %v1268 = vmul.f32 %v1238, %v494
    %v1269 = vadd.f32 %v1231, %v1267
    %v1270 = vadd.f32 %v1232, %v1268
    %v1271 = vmul.f32 %v1041, %v499
    %v1272 = vmul.f32 %v1042, %v499
    %v1273 = vadd.f32 %v1271, %v502
    %v1274 = vadd.f32 %v1272, %v502
    %v1275 = vmax.f32 %v1273, 0.0
    %v1276 = vmax.f32 %v1274, 0.0
    %v1277 = vmul.f32 %v1275, %v507
    %v1278 = vmul.f32 %v1276, %v507
    %v1279 = vadd.f32 %v1241, %v1277
    %v1280 = vadd.f32 %v1242, %v1278
    %v1281 = vmul.f32 %v1275, %v512
    %v1282 = vmul.f32 %v1276, %v512
    %v1283 = vadd.f32 %v1245, %v1281
    %v1284 = vadd.f32 %v1246, %v1282
    %v1285 = vmul.f32 %v1275, %v517
    %v1286 = vmul.f32 %v1276, %v517
    %v1287 = vadd.f32 %v1249, %v1285
    %v1288 = vadd.f32 %v1250, %v1286
    %v1289 = vmul.f32 %v1275, %v522
    %v1290 = vmul.f32 %v1276, %v522
    %v1291 = vadd.f32 %v1253, %v1289
    %v1292 = vadd.f32 %v1254, %v1290
    %v1293 = vmul.f32 %v1275, %v527
    %v1294 = vmul.f32 %v1276, %v527
    %v1295 = vadd.f32 %v1257, %v1293
    %v1296 = vadd.f32 %v1258, %v1294
    %v1297 = vmul.f32 %v1275, %v532
    %v1298 = vmul.f32 %v1276, %v532
    %v1299 = vadd.f32 %v1261, %v1297
    %v1300 = vadd.f32 %v1262, %v1298
    %v1301 = vmul.f32 %v1275, %v537
    %v1302 = vmul.f32 %v1276, %v537
    %v1303 = vadd.f32 %v1265, %v1301
    %v1304 = vadd.f32 %v1266, %v1302
    %v1305 = vmul.f32 %v1275, %v542
    %v1306 = vmul.f32 %v1276, %v542
    %v1307 = vadd.f32 %v1269, %v1305
    %v1308 = vadd.f32 %v1270, %v1306
    %v1309 = vmul.f32 %v1041, %v547
    %v1310 = vmul.f32 %v1042, %v547
    %v1311 = vadd.f32 %v1309, %v550
    %v1312 = vadd.f32 %v1310, %v550
    %v1313 = vmax.f32 %v1311, 0.0
    %v1314 = vmax.f32 %v1312, 0.0
    %v1315 = vmul.f32 %v1313, %v555
    %v1316 = vmul.f32 %v1314, %v555
    %v1317 = vadd.f32 %v1279, %v1315
    %v1318 = vadd.f32 %v1280, %v1316
    %v1319 = vmul.f32 %v1313, %v560
    %v1320 = vmul.f32 %v1314, %v560
    %v1321 = vadd.f32 %v1283, %v1319
    %v1322 = vadd.f32 %v1284, %v1320
    %v1323 = vmul.f32 %v1313, %v565
    %v1324 = vmul.f32 %v1314, %v565
    %v1325 = vadd.f32 %v1287, %v1323
    %v1326 = vadd.f32 %v1288, %v1324
    %v1327 = vmul.f32 %v1313, %v570
    %v1328 = vmul.f32 %v1314, %v570
    %v1329 = vadd.f32 %v1291, %v1327
    %v1330 = vadd.f32 %v1292, %v1328
    %v1331 = vmul.f32 %v1313, %v575
    %v1332 = vmul.f32 %v1314, %v575
    %v1333 = vadd.f32 %v1295, %v1331
    %v1334 = vadd.f32 %v1296, %v1332
    %v1335 = vmul.f32 %v1313, %v580
    %v1336 = vmul.f32 %v1314, %v580
    %v1337 = vadd.f32 %v1299, %v1335
    %v1338 = vadd.f32 %v1300, %v1336
    %v1339 = vmul.f32 %v1313, %v585
    %v1340 = vmul.f32 %v1314, %v585
    %v1341 = vadd.f32 %v1303, %v1339
    %v1342 = vadd.f32 %v1304, %v1340
    %v1343 = vmul.f32 %v1313, %v590
    %v1344 = vmul.f32 %v1314, %v590
    %v1345 = vadd.f32 %v1307, %v1343
    %v1346 = vadd.f32 %v1308, %v1344
    %v1347 = vmul.f32 %v1041, %v595
    %v1348 = vmul.f32 %v1042, %v595
    %v1349 = vadd.f32 %v1347, %v598
    %v1350 = vadd.f32 %v1348, %v598
    %v1351 = vmax.f32 %v1349, 0.0
    %v1352 = vmax.f32 %v1350, 0.0
    %v1353 = vmul.f32 %v1351, %v603
    %v1354 = vmul.f32 %v1352, %v603
    %v1355 = vadd.f32 %v1317, %v1353
    %v1356 = vadd.f32 %v1318, %v1354
    %v1357 = vmul.f32 %v1351, %v608
    %v1358 = vmul.f32 %v1352, %v608
    %v1359 = vadd.f32 %v1321, %v1357
    %v1360 = vadd.f32 %v1322, %v1358
    %v1361 = vmul.f32 %v1351, %v613
    %v1362 = vmul.f32 %v1352, %v613
    %v1363 = vadd.f32 %v1325, %v1361
    %v1364 = vadd.f32 %v1326, %v1362
    %v1365 = vmul.f32 %v1351, %v618
    %v1366 = vmul.f32 %v1352, %v618
    %v1367 = vadd.f32 %v1329, %v1365
    %v1368 = vadd.f32 %v1330, %v1366
    %v1369 = vmul.f32 %v1351, %v623
    %v1370 = vmul.f32 %v1352, %v623
    %v1371 = vadd.f32 %v1333, %v1369
    %v1372 = vadd.f32 %v1334, %v1370
    %v1373 = vmul.f32 %v1351, %v628
    %v1374 = vmul.f32 %v1352, %v628
    %v1375 = vadd.f32 %v1337, %v1373
    %v1376 = vadd.f32 %v1338, %v1374
    %v1377 = vmul.f32 %v1351, %v633
    %v1378 = vmul.f32 %v1352, %v633
    %v1379 = vadd.f32 %v1341, %v1377
    %v1380 = vadd.f32 %v1342, %v1378
    %v1381 = vmul.f32 %v1351, %v638
    %v1382 = vmul.f32 %v1352, %v638
    %v1383 = vadd.f32 %v1345, %v1381
    %v1384 = vadd.f32 %v1346, %v1382
    %v1385 = vmul.f32 %v1041, %v643
    %v1386 = vmul.f32 %v1042, %v643
    %v1387 = vadd.f32 %v1385, %v646
    %v1388 = vadd.f32 %v1386, %v646
    %v1389 = vmax.f32 %v1387, 0.0
    %v1390 = vmax.f32 %v1388, 0.0
    %v1391 = vmul.f32 %v1389, %v651
    %v1392 = vmul.f32 %v1390, %v651
    %v1393 = vadd.f32 %v1355, %v1391
    %v1394 = vadd.f32 %v1356, %v1392
    %v1395 = vmul.f32 %v1389, %v656
    %v1396 = vmul.f32 %v1390, %v656
    %v1397 = vadd.f32 %v1359, %v1395
    %v1398 = vadd.f32 %v1360, %v1396
    %v1399 = vmul.f32 %v1389, %v661
    %v1400 = vmul.f32 %v1390, %v661
    %v1401 = vadd.f32 %v1363, %v1399
    %v1402 = vadd.f32 %v1364, %v1400
    %v1403 = vmul.f32 %v1389, %v666
    %v1404 = vmul.f32 %v1390, %v666
    %v1405 = vadd.f32 %v1367, %v1403
    %v1406 = vadd.f32 %v1368, %v1404
    %v1407 = vmul.f32 %v1389, %v671
    %v1408 = vmul.f32 %v1390, %v671
    %v1409 = vadd.f32 %v1371, %v1407
    %v1410 = vadd.f32 %v1372, %v1408
    %v1411 = vmul.f32 %v1389, %v676
    %v1412 = vmul.f32 %v1390, %v676
    %v1413 = vadd.f32 %v1375, %v1411
    %v1414 = vadd.f32 %v1376, %v1412
    %v1415 = vmul.f32 %v1389, %v681
    %v1416 = vmul.f32 %v1390, %v681
    %v1417 = vadd.f32 %v1379, %v1415
    %v1418 = vadd.f32 %v1380, %v1416
    %v1419 = vmul.f32 %v1389, %v686
    %v1420 = vmul.f32 %v1390, %v686
    %v1421 = vadd.f32 %v1383, %v1419
    %v1422 = vadd.f32 %v1384, %v1420
    %v1423 = vmul.f32 %v1041, %v691
    %v1424 = vmul.f32 %v1042, %v691
    %v1425 = vadd.f32 %v1423, %v694
    %v1426 = vadd.f32 %v1424, %v694
    %v1427 = vmax.f32 %v1425, 0.0
    %v1428 = vmax.f32 %v1426, 0.0
    %v1429 = vmul.f32 %v1427, %v699
    %v1430 = vmul.f32 %v1428, %v699
    %v1431 = vadd.f32 %v1393, %v1429
    %v1432 = vadd.f32 %v1394, %v1430
    %v1433 = vmul.f32 %v1427, %v704
    %v1434 = vmul.f32 %v1428, %v704
    %v1435 = vadd.f32 %v1397, %v1433
    %v1436 = vadd.f32 %v1398, %v1434
    %v1437 = vmul.f32 %v1427, %v709
    %v1438 = vmul.f32 %v1428, %v709
    %v1439 = vadd.f32 %v1401, %v1437
    %v1440 = vadd.f32 %v1402, %v1438
    %v1441 = vmul.f32 %v1427, %v714
    %v1442 = vmul.f32 %v1428, %v714
    %v1443 = vadd.f32 %v1405, %v1441
    %v1444 = vadd.f32 %v1406, %v1442
    %v1445 = vmul.f32 %v1427, %v719
    %v1446 = vmul.f32 %v1428, %v719
    %v1447 = vadd.f32 %v1409, %v1445
    %v1448 = vadd.f32 %v1410, %v1446
    %v1449 = vmul.f32 %v1427, %v724
    %v1450 = vmul.f32 %v1428, %v724
    %v1451 = vadd.f32 %v1413, %v1449
    %v1452 = vadd.f32 %v1414, %v1450
    %v1453 = vmul.f32 %v1427, %v729
    %v1454 = vmul.f32 %v1428, %v729
    %v1455 = vadd.f32 %v1417, %v1453
    %v1456 = vadd.f32 %v1418, %v1454
    %v1457 = vmul.f32 %v1427, %v734
    %v1458 = vmul.f32 %v1428, %v734
    %v1459 = vadd.f32 %v1421, %v1457
    %v1460 = vadd.f32 %v1422, %v1458
    %v1461 = vmul.f32 %v1041, %v739
    %v1462 = vmul.f32 %v1042, %v739
    %v1463 = vadd.f32 %v1461, %v742
    %v1464 = vadd.f32 %v1462, %v742
    %v1465 = vmax.f32 %v1463, 0.0
    %v1466 = vmax.f32 %v1464, 0.0
    %v1467 = vmul.f32 %v1465, %v747
    %v1468 = vmul.f32 %v1466, %v747
    %v1469 = vadd.f32 %v1431, %v1467
    %v1470 = vadd.f32 %v1432, %v1468
    %v1471 = vmul.f32 %v1465, %v752
    %v1472 = vmul.f32 %v1466, %v752
    %v1473 = vadd.f32 %v1435, %v1471
    %v1474 = vadd.f32 %v1436, %v1472
    %v1475 = vmul.f32 %v1465, %v757
    %v1476 = vmul.f32 %v1466, %v757
    %v1477 = vadd.f32 %v1439, %v1475
    %v1478 = vadd.f32 %v1440, %v1476
    %v1479 = vmul.f32 %v1465, %v762
    %v1480 = vmul.f32 %v1466, %v762
    %v1481 = vadd.f32 %v1443, %v1479
    %v1482 = vadd.f32 %v1444, %v1480
    %v1483 = vmul.f32 %v1465, %v767
    %v1484 = vmul.f32 %v1466, %v767
    %v1485 = vadd.f32 %v1447, %v1483
    %v1486 = vadd.f32 %v1448, %v1484
    %v1487 = vmul.f32 %v1465, %v772
    %v1488 = vmul.f32 %v1466, %v772
    %v1489 = vadd.f32 %v1451, %v1487
    %v1490 = vadd.f32 %v1452, %v1488
    %v1491 = vmul.f32 %v1465, %v777
    %v1492 = vmul.f32 %v1466, %v777
    %v1493 = vadd.f32 %v1455, %v1491
    %v1494 = vadd.f32 %v1456, %v1492
    %v1495 = vmul.f32 %v1465, %v782
    %v1496 = vmul.f32 %v1466, %v782
    %v1497 = vadd.f32 %v1459, %v1495
    %v1498 = vadd.f32 %v1460, %v1496
    %v1499 = vmul.f32 %v1041, %v787
    %v1500 = vmul.f32 %v1042, %v787
    %v1501 = vadd.f32 %v1499, %v790
    %v1502 = vadd.f32 %v1500, %v790
    %v1503 = vmax.f32 %v1501, 0.0
    %v1504 = vmax.f32 %v1502, 0.0
    %v1505 = vmul.f32 %v1503, %v795
    %v1506 = vmul.f32 %v1504, %v795
    %v1507 = vadd.f32 %v1469, %v1505
    %v1508 = vadd.f32 %v1470, %v1506
    %v1509 = vmul.f32 %v1503, %v800
    %v1510 = vmul.f32 %v1504, %v800
    %v1511 = vadd.f32 %v1473, %v1509
    %v1512 = vadd.f32 %v1474, %v1510
    %v1513 = vmul.f32 %v1503, %v805
    %v1514 = vmul.f32 %v1504, %v805
    %v1515 = vadd.f32 %v1477, %v1513
    %v1516 = vadd.f32 %v1478, %v1514
    %v1517 = vmul.f32 %v1503, %v810
    %v1518 = vmul.f32 %v1504, %v810
    %v1519 = vadd.f32 %v1481, %v1517
    %v1520 = vadd.f32 %v1482, %v1518
    %v1521 = vmul.f32 %v1503, %v815
    %v1522 = vmul.f32 %v1504, %v815
    %v1523 = vadd.f32 %v1485, %v1521
    %v1524 = vadd.f32 %v1486, %v1522
    %v1525 = vmul.f32 %v1503, %v820
    %v1526 = vmul.f32 %v1504, %v820
    %v1527 = vadd.f32 %v1489, %v1525
    %v1528 = vadd.f32 %v1490, %v1526
    %v1529 = vmul.f32 %v1503, %v825
    %v1530 = vmul.f32 %v1504, %v825
    %v1531 = vadd.f32 %v1493, %v1529
    %v1532 = vadd.f32 %v1494, %v1530
    %v1533 = vmul.f32 %v1503, %v830
    %v1534 = vmul.f32 %v1504, %v830
    %v1535 = vadd.f32 %v1497, %v1533
    %v1536 = vadd.f32 %v1498, %v1534
    %v1537 = vmul.f32 %v1041, %v835
    %v1538 = vmul.f32 %v1042, %v835
    %v1539 = vadd.f32 %v1537, %v838
    %v1540 = vadd.f32 %v1538, %v838
    %v1541 = vmax.f32 %v1539, 0.0
    %v1542 = vmax.f32 %v1540, 0.0
    %v1543 = vmul.f32 %v1541, %v843
    %v1544 = vmul.f32 %v1542, %v843
    %v1545 = vadd.f32 %v1507, %v1543
    %v1546 = vadd.f32 %v1508, %v1544
    %v1547 = vmul.f32 %v1541, %v848
    %v1548 = vmul.f32 %v1542, %v848
    %v1549 = vadd.f32 %v1511, %v1547
    %v1550 = vadd.f32 %v1512, %v1548
    %v1551 = vmul.f32 %v1541, %v853
    %v1552 = vmul.f32 %v1542, %v853
    %v1553 = vadd.f32 %v1515, %v1551
    %v1554 = vadd.f32 %v1516, %v1552
    %v1555 = vmul.f32 %v1541, %v858
    %v1556 = vmul.f32 %v1542, %v858
    %v1557 = vadd.f32 %v1519, %v1555
    %v1558 = vadd.f32 %v1520, %v1556
    %v1559 = vmul.f32 %v1541, %v863
    %v1560 = vmul.f32 %v1542, %v863
    %v1561 = vadd.f32 %v1523, %v1559
    %v1562 = vadd.f32 %v1524, %v1560
    %v1563 = vmul.f32 %v1541, %v868
    %v1564 = vmul.f32 %v1542, %v868
    %v1565 = vadd.f32 %v1527, %v1563
    %v1566 = vadd.f32 %v1528, %v1564
    %v1567 = vmul.f32 %v1541, %v873
    %v1568 = vmul.f32 %v1542, %v873
    %v1569 = vadd.f32 %v1531, %v1567
    %v1570 = vadd.f32 %v1532, %v1568
    %v1571 = vmul.f32 %v1541, %v878
    %v1572 = vmul.f32 %v1542, %v878
    %v1573 = vadd.f32 %v1535, %v1571
    %v1574 = vadd.f32 %v1536, %v1572
    %v1575 = vmul.f32 %v1041, %v883
    %v1576 = vmul.f32 %v1042, %v883
    %v1577 = vadd.f32 %v1575, %v886
    %v1578 = vadd.f32 %v1576, %v886
    %v1579 = vmax.f32 %v1577, 0.0
    %v1580 = vmax.f32 %v1578, 0.0
    %v1581 = vmul.f32 %v1579, %v891
    %v1582 = vmul.f32 %v1580, %v891
    %v1583 = vadd.f32 %v1545, %v1581
    %v1584 = vadd.f32 %v1546, %v1582
    %v1585 = vmul.f32 %v1579, %v896
    %v1586 = vmul.f32 %v1580, %v896
    %v1587 = vadd.f32 %v1549, %v1585
    %v1588 = vadd.f32 %v1550, %v1586
    %v1589 = vmul.f32 %v1579, %v901
    %v1590 = vmul.f32 %v1580, %v901
    %v1591 = vadd.f32 %v1553, %v1589
    %v1592 = vadd.f32 %v1554, %v1590
    %v1593 = vmul.f32 %v1579, %v906
    %v1594 = vmul.f32 %v1580, %v906
    %v1595 = vadd.f32 %v1557, %v1593
    %v1596 = vadd.f32 %v1558, %v1594
    %v1597 = vmul.f32 %v1579, %v911
    %v1598 = vmul.f32 %v1580, %v911
    %v1599 = vadd.f32 %v1561, %v1597
    %v1600 = vadd.f32 %v1562, %v1598
    %v1601 = vmul.f32 %v1579, %v916
    %v1602 = vmul.f32 %v1580, %v916
    %v1603 = vadd.f32 %v1565, %v1601
    %v1604 = vadd.f32 %v1566, %v1602
    %v1605 = vmul.f32 %v1579, %v921
    %v1606 = vmul.f32 %v1580, %v921
    %v1607 = vadd.f32 %v1569, %v1605
    %v1608 = vadd.f32 %v1570, %v1606
    %v1609 = vmul.f32 %v1579, %v926
    %v1610 = vmul.f32 %v1580, %v926
    %v1611 = vadd.f32 %v1573, %v1609
    %v1612 = vadd.f32 %v1574, %v1610
    %v1613 = vmul.f32 %v1041, %v931
    %v1614 = vmul.f32 %v1042, %v931
    %v1615 = vadd.f32 %v1613, %v934
    %v1616 = vadd.f32 %v1614, %v934
    %v1617 = vmax.f32 %v1615, 0.0
    %v1618 = vmax.f32 %v1616, 0.0
    %v1619 = vmul.f32 %v1617, %v939
    %v1620 = vmul.f32 %v1618, %v939
    %v1621 = vadd.f32 %v1583, %v1619
    %v1622 = vadd.f32 %v1584, %v1620
    %v1623 = vmul.f32 %v1617, %v944
    %v1624 = vmul.f32 %v1618, %v944
    %v1625 = vadd.f32 %v1587, %v1623
    %v1626 = vadd.f32 %v1588, %v1624
    %v1627 = vmul.f32 %v1617, %v949
    %v1628 = vmul.f32 %v1618, %v949
    %v1629 = vadd.f32 %v1591, %v1627
    %v1630 = vadd.f32 %v1592, %v1628
    %v1631 = vmul.f32 %v1617, %v954
    %v1632 = vmul.f32 %v1618, %v954
    %v1633 = vadd.f32 %v1595, %v1631
    %v1634 = vadd.f32 %v1596, %v1632
    %v1635 = vmul.f32 %v1617, %v959
    %v1636 = vmul.f32 %v1618, %v959
    %v1637 = vadd.f32 %v1599, %v1635
    %v1638 = vadd.f32 %v1600, %v1636
    %v1639 = vmul.f32 %v1617, %v964
    %v1640 = vmul.f32 %v1618, %v964
    %v1641 = vadd.f32 %v1603, %v1639
    %v1642 = vadd.f32 %v1604, %v1640
    %v1643 = vmul.f32 %v1617, %v969
    %v1644 = vmul.f32 %v1618, %v969
    %v1645 = vadd.f32 %v1607, %v1643
    %v1646 = vadd.f32 %v1608, %v1644
    %v1647 = vmul.f32 %v1617, %v974
    %v1648 = vmul.f32 %v1618, %v974
    %v1649 = vadd.f32 %v1611, %v1647
    %v1650 = vadd.f32 %v1612, %v1648
    %v1651 = vmax.f32 %v1621, 0.0
    %v1652 = vmax.f32 %v1622, 0.0
    %v1653 = vmul.f32 %v1651, %v981
    %v1654 = vmul.f32 %v1652, %v981
    %v1655 = vadd.f32 %v1653, %v984
    %v1656 = vadd.f32 %v1654, %v984
    %v1657 = vmax.f32 %v1625, 0.0
    %v1658 = vmax.f32 %v1626, 0.0
    %v1659 = vmul.f32 %v1657, %v989
    %v1660 = vmul.f32 %v1658, %v989
    %v1661 = vadd.f32 %v1655, %v1659
    %v1662 = vadd.f32 %v1656, %v1660
    %v1663 = vmax.f32 %v1629, 0.0
    %v1664 = vmax.f32 %v1630, 0.0
    %v1665 = vmul.f32 %v1663, %v996
    %v1666 = vmul.f32 %v1664, %v996
    %v1667 = vadd.f32 %v1661, %v1665
    %v1668 = vadd.f32 %v1662, %v1666
    %v1669 = vmax.f32 %v1633, 0.0
    %v1670 = vmax.f32 %v1634, 0.0
    %v1671 = vmul.f32 %v1669, %v1003
    %v1672 = vmul.f32 %v1670, %v1003
    %v1673 = vadd.f32 %v1667, %v1671
    %v1674 = vadd.f32 %v1668, %v1672
    %v1675 = vmax.f32 %v1637, 0.0
    %v1676 = vmax.f32 %v1638, 0.0
    %v1677 = vmul.f32 %v1675, %v1010
    %v1678 = vmul.f32 %v1676, %v1010
    %v1679 = vadd.f32 %v1673, %v1677
    %v1680 = vadd.f32 %v1674, %v1678
    %v1681 = vmax.f32 %v1641, 0.0
    %v1682 = vmax.f32 %v1642, 0.0
    %v1683 = vmul.f32 %v1681, %v1017
    %v1684 = vmul.f32 %v1682, %v1017
    %v1685 = vadd.f32 %v1679, %v1683
    %v1686 = vadd.f32 %v1680, %v1684
    %v1687 = vmax.f32 %v1645, 0.0
    %v1688 = vmax.f32 %v1646, 0.0
    %v1689 = vmul.f32 %v1687, %v1024
    %v1690 = vmul.f32 %v1688, %v1024
    %v1691 = vadd.f32 %v1685, %v1689
    %v1692 = vadd.f32 %v1686, %v1690
    %v1693 = vmax.f32 %v1649, 0.0
    %v1694 = vmax.f32 %v1650, 0.0
    %v1695 = vmul.f32 %v1693, %v1031
    %v1696 = vmul.f32 %v1694, %v1031
    %v1697 = vadd.f32 %v1691, %v1695
    %v1698 = vadd.f32 %v1692, %v1696
    %v1699 = vmax.f32 %v1697, 0.0
    %v1700 = vmax.f32 %v1698, 0.0
    %s1701 = scalar_lea.vmem %s2, 16
    %1702 = vst [vmem:[%s1701] sm:$0xff] %v1699
    %1703 = vst [vmem:[%s1701 + $0x8] sm:$0xff] %v1700
    // Predicated region
    $region14: #{densitynet_forward.1} parent=1 // pred_check
      _
    $region15: #{densitynet_forward.1} parent=1 // pred_check_branch
      %1705 = sbr.rel (0) target = $region17
    $region16: #{densitynet_forward.1} parent=1 // pred_region
      _
    $region17: #{densitynet_forward.1} parent=1 // pred_fallthru
      _
    // Predicated region
    $region18: #{densitynet_forward.1} parent=1 // pred_check
      _
    $region19: #{densitynet_forward.1} parent=1 // pred_check_branch
      %1707 = sbr.rel (0) target = $region21
    $region20: #{densitynet_forward.1} parent=1 // pred_region
      _
    $region21: #{densitynet_forward.1} parent=1 // pred_fallthru
      _
    %1708 = vsyncpa [#allocation3], 1

</llo_original>
